<compile_context>
chip_gen: v7x
topology: tpu7x:2x2x1
jax: 0.10.0
libtpu: 0.0.40
codegen_flags: <defaults>
</compile_context>

<pallas_src>
import jax
import jax.numpy as jnp
from jax.experimental import pallas as pl
from jax.experimental.pallas import tpu as pltpu

# ----------------------------- scaled-down CLIP-ViT config -----------------------------
BATCH = 2
CHANNELS = 3
IMAGE = 16
PATCH = 4
NUM_PATCHES = (IMAGE // PATCH) ** 2          # 16
SEQ = NUM_PATCHES + 1                        # 17 (cls token + patches)
SEQ_PAD = 24                                 # padded to a multiple of 8 sublanes
ROWS = BATCH * SEQ_PAD                       # 48 token rows held in VMEM
HIDDEN = 32                                  # analog of 1024
NUM_HEADS = 4
HEAD_DIM = HIDDEN // NUM_HEADS               # 8
INTERMEDIATE = 4 * HIDDEN                    # 128 (CLIP MLP ratio 4x)
NUM_LAYERS = 2                               # analog of 24
PROJ_DIM = 768                               # nn.Linear(hidden_size, 768)
PATCH_DIM = CHANNELS * PATCH * PATCH         # 48
LN_EPS = 1e-5

# rows of the consolidated per-layer vector tensor (shape (L, 6, HIDDEN))
_V_LN1_G, _V_LN1_B, _V_O_B, _V_LN2_G, _V_LN2_B, _V_FC2_B = range(6)


# =============================== fused Pallas kernel ===============================

def _clip_fwd_kernel(patches_ref, patch_w_ref, tok_ref, bias_ref, pre_ln_ref,
                     vecs_ref, qkv_w_ref, qkv_b_ref, o_w_ref,
                     fc1_w_ref, fc1_b_ref, fc2_w_ref,
                     proj_w_ref, proj_b_ref,
                     out_ref):
    f32 = jnp.float32

    def ln(x, g, b):
        mean = jnp.mean(x, axis=-1, keepdims=True)
        xc = x - mean
        var = jnp.mean(xc * xc, axis=-1, keepdims=True)
        return xc * jax.lax.rsqrt(var + LN_EPS) * g + b

    # --- patch embedding (conv-as-matmul; cls/pad rows are zero inputs, conv has no bias) ---
    h = jnp.dot(patches_ref[...], patch_w_ref[...], preferred_element_type=f32)  # (R, D)
    # class-token + positional embedding (zeros on the pad rows)
    h = h + tok_ref[...]

    # --- pre_layrnorm ---
    pre_ln = pre_ln_ref[...]                   # (2, D): row 0 = gamma, row 1 = beta
    h = ln(h, pre_ln[0:1, :], pre_ln[1:2, :])

    bias = bias_ref[...]                       # (R, R): 0 same-batch/valid-key, -1e30 otherwise
    scale = HEAD_DIM ** -0.5

    # --- encoder layers (unrolled: NUM_LAYERS is a small Python constant) ---
    for l in range(NUM_LAYERS):
        vec = vecs_ref[l]                      # (6, D) consolidated per-layer vectors

        # self-attention block (pre-LN)
        y = ln(h, vec[_V_LN1_G:_V_LN1_G + 1, :], vec[_V_LN1_B:_V_LN1_B + 1, :])
        qkv = jnp.dot(y, qkv_w_ref[l], preferred_element_type=f32) + qkv_b_ref[l]   # (R, 3D)
        o_w = o_w_ref[l]                                                            # (D, D)

        acc = None
        for hh in range(NUM_HEADS):            # unrolled per-head loop, all in VMEM/vregs
            c = hh * HEAD_DIM
            q = qkv[:, c:c + HEAD_DIM] * scale
            k = qkv[:, HIDDEN + c:HIDDEN + c + HEAD_DIM]
            v = qkv[:, 2 * HIDDEN + c:2 * HIDDEN + c + HEAD_DIM]
            s = jax.lax.dot_general(q, k, (((1,), (1,)), ((), ())),
                                    preferred_element_type=f32)                     # (R, R)
            s = s + bias
            m = jnp.max(s, axis=-1, keepdims=True)
            p = jnp.exp(s - m)
            p = p * pl.reciprocal(jnp.sum(p, axis=-1, keepdims=True), approx=True)
            o_h = jnp.dot(p, v, preferred_element_type=f32)                         # (R, HD)
            # fold the output projection per head: a @ o_w == sum_h a_h @ o_w[h*HD:(h+1)*HD]
            part = jnp.dot(o_h, o_w[c:c + HEAD_DIM, :], preferred_element_type=f32) # (R, D)
            acc = part if acc is None else acc + part
        h = h + acc + vec[_V_O_B:_V_O_B + 1, :]            # residual + out-proj bias

        # MLP block (pre-LN, quickGELU)
        y = ln(h, vec[_V_LN2_G:_V_LN2_G + 1, :], vec[_V_LN2_B:_V_LN2_B + 1, :])
        f = jnp.dot(y, fc1_w_ref[l], preferred_element_type=f32) + fc1_b_ref[l]     # (R, I)
        # quickGELU: x * sigmoid(1.702 x), sigmoid via EUP exp + approx reciprocal
        f = f * pl.reciprocal(1.0 + jnp.exp(-1.702 * f), approx=True)
        h = (h + jnp.dot(f, fc2_w_ref[l], preferred_element_type=f32)
             + vec[_V_FC2_B:_V_FC2_B + 1, :])                                       # residual

    # --- final projection: the only HBM-visible store, lane-dense (768 lanes) ---
    out = jnp.dot(h, proj_w_ref[...], preferred_element_type=f32) + proj_b_ref[...]  # (R, 768)
    for b in range(BATCH):
        out_ref[b] = out[b * SEQ_PAD:b * SEQ_PAD + SEQ, :].astype(out_ref.dtype)


def _full_block_spec(shape):
    nd = len(shape)
    return pl.BlockSpec(shape, lambda i, _nd=nd: (0,) * _nd)


# =============================== model wrapper (Pallas-backed) ===============================

def clip_image_encoder(params, pixel_values):
    """Forward pass of CLIPImageEncoder: vision tower last_hidden_state -> Linear(., 768)."""
    B, C, H, W = pixel_values.shape
    nh, nw = H // PATCH, W // PATCH

    # ---- layout-only prep (no compute hoisting): extract patches onto the padded token grid ----
    patches = pixel_values.reshape(B, C, nh, PATCH, nw, PATCH)
    patches = patches.transpose(0, 2, 4, 1, 3, 5).reshape(B, nh * nw, PATCH_DIM)
    patches_pad = jnp.zeros((B, SEQ_PAD, PATCH_DIM), jnp.float32)
    patches_pad = patches_pad.at[:, 1:SEQ, :].set(patches)       # slot 0 = cls, 17..23 = pad
    patches_flat = patches_pad.reshape(ROWS, PATCH_DIM)

    # class token + learned positional embedding, on the padded token grid
    tok = jnp.zeros((SEQ_PAD, HIDDEN), jnp.float32)
    tok = tok.at[0].set(params["class_emb"] + params["pos_emb"][0])
    tok = tok.at[1:SEQ].set(params["pos_emb"][1:SEQ])
    tok = jnp.tile(tok, (B, 1))                                  # (R, D)

    # additive attention bias: block-diagonal over batches, -inf on padded key columns
    ids = jnp.arange(ROWS)
    same_batch = (ids[:, None] // SEQ_PAD) == (ids[None, :] // SEQ_PAD)
    valid_key = (ids[None, :] % SEQ_PAD) < SEQ
    attn_bias = jnp.where(same_batch & valid_key, 0.0, -1e30).astype(jnp.float32)

    # ---- stack per-layer weights (QKV fused into one (D, 3D) weight) ----
    layers = params["layers"]
    L = len(layers)
    stack = lambda k: jnp.stack([lp[k] for lp in layers])
    qkv_w = jnp.stack([jnp.concatenate([lp["q_w"], lp["k_w"], lp["v_w"]], axis=1)
                       for lp in layers])                                        # (L, D, 3D)
    qkv_b = jnp.stack([jnp.concatenate([lp["q_b"], lp["k_b"], lp["v_b"]])
                       for lp in layers]).reshape(L, 1, 3 * HIDDEN)
    o_w = stack("o_w")                                                           # (L, D, D)
    fc1_w = stack("fc1_w")                                                       # (L, D, I)
    fc1_b = stack("fc1_b").reshape(L, 1, INTERMEDIATE)
    fc2_w = stack("fc2_w")                                                       # (L, I, D)
    # consolidated per-layer (HIDDEN,) vectors -> one (L, 6, D) tensor (fewer input DMAs)
    vecs = jnp.stack([
        jnp.stack([lp["ln1_g"], lp["ln1_b"], lp["o_b"],
                   lp["ln2_g"], lp["ln2_b"], lp["fc2_b"]])
        for lp in layers])                                                       # (L, 6, D)
    pre_ln = jnp.stack([params["pre_ln_g"], params["pre_ln_b"]])                 # (2, D)

    inputs = (patches_flat, params["patch_w"], tok, attn_bias, pre_ln,
              vecs, qkv_w, qkv_b, o_w,
              fc1_w, fc1_b, fc2_w,
              params["proj_w"], params["proj_b"].reshape(1, PROJ_DIM))

    return pl.pallas_call(
        _clip_fwd_kernel,
        out_shape=jax.ShapeDtypeStruct((B, SEQ, PROJ_DIM), jnp.float32),
        grid=(1,),
        in_specs=[_full_block_spec(a.shape) for a in inputs],
        out_specs=pl.BlockSpec((B, SEQ, PROJ_DIM), lambda i: (0, 0, 0)),
        compiler_params=pltpu.CompilerParams(dimension_semantics=("arbitrary",)),
    )(*inputs)


# =============================== pure-JAX reference ===============================

def _ref_layernorm(x, g, b, eps=LN_EPS):
    mean = jnp.mean(x, axis=-1, keepdims=True)
    var = jnp.mean((x - mean) ** 2, axis=-1, keepdims=True)
    return (x - mean) * jax.lax.rsqrt(var + eps) * g + b


def clip_image_encoder_ref(params, pixel_values):
    B = pixel_values.shape[0]
    conv_w = params["patch_w"].T.reshape(HIDDEN, CHANNELS, PATCH, PATCH)
    pe = jax.lax.conv_general_dilated(
        pixel_values, conv_w, window_strides=(PATCH, PATCH), padding="VALID",
        dimension_numbers=("NCHW", "OIHW", "NCHW"))                     # (B, D, nh, nw)
    pe = pe.reshape(B, HIDDEN, NUM_PATCHES).transpose(0, 2, 1)          # (B, Np, D)
    cls = jnp.broadcast_to(params["class_emb"][None, None, :], (B, 1, HIDDEN))
    h = jnp.concatenate([cls, pe], axis=1) + params["pos_emb"][None]
    h = _ref_layernorm(h, params["pre_ln_g"], params["pre_ln_b"])

    for lp in params["layers"]:
        y = _ref_layernorm(h, lp["ln1_g"], lp["ln1_b"])
        q = y @ lp["q_w"] + lp["q_b"]
        k = y @ lp["k_w"] + lp["k_b"]
        v = y @ lp["v_w"] + lp["v_b"]

        def heads(t):
            return t.reshape(B, SEQ, NUM_HEADS, HEAD_DIM).transpose(0, 2, 1, 3)

        qh, kh, vh = heads(q), heads(k), heads(v)
        s = jnp.einsum("bhqd,bhkd->bhqk", qh * (HEAD_DIM ** -0.5), kh)
        p = jax.nn.softmax(s, axis=-1)
        a = jnp.einsum("bhqk,bhkd->bhqd", p, vh).transpose(0, 2, 1, 3).reshape(B, SEQ, HIDDEN)
        a = a @ lp["o_w"] + lp["o_b"]
        h = h + a
        y = _ref_layernorm(h, lp["ln2_g"], lp["ln2_b"])
        f = y @ lp["fc1_w"] + lp["fc1_b"]
        f = f * jax.nn.sigmoid(1.702 * f)
        h = h + (f @ lp["fc2_w"] + lp["fc2_b"])

    return h @ params["proj_w"] + params["proj_b"]


# =============================== params ===============================

def init_params(key):
    ks = iter(jax.random.split(key, 64))
    std = 0.02

    def w(shape):
        return jax.random.normal(next(ks), shape, jnp.float32) * std

    params = {
        "patch_w": w((PATCH_DIM, HIDDEN)),       # conv has bias=False
        "class_emb": w((HIDDEN,)),
        "pos_emb": w((SEQ, HIDDEN)),
        "pre_ln_g": jnp.ones((HIDDEN,), jnp.float32),
        "pre_ln_b": jnp.zeros((HIDDEN,), jnp.float32),
        "proj_w": w((HIDDEN, PROJ_DIM)),
        "proj_b": w((PROJ_DIM,)),
        "layers": [],
    }
    for _ in range(NUM_LAYERS):
        params["layers"].append({
            "ln1_g": jnp.ones((HIDDEN,), jnp.float32),
            "ln1_b": jnp.zeros((HIDDEN,), jnp.float32),
            "q_w": w((HIDDEN, HIDDEN)), "q_b": w((HIDDEN,)),
            "k_w": w((HIDDEN, HIDDEN)), "k_b": w((HIDDEN,)),
            "v_w": w((HIDDEN, HIDDEN)), "v_b": w((HIDDEN,)),
            "o_w": w((HIDDEN, HIDDEN)), "o_b": w((HIDDEN,)),
            "ln2_g": jnp.ones((HIDDEN,), jnp.float32),
            "ln2_b": jnp.zeros((HIDDEN,), jnp.float32),
            "fc1_w": w((HIDDEN, INTERMEDIATE)), "fc1_b": w((INTERMEDIATE,)),
            "fc2_w": w((INTERMEDIATE, HIDDEN)), "fc2_b": w((HIDDEN,)),
        })
    return params


# =============================== main ===============================

if __name__ == "__main__":
    root = jax.random.PRNGKey(0)
    pk, xk = jax.random.split(root)
    params = init_params(pk)
    x = jax.random.normal(xk, (BATCH, CHANNELS, IMAGE, IMAGE), jnp.float32)

    out = jax.jit(clip_image_encoder)(params, x)
    out = jax.block_until_ready(out)
    assert out.shape == (BATCH, SEQ, PROJ_DIM), out.shape

    ref = clip_image_encoder_ref(params, x)
    err = float(jnp.max(jnp.abs(out - ref)))
    # approx-reciprocal (EUP) in softmax / quickGELU -> slightly looser tolerance than exact f32
    assert jnp.allclose(out, ref, atol=1e-3, rtol=1e-3), err

    print("KERNEL_OK")
</pallas_src>

<mosaic_0001>
module attributes {stable_mosaic.version = 11 : i64} {
  func.func @_clip_fwd_kernel(%arg0: i32, %arg1: memref<48x48xf32, #tpu.memory_space<vmem>>, %arg2: memref<48x32xf32, #tpu.memory_space<vmem>>, %arg3: memref<48x32xf32, #tpu.memory_space<vmem>>, %arg4: memref<48x48xf32, #tpu.memory_space<vmem>>, %arg5: memref<2x32xf32, #tpu.memory_space<vmem>>, %arg6: memref<2x6x32xf32, #tpu.memory_space<vmem>>, %arg7: memref<2x32x96xf32, #tpu.memory_space<vmem>>, %arg8: memref<2x1x96xf32, #tpu.memory_space<vmem>>, %arg9: memref<2x32x32xf32, #tpu.memory_space<vmem>>, %arg10: memref<2x32x128xf32, #tpu.memory_space<vmem>>, %arg11: memref<2x1x128xf32, #tpu.memory_space<vmem>>, %arg12: memref<2x128x32xf32, #tpu.memory_space<vmem>>, %arg13: memref<32x768xf32, #tpu.memory_space<vmem>>, %arg14: memref<1x768xf32, #tpu.memory_space<vmem>>, %arg15: memref<2x17x768xf32, #tpu.memory_space<vmem>>) attributes {dimension_semantics = [#tpu.dimension_semantics<arbitrary>], iteration_bounds = array<i64: 1>, scalar_prefetch = 0 : i64, scratch_operands = 0 : i64, tpu.core_type = #tpu.core_type<tc>, window_params = [{pipeline_mode = #tpu.pipeline_mode<synchronous>, transform_indices = @transform_0, window_bounds = array<i64: 48, 48>}, {pipeline_mode = #tpu.pipeline_mode<synchronous>, transform_indices = @transform_1, window_bounds = array<i64: 48, 32>}, {pipeline_mode = #tpu.pipeline_mode<synchronous>, transform_indices = @transform_2, window_bounds = array<i64: 48, 32>}, {pipeline_mode = #tpu.pipeline_mode<synchronous>, transform_indices = @transform_3, window_bounds = array<i64: 48, 48>}, {pipeline_mode = #tpu.pipeline_mode<synchronous>, transform_indices = @transform_4, window_bounds = array<i64: 2, 32>}, {pipeline_mode = #tpu.pipeline_mode<synchronous>, transform_indices = @transform_5, window_bounds = array<i64: 2, 6, 32>}, {pipeline_mode = #tpu.pipeline_mode<synchronous>, transform_indices = @transform_6, window_bounds = array<i64: 2, 32, 96>}, {pipeline_mode = #tpu.pipeline_mode<synchronous>, transform_indices = @transform_7, window_bounds = array<i64: 2, 1, 96>}, {pipeline_mode = #tpu.pipeline_mode<synchronous>, transform_indices = @transform_8, window_bounds = array<i64: 2, 32, 32>}, {pipeline_mode = #tpu.pipeline_mode<synchronous>, transform_indices = @transform_9, window_bounds = array<i64: 2, 32, 128>}, {pipeline_mode = #tpu.pipeline_mode<synchronous>, transform_indices = @transform_10, window_bounds = array<i64: 2, 1, 128>}, {pipeline_mode = #tpu.pipeline_mode<synchronous>, transform_indices = @transform_11, window_bounds = array<i64: 2, 128, 32>}, {pipeline_mode = #tpu.pipeline_mode<synchronous>, transform_indices = @transform_12, window_bounds = array<i64: 32, 768>}, {pipeline_mode = #tpu.pipeline_mode<synchronous>, transform_indices = @transform_13, window_bounds = array<i64: 1, 768>}, {pipeline_mode = #tpu.pipeline_mode<synchronous>, transform_indices = @transform_14, window_bounds = array<i64: 2, 17, 768>}]} {
    %c0 = arith.constant 0 : index
    %c0_0 = arith.constant 0 : index
    %0 = vector.load %arg1[%c0, %c0_0] : memref<48x48xf32, #tpu.memory_space<vmem>>, vector<48x48xf32>
    %c0_1 = arith.constant 0 : index
    %c0_2 = arith.constant 0 : index
    %1 = vector.load %arg2[%c0_1, %c0_2] : memref<48x32xf32, #tpu.memory_space<vmem>>, vector<48x32xf32>
    %cst = arith.constant dense<0.000000e+00> : vector<48x32xf32>
    %2 = tpu.matmul %0, %1, %cst {dimension_numbers = #tpu.dot_dimension_numbers<[1], [0], [0], [1], [0, 0, 1, 1], [], []>} : vector<48x48xf32>, vector<48x32xf32>, vector<48x32xf32> -> vector<48x32xf32>
    %c0_3 = arith.constant 0 : index
    %c0_4 = arith.constant 0 : index
    %3 = vector.load %arg3[%c0_3, %c0_4] : memref<48x32xf32, #tpu.memory_space<vmem>>, vector<48x32xf32>
    %4 = arith.addf %2, %3 : vector<48x32xf32>
    %c0_5 = arith.constant 0 : index
    %c0_6 = arith.constant 0 : index
    %5 = vector.load %arg5[%c0_5, %c0_6] : memref<2x32xf32, #tpu.memory_space<vmem>>, vector<2x32xf32>
    %6 = vector.extract_strided_slice %5 {offsets = [0, 0], sizes = [1, 32], strides = [1, 1]} : vector<2x32xf32> to vector<1x32xf32>
    %7 = vector.extract_strided_slice %5 {offsets = [1, 0], sizes = [1, 32], strides = [1, 1]} : vector<2x32xf32> to vector<1x32xf32>
    %cst_7 = arith.constant dense<0.000000e+00> : vector<48xf32>
    %8 = vector.multi_reduction <add>, %4, %cst_7 [1] : vector<48x32xf32> to vector<48xf32>
    %9 = vector.shape_cast %8 : vector<48xf32> to vector<48x1xf32>
    %cst_8 = arith.constant 3.200000e+01 : f32
    %10 = vector.broadcast %cst_8 : f32 to vector<48x1xf32>
    %11 = arith.divf %9, %10 : vector<48x1xf32>
    %12 = vector.broadcast %11 : vector<48x1xf32> to vector<48x32xf32>
    %13 = arith.subf %4, %12 : vector<48x32xf32>
    %14 = arith.mulf %13, %13 : vector<48x32xf32>
    %cst_9 = arith.constant dense<0.000000e+00> : vector<48xf32>
    %15 = vector.multi_reduction <add>, %14, %cst_9 [1] : vector<48x32xf32> to vector<48xf32>
    %16 = vector.shape_cast %15 : vector<48xf32> to vector<48x1xf32>
    %cst_10 = arith.constant 3.200000e+01 : f32
    %17 = vector.broadcast %cst_10 : f32 to vector<48x1xf32>
    %18 = arith.divf %16, %17 : vector<48x1xf32>
    %cst_11 = arith.constant 9.99999974E-6 : f32
    %19 = vector.broadcast %cst_11 : f32 to vector<48x1xf32>
    %20 = arith.addf %18, %19 : vector<48x1xf32>
    %21 = math.rsqrt %20 : vector<48x1xf32>
    %22 = vector.broadcast %21 : vector<48x1xf32> to vector<48x32xf32>
    %23 = arith.mulf %13, %22 : vector<48x32xf32>
    %24 = vector.broadcast %6 : vector<1x32xf32> to vector<48x32xf32>
    %25 = arith.mulf %23, %24 : vector<48x32xf32>
    %26 = vector.broadcast %7 : vector<1x32xf32> to vector<48x32xf32>
    %27 = arith.addf %25, %26 : vector<48x32xf32>
    %c0_12 = arith.constant 0 : index
    %c0_13 = arith.constant 0 : index
    %28 = vector.load %arg4[%c0_12, %c0_13] : memref<48x48xf32, #tpu.memory_space<vmem>>, vector<48x48xf32>
    %c0_14 = arith.constant 0 : index
    %c0_15 = arith.constant 0 : index
    %c0_16 = arith.constant 0 : index
    %29 = vector.load %arg6[%c0_14, %c0_15, %c0_16] : memref<2x6x32xf32, #tpu.memory_space<vmem>>, vector<1x6x32xf32>
    %30 = vector.shape_cast %29 : vector<1x6x32xf32> to vector<6x32xf32>
    %31 = vector.extract_strided_slice %30 {offsets = [0, 0], sizes = [1, 32], strides = [1, 1]} : vector<6x32xf32> to vector<1x32xf32>
    %32 = vector.extract_strided_slice %30 {offsets = [1, 0], sizes = [1, 32], strides = [1, 1]} : vector<6x32xf32> to vector<1x32xf32>
    %cst_17 = arith.constant dense<0.000000e+00> : vector<48xf32>
    %33 = vector.multi_reduction <add>, %27, %cst_17 [1] : vector<48x32xf32> to vector<48xf32>
    %34 = vector.shape_cast %33 : vector<48xf32> to vector<48x1xf32>
    %cst_18 = arith.constant 3.200000e+01 : f32
    %35 = vector.broadcast %cst_18 : f32 to vector<48x1xf32>
    %36 = arith.divf %34, %35 : vector<48x1xf32>
    %37 = vector.broadcast %36 : vector<48x1xf32> to vector<48x32xf32>
    %38 = arith.subf %27, %37 : vector<48x32xf32>
    %39 = arith.mulf %38, %38 : vector<48x32xf32>
    %cst_19 = arith.constant dense<0.000000e+00> : vector<48xf32>
    %40 = vector.multi_reduction <add>, %39, %cst_19 [1] : vector<48x32xf32> to vector<48xf32>
    %41 = vector.shape_cast %40 : vector<48xf32> to vector<48x1xf32>
    %cst_20 = arith.constant 3.200000e+01 : f32
    %42 = vector.broadcast %cst_20 : f32 to vector<48x1xf32>
    %43 = arith.divf %41, %42 : vector<48x1xf32>
    %cst_21 = arith.constant 9.99999974E-6 : f32
    %44 = vector.broadcast %cst_21 : f32 to vector<48x1xf32>
    %45 = arith.addf %43, %44 : vector<48x1xf32>
    %46 = math.rsqrt %45 : vector<48x1xf32>
    %47 = vector.broadcast %46 : vector<48x1xf32> to vector<48x32xf32>
    %48 = arith.mulf %38, %47 : vector<48x32xf32>
    %49 = vector.broadcast %31 : vector<1x32xf32> to vector<48x32xf32>
    %50 = arith.mulf %48, %49 : vector<48x32xf32>
    %51 = vector.broadcast %32 : vector<1x32xf32> to vector<48x32xf32>
    %52 = arith.addf %50, %51 : vector<48x32xf32>
    %c0_22 = arith.constant 0 : index
    %c0_23 = arith.constant 0 : index
    %c0_24 = arith.constant 0 : index
    %53 = vector.load %arg7[%c0_22, %c0_23, %c0_24] : memref<2x32x96xf32, #tpu.memory_space<vmem>>, vector<1x32x96xf32>
    %54 = vector.shape_cast %53 : vector<1x32x96xf32> to vector<32x96xf32>
    %cst_25 = arith.constant dense<0.000000e+00> : vector<48x96xf32>
    %55 = tpu.matmul %52, %54, %cst_25 {dimension_numbers = #tpu.dot_dimension_numbers<[1], [0], [0], [1], [0, 0, 1, 1], [], []>} : vector<48x32xf32>, vector<32x96xf32>, vector<48x96xf32> -> vector<48x96xf32>
    %c0_26 = arith.constant 0 : index
    %c0_27 = arith.constant 0 : index
    %c0_28 = arith.constant 0 : index
    %56 = vector.load %arg8[%c0_26, %c0_27, %c0_28] : memref<2x1x96xf32, #tpu.memory_space<vmem>>, vector<1x1x96xf32>
    %57 = vector.shape_cast %56 : vector<1x1x96xf32> to vector<1x96xf32>
    %58 = vector.broadcast %57 : vector<1x96xf32> to vector<48x96xf32>
    %59 = arith.addf %55, %58 : vector<48x96xf32>
    %c0_29 = arith.constant 0 : index
    %c0_30 = arith.constant 0 : index
    %c0_31 = arith.constant 0 : index
    %60 = vector.load %arg9[%c0_29, %c0_30, %c0_31] : memref<2x32x32xf32, #tpu.memory_space<vmem>>, vector<1x32x32xf32>
    %61 = vector.shape_cast %60 : vector<1x32x32xf32> to vector<32x32xf32>
    %62 = vector.extract_strided_slice %59 {offsets = [0, 0], sizes = [48, 8], strides = [1, 1]} : vector<48x96xf32> to vector<48x8xf32>
    %cst_32 = arith.constant 0.353553385 : f32
    %63 = vector.broadcast %cst_32 : f32 to vector<48x8xf32>
    %64 = arith.mulf %62, %63 : vector<48x8xf32>
    %65 = vector.extract_strided_slice %59 {offsets = [0, 32], sizes = [48, 8], strides = [1, 1]} : vector<48x96xf32> to vector<48x8xf32>
    %66 = vector.extract_strided_slice %59 {offsets = [0, 64], sizes = [48, 8], strides = [1, 1]} : vector<48x96xf32> to vector<48x8xf32>
    %cst_33 = arith.constant dense<0.000000e+00> : vector<48x48xf32>
    %67 = tpu.matmul %64, %65, %cst_33 {dimension_numbers = #tpu.dot_dimension_numbers<[1], [1], [0], [0], [0, 0, 1, 0], [], []>} : vector<48x8xf32>, vector<48x8xf32>, vector<48x48xf32> -> vector<48x48xf32>
    %68 = arith.addf %67, %28 : vector<48x48xf32>
    %cst_34 = arith.constant dense<0xFF800000> : vector<48xf32>
    %69 = vector.multi_reduction <maximumf>, %68, %cst_34 [1] : vector<48x48xf32> to vector<48xf32>
    %70 = vector.shape_cast %69 : vector<48xf32> to vector<48x1xf32>
    %71 = vector.broadcast %70 : vector<48x1xf32> to vector<48x48xf32>
    %72 = arith.subf %68, %71 : vector<48x48xf32>
    %73 = math.exp %72 : vector<48x48xf32>
    %cst_35 = arith.constant dense<0.000000e+00> : vector<48xf32>
    %74 = vector.multi_reduction <add>, %73, %cst_35 [1] : vector<48x48xf32> to vector<48xf32>
    %75 = vector.shape_cast %74 : vector<48xf32> to vector<48x1xf32>
    %76 = tpu.reciprocal %75 {approx = true} : vector<48x1xf32> -> vector<48x1xf32>
    %77 = vector.broadcast %76 : vector<48x1xf32> to vector<48x48xf32>
    %78 = arith.mulf %73, %77 : vector<48x48xf32>
    %cst_36 = arith.constant dense<0.000000e+00> : vector<48x8xf32>
    %79 = tpu.matmul %78, %66, %cst_36 {dimension_numbers = #tpu.dot_dimension_numbers<[1], [0], [0], [1], [0, 0, 1, 1], [], []>} : vector<48x48xf32>, vector<48x8xf32>, vector<48x8xf32> -> vector<48x8xf32>
    %80 = vector.extract_strided_slice %61 {offsets = [0, 0], sizes = [8, 32], strides = [1, 1]} : vector<32x32xf32> to vector<8x32xf32>
    %cst_37 = arith.constant dense<0.000000e+00> : vector<48x32xf32>
    %81 = tpu.matmul %79, %80, %cst_37 {dimension_numbers = #tpu.dot_dimension_numbers<[1], [0], [0], [1], [0, 0, 1, 1], [], []>} : vector<48x8xf32>, vector<8x32xf32>, vector<48x32xf32> -> vector<48x32xf32>
    %82 = vector.extract_strided_slice %59 {offsets = [0, 8], sizes = [48, 8], strides = [1, 1]} : vector<48x96xf32> to vector<48x8xf32>
    %cst_38 = arith.constant 0.353553385 : f32
    %83 = vector.broadcast %cst_38 : f32 to vector<48x8xf32>
    %84 = arith.mulf %82, %83 : vector<48x8xf32>
    %85 = vector.extract_strided_slice %59 {offsets = [0, 40], sizes = [48, 8], strides = [1, 1]} : vector<48x96xf32> to vector<48x8xf32>
    %86 = vector.extract_strided_slice %59 {offsets = [0, 72], sizes = [48, 8], strides = [1, 1]} : vector<48x96xf32> to vector<48x8xf32>
    %cst_39 = arith.constant dense<0.000000e+00> : vector<48x48xf32>
    %87 = tpu.matmul %84, %85, %cst_39 {dimension_numbers = #tpu.dot_dimension_numbers<[1], [1], [0], [0], [0, 0, 1, 0], [], []>} : vector<48x8xf32>, vector<48x8xf32>, vector<48x48xf32> -> vector<48x48xf32>
    %88 = arith.addf %87, %28 : vector<48x48xf32>
    %cst_40 = arith.constant dense<0xFF800000> : vector<48xf32>
    %89 = vector.multi_reduction <maximumf>, %88, %cst_40 [1] : vector<48x48xf32> to vector<48xf32>
    %90 = vector.shape_cast %89 : vector<48xf32> to vector<48x1xf32>
    %91 = vector.broadcast %90 : vector<48x1xf32> to vector<48x48xf32>
    %92 = arith.subf %88, %91 : vector<48x48xf32>
    %93 = math.exp %92 : vector<48x48xf32>
    %cst_41 = arith.constant dense<0.000000e+00> : vector<48xf32>
    %94 = vector.multi_reduction <add>, %93, %cst_41 [1] : vector<48x48xf32> to vector<48xf32>
    %95 = vector.shape_cast %94 : vector<48xf32> to vector<48x1xf32>
    %96 = tpu.reciprocal %95 {approx = true} : vector<48x1xf32> -> vector<48x1xf32>
    %97 = vector.broadcast %96 : vector<48x1xf32> to vector<48x48xf32>
    %98 = arith.mulf %93, %97 : vector<48x48xf32>
    %cst_42 = arith.constant dense<0.000000e+00> : vector<48x8xf32>
    %99 = tpu.matmul %98, %86, %cst_42 {dimension_numbers = #tpu.dot_dimension_numbers<[1], [0], [0], [1], [0, 0, 1, 1], [], []>} : vector<48x48xf32>, vector<48x8xf32>, vector<48x8xf32> -> vector<48x8xf32>
    %100 = vector.extract_strided_slice %61 {offsets = [8, 0], sizes = [8, 32], strides = [1, 1]} : vector<32x32xf32> to vector<8x32xf32>
    %cst_43 = arith.constant dense<0.000000e+00> : vector<48x32xf32>
    %101 = tpu.matmul %99, %100, %cst_43 {dimension_numbers = #tpu.dot_dimension_numbers<[1], [0], [0], [1], [0, 0, 1, 1], [], []>} : vector<48x8xf32>, vector<8x32xf32>, vector<48x32xf32> -> vector<48x32xf32>
    %102 = arith.addf %81, %101 : vector<48x32xf32>
    %103 = vector.extract_strided_slice %59 {offsets = [0, 16], sizes = [48, 8], strides = [1, 1]} : vector<48x96xf32> to vector<48x8xf32>
    %cst_44 = arith.constant 0.353553385 : f32
    %104 = vector.broadcast %cst_44 : f32 to vector<48x8xf32>
    %105 = arith.mulf %103, %104 : vector<48x8xf32>
    %106 = vector.extract_strided_slice %59 {offsets = [0, 48], sizes = [48, 8], strides = [1, 1]} : vector<48x96xf32> to vector<48x8xf32>
    %107 = vector.extract_strided_slice %59 {offsets = [0, 80], sizes = [48, 8], strides = [1, 1]} : vector<48x96xf32> to vector<48x8xf32>
    %cst_45 = arith.constant dense<0.000000e+00> : vector<48x48xf32>
    %108 = tpu.matmul %105, %106, %cst_45 {dimension_numbers = #tpu.dot_dimension_numbers<[1], [1], [0], [0], [0, 0, 1, 0], [], []>} : vector<48x8xf32>, vector<48x8xf32>, vector<48x48xf32> -> vector<48x48xf32>
    %109 = arith.addf %108, %28 : vector<48x48xf32>
    %cst_46 = arith.constant dense<0xFF800000> : vector<48xf32>
    %110 = vector.multi_reduction <maximumf>, %109, %cst_46 [1] : vector<48x48xf32> to vector<48xf32>
    %111 = vector.shape_cast %110 : vector<48xf32> to vector<48x1xf32>
    %112 = vector.broadcast %111 : vector<48x1xf32> to vector<48x48xf32>
    %113 = arith.subf %109, %112 : vector<48x48xf32>
    %114 = math.exp %113 : vector<48x48xf32>
    %cst_47 = arith.constant dense<0.000000e+00> : vector<48xf32>
    %115 = vector.multi_reduction <add>, %114, %cst_47 [1] : vector<48x48xf32> to vector<48xf32>
    %116 = vector.shape_cast %115 : vector<48xf32> to vector<48x1xf32>
    %117 = tpu.reciprocal %116 {approx = true} : vector<48x1xf32> -> vector<48x1xf32>
    %118 = vector.broadcast %117 : vector<48x1xf32> to vector<48x48xf32>
    %119 = arith.mulf %114, %118 : vector<48x48xf32>
    %cst_48 = arith.constant dense<0.000000e+00> : vector<48x8xf32>
    %120 = tpu.matmul %119, %107, %cst_48 {dimension_numbers = #tpu.dot_dimension_numbers<[1], [0], [0], [1], [0, 0, 1, 1], [], []>} : vector<48x48xf32>, vector<48x8xf32>, vector<48x8xf32> -> vector<48x8xf32>
    %121 = vector.extract_strided_slice %61 {offsets = [16, 0], sizes = [8, 32], strides = [1, 1]} : vector<32x32xf32> to vector<8x32xf32>
    %cst_49 = arith.constant dense<0.000000e+00> : vector<48x32xf32>
    %122 = tpu.matmul %120, %121, %cst_49 {dimension_numbers = #tpu.dot_dimension_numbers<[1], [0], [0], [1], [0, 0, 1, 1], [], []>} : vector<48x8xf32>, vector<8x32xf32>, vector<48x32xf32> -> vector<48x32xf32>
    %123 = arith.addf %102, %122 : vector<48x32xf32>
    %124 = vector.extract_strided_slice %59 {offsets = [0, 24], sizes = [48, 8], strides = [1, 1]} : vector<48x96xf32> to vector<48x8xf32>
    %cst_50 = arith.constant 0.353553385 : f32
    %125 = vector.broadcast %cst_50 : f32 to vector<48x8xf32>
    %126 = arith.mulf %124, %125 : vector<48x8xf32>
    %127 = vector.extract_strided_slice %59 {offsets = [0, 56], sizes = [48, 8], strides = [1, 1]} : vector<48x96xf32> to vector<48x8xf32>
    %128 = vector.extract_strided_slice %59 {offsets = [0, 88], sizes = [48, 8], strides = [1, 1]} : vector<48x96xf32> to vector<48x8xf32>
    %cst_51 = arith.constant dense<0.000000e+00> : vector<48x48xf32>
    %129 = tpu.matmul %126, %127, %cst_51 {dimension_numbers = #tpu.dot_dimension_numbers<[1], [1], [0], [0], [0, 0, 1, 0], [], []>} : vector<48x8xf32>, vector<48x8xf32>, vector<48x48xf32> -> vector<48x48xf32>
    %130 = arith.addf %129, %28 : vector<48x48xf32>
    %cst_52 = arith.constant dense<0xFF800000> : vector<48xf32>
    %131 = vector.multi_reduction <maximumf>, %130, %cst_52 [1] : vector<48x48xf32> to vector<48xf32>
    %132 = vector.shape_cast %131 : vector<48xf32> to vector<48x1xf32>
    %133 = vector.broadcast %132 : vector<48x1xf32> to vector<48x48xf32>
    %134 = arith.subf %130, %133 : vector<48x48xf32>
    %135 = math.exp %134 : vector<48x48xf32>
    %cst_53 = arith.constant dense<0.000000e+00> : vector<48xf32>
    %136 = vector.multi_reduction <add>, %135, %cst_53 [1] : vector<48x48xf32> to vector<48xf32>
    %137 = vector.shape_cast %136 : vector<48xf32> to vector<48x1xf32>
    %138 = tpu.reciprocal %137 {approx = true} : vector<48x1xf32> -> vector<48x1xf32>
    %139 = vector.broadcast %138 : vector<48x1xf32> to vector<48x48xf32>
    %140 = arith.mulf %135, %139 : vector<48x48xf32>
    %cst_54 = arith.constant dense<0.000000e+00> : vector<48x8xf32>
    %141 = tpu.matmul %140, %128, %cst_54 {dimension_numbers = #tpu.dot_dimension_numbers<[1], [0], [0], [1], [0, 0, 1, 1], [], []>} : vector<48x48xf32>, vector<48x8xf32>, vector<48x8xf32> -> vector<48x8xf32>
    %142 = vector.extract_strided_slice %61 {offsets = [24, 0], sizes = [8, 32], strides = [1, 1]} : vector<32x32xf32> to vector<8x32xf32>
    %cst_55 = arith.constant dense<0.000000e+00> : vector<48x32xf32>
    %143 = tpu.matmul %141, %142, %cst_55 {dimension_numbers = #tpu.dot_dimension_numbers<[1], [0], [0], [1], [0, 0, 1, 1], [], []>} : vector<48x8xf32>, vector<8x32xf32>, vector<48x32xf32> -> vector<48x32xf32>
    %144 = arith.addf %123, %143 : vector<48x32xf32>
    %145 = arith.addf %27, %144 : vector<48x32xf32>
    %146 = vector.extract_strided_slice %30 {offsets = [2, 0], sizes = [1, 32], strides = [1, 1]} : vector<6x32xf32> to vector<1x32xf32>
    %147 = vector.broadcast %146 : vector<1x32xf32> to vector<48x32xf32>
    %148 = arith.addf %145, %147 : vector<48x32xf32>
    %149 = vector.extract_strided_slice %30 {offsets = [3, 0], sizes = [1, 32], strides = [1, 1]} : vector<6x32xf32> to vector<1x32xf32>
    %150 = vector.extract_strided_slice %30 {offsets = [4, 0], sizes = [1, 32], strides = [1, 1]} : vector<6x32xf32> to vector<1x32xf32>
    %cst_56 = arith.constant dense<0.000000e+00> : vector<48xf32>
    %151 = vector.multi_reduction <add>, %148, %cst_56 [1] : vector<48x32xf32> to vector<48xf32>
    %152 = vector.shape_cast %151 : vector<48xf32> to vector<48x1xf32>
    %cst_57 = arith.constant 3.200000e+01 : f32
    %153 = vector.broadcast %cst_57 : f32 to vector<48x1xf32>
    %154 = arith.divf %152, %153 : vector<48x1xf32>
    %155 = vector.broadcast %154 : vector<48x1xf32> to vector<48x32xf32>
    %156 = arith.subf %148, %155 : vector<48x32xf32>
    %157 = arith.mulf %156, %156 : vector<48x32xf32>
    %cst_58 = arith.constant dense<0.000000e+00> : vector<48xf32>
    %158 = vector.multi_reduction <add>, %157, %cst_58 [1] : vector<48x32xf32> to vector<48xf32>
    %159 = vector.shape_cast %158 : vector<48xf32> to vector<48x1xf32>
    %cst_59 = arith.constant 3.200000e+01 : f32
    %160 = vector.broadcast %cst_59 : f32 to vector<48x1xf32>
    %161 = arith.divf %159, %160 : vector<48x1xf32>
    %cst_60 = arith.constant 9.99999974E-6 : f32
    %162 = vector.broadcast %cst_60 : f32 to vector<48x1xf32>
    %163 = arith.addf %161, %162 : vector<48x1xf32>
    %164 = math.rsqrt %163 : vector<48x1xf32>
    %165 = vector.broadcast %164 : vector<48x1xf32> to vector<48x32xf32>
    %166 = arith.mulf %156, %165 : vector<48x32xf32>
    %167 = vector.broadcast %149 : vector<1x32xf32> to vector<48x32xf32>
    %168 = arith.mulf %166, %167 : vector<48x32xf32>
    %169 = vector.broadcast %150 : vector<1x32xf32> to vector<48x32xf32>
    %170 = arith.addf %168, %169 : vector<48x32xf32>
    %c0_61 = arith.constant 0 : index
    %c0_62 = arith.constant 0 : index
    %c0_63 = arith.constant 0 : index
    %171 = vector.load %arg10[%c0_61, %c0_62, %c0_63] : memref<2x32x128xf32, #tpu.memory_space<vmem>>, vector<1x32x128xf32>
    %172 = vector.shape_cast %171 : vector<1x32x128xf32> to vector<32x128xf32>
    %cst_64 = arith.constant dense<0.000000e+00> : vector<48x128xf32>
    %173 = tpu.matmul %170, %172, %cst_64 {dimension_numbers = #tpu.dot_dimension_numbers<[1], [0], [0], [1], [0, 0, 1, 1], [], []>} : vector<48x32xf32>, vector<32x128xf32>, vector<48x128xf32> -> vector<48x128xf32>
    %c0_65 = arith.constant 0 : index
    %c0_66 = arith.constant 0 : index
    %c0_67 = arith.constant 0 : index
    %174 = vector.load %arg11[%c0_65, %c0_66, %c0_67] : memref<2x1x128xf32, #tpu.memory_space<vmem>>, vector<1x1x128xf32>
    %175 = vector.shape_cast %174 : vector<1x1x128xf32> to vector<1x128xf32>
    %176 = vector.broadcast %175 : vector<1x128xf32> to vector<48x128xf32>
    %177 = arith.addf %173, %176 : vector<48x128xf32>
    %cst_68 = arith.constant -1.702000e+00 : f32
    %178 = vector.broadcast %cst_68 : f32 to vector<48x128xf32>
    %179 = arith.mulf %178, %177 : vector<48x128xf32>
    %180 = math.exp %179 : vector<48x128xf32>
    %cst_69 = arith.constant 1.000000e+00 : f32
    %181 = vector.broadcast %cst_69 : f32 to vector<48x128xf32>
    %182 = arith.addf %181, %180 : vector<48x128xf32>
    %183 = tpu.reciprocal %182 {approx = true} : vector<48x128xf32> -> vector<48x128xf32>
    %184 = arith.mulf %177, %183 : vector<48x128xf32>
    %c0_70 = arith.constant 0 : index
    %c0_71 = arith.constant 0 : index
    %c0_72 = arith.constant 0 : index
    %185 = vector.load %arg12[%c0_70, %c0_71, %c0_72] : memref<2x128x32xf32, #tpu.memory_space<vmem>>, vector<1x128x32xf32>
    %186 = vector.shape_cast %185 : vector<1x128x32xf32> to vector<128x32xf32>
    %cst_73 = arith.constant dense<0.000000e+00> : vector<48x32xf32>
    %187 = tpu.matmul %184, %186, %cst_73 {dimension_numbers = #tpu.dot_dimension_numbers<[1], [0], [0], [1], [0, 0, 1, 1], [], []>} : vector<48x128xf32>, vector<128x32xf32>, vector<48x32xf32> -> vector<48x32xf32>
    %188 = arith.addf %148, %187 : vector<48x32xf32>
    %189 = vector.extract_strided_slice %30 {offsets = [5, 0], sizes = [1, 32], strides = [1, 1]} : vector<6x32xf32> to vector<1x32xf32>
    %190 = vector.broadcast %189 : vector<1x32xf32> to vector<48x32xf32>
    %191 = arith.addf %188, %190 : vector<48x32xf32>
    %c1 = arith.constant 1 : index
    %c0_74 = arith.constant 0 : index
    %c0_75 = arith.constant 0 : index
    %192 = vector.load %arg6[%c1, %c0_74, %c0_75] : memref<2x6x32xf32, #tpu.memory_space<vmem>>, vector<1x6x32xf32>
    %193 = vector.shape_cast %192 : vector<1x6x32xf32> to vector<6x32xf32>
    %194 = vector.extract_strided_slice %193 {offsets = [0, 0], sizes = [1, 32], strides = [1, 1]} : vector<6x32xf32> to vector<1x32xf32>
    %195 = vector.extract_strided_slice %193 {offsets = [1, 0], sizes = [1, 32], strides = [1, 1]} : vector<6x32xf32> to vector<1x32xf32>
    %cst_76 = arith.constant dense<0.000000e+00> : vector<48xf32>
    %196 = vector.multi_reduction <add>, %191, %cst_76 [1] : vector<48x32xf32> to vector<48xf32>
    %197 = vector.shape_cast %196 : vector<48xf32> to vector<48x1xf32>
    %cst_77 = arith.constant 3.200000e+01 : f32
    %198 = vector.broadcast %cst_77 : f32 to vector<48x1xf32>
    %199 = arith.divf %197, %198 : vector<48x1xf32>
    %200 = vector.broadcast %199 : vector<48x1xf32> to vector<48x32xf32>
    %201 = arith.subf %191, %200 : vector<48x32xf32>
    %202 = arith.mulf %201, %201 : vector<48x32xf32>
    %cst_78 = arith.constant dense<0.000000e+00> : vector<48xf32>
    %203 = vector.multi_reduction <add>, %202, %cst_78 [1] : vector<48x32xf32> to vector<48xf32>
    %204 = vector.shape_cast %203 : vector<48xf32> to vector<48x1xf32>
    %cst_79 = arith.constant 3.200000e+01 : f32
    %205 = vector.broadcast %cst_79 : f32 to vector<48x1xf32>
    %206 = arith.divf %204, %205 : vector<48x1xf32>
    %cst_80 = arith.constant 9.99999974E-6 : f32
    %207 = vector.broadcast %cst_80 : f32 to vector<48x1xf32>
    %208 = arith.addf %206, %207 : vector<48x1xf32>
    %209 = math.rsqrt %208 : vector<48x1xf32>
    %210 = vector.broadcast %209 : vector<48x1xf32> to vector<48x32xf32>
    %211 = arith.mulf %201, %210 : vector<48x32xf32>
    %212 = vector.broadcast %194 : vector<1x32xf32> to vector<48x32xf32>
    %213 = arith.mulf %211, %212 : vector<48x32xf32>
    %214 = vector.broadcast %195 : vector<1x32xf32> to vector<48x32xf32>
    %215 = arith.addf %213, %214 : vector<48x32xf32>
    %c1_81 = arith.constant 1 : index
    %c0_82 = arith.constant 0 : index
    %c0_83 = arith.constant 0 : index
    %216 = vector.load %arg7[%c1_81, %c0_82, %c0_83] : memref<2x32x96xf32, #tpu.memory_space<vmem>>, vector<1x32x96xf32>
    %217 = vector.shape_cast %216 : vector<1x32x96xf32> to vector<32x96xf32>
    %cst_84 = arith.constant dense<0.000000e+00> : vector<48x96xf32>
    %218 = tpu.matmul %215, %217, %cst_84 {dimension_numbers = #tpu.dot_dimension_numbers<[1], [0], [0], [1], [0, 0, 1, 1], [], []>} : vector<48x32xf32>, vector<32x96xf32>, vector<48x96xf32> -> vector<48x96xf32>
    %c1_85 = arith.constant 1 : index
    %c0_86 = arith.constant 0 : index
    %c0_87 = arith.constant 0 : index
    %219 = vector.load %arg8[%c1_85, %c0_86, %c0_87] : memref<2x1x96xf32, #tpu.memory_space<vmem>>, vector<1x1x96xf32>
    %220 = vector.shape_cast %219 : vector<1x1x96xf32> to vector<1x96xf32>
    %221 = vector.broadcast %220 : vector<1x96xf32> to vector<48x96xf32>
    %222 = arith.addf %218, %221 : vector<48x96xf32>
    %c1_88 = arith.constant 1 : index
    %c0_89 = arith.constant 0 : index
    %c0_90 = arith.constant 0 : index
    %223 = vector.load %arg9[%c1_88, %c0_89, %c0_90] : memref<2x32x32xf32, #tpu.memory_space<vmem>>, vector<1x32x32xf32>
    %224 = vector.shape_cast %223 : vector<1x32x32xf32> to vector<32x32xf32>
    %225 = vector.extract_strided_slice %222 {offsets = [0, 0], sizes = [48, 8], strides = [1, 1]} : vector<48x96xf32> to vector<48x8xf32>
    %cst_91 = arith.constant 0.353553385 : f32
    %226 = vector.broadcast %cst_91 : f32 to vector<48x8xf32>
    %227 = arith.mulf %225, %226 : vector<48x8xf32>
    %228 = vector.extract_strided_slice %222 {offsets = [0, 32], sizes = [48, 8], strides = [1, 1]} : vector<48x96xf32> to vector<48x8xf32>
    %229 = vector.extract_strided_slice %222 {offsets = [0, 64], sizes = [48, 8], strides = [1, 1]} : vector<48x96xf32> to vector<48x8xf32>
    %cst_92 = arith.constant dense<0.000000e+00> : vector<48x48xf32>
    %230 = tpu.matmul %227, %228, %cst_92 {dimension_numbers = #tpu.dot_dimension_numbers<[1], [1], [0], [0], [0, 0, 1, 0], [], []>} : vector<48x8xf32>, vector<48x8xf32>, vector<48x48xf32> -> vector<48x48xf32>
    %231 = arith.addf %230, %28 : vector<48x48xf32>
    %cst_93 = arith.constant dense<0xFF800000> : vector<48xf32>
    %232 = vector.multi_reduction <maximumf>, %231, %cst_93 [1] : vector<48x48xf32> to vector<48xf32>
    %233 = vector.shape_cast %232 : vector<48xf32> to vector<48x1xf32>
    %234 = vector.broadcast %233 : vector<48x1xf32> to vector<48x48xf32>
    %235 = arith.subf %231, %234 : vector<48x48xf32>
    %236 = math.exp %235 : vector<48x48xf32>
    %cst_94 = arith.constant dense<0.000000e+00> : vector<48xf32>
    %237 = vector.multi_reduction <add>, %236, %cst_94 [1] : vector<48x48xf32> to vector<48xf32>
    %238 = vector.shape_cast %237 : vector<48xf32> to vector<48x1xf32>
    %239 = tpu.reciprocal %238 {approx = true} : vector<48x1xf32> -> vector<48x1xf32>
    %240 = vector.broadcast %239 : vector<48x1xf32> to vector<48x48xf32>
    %241 = arith.mulf %236, %240 : vector<48x48xf32>
    %cst_95 = arith.constant dense<0.000000e+00> : vector<48x8xf32>
    %242 = tpu.matmul %241, %229, %cst_95 {dimension_numbers = #tpu.dot_dimension_numbers<[1], [0], [0], [1], [0, 0, 1, 1], [], []>} : vector<48x48xf32>, vector<48x8xf32>, vector<48x8xf32> -> vector<48x8xf32>
    %243 = vector.extract_strided_slice %224 {offsets = [0, 0], sizes = [8, 32], strides = [1, 1]} : vector<32x32xf32> to vector<8x32xf32>
    %cst_96 = arith.constant dense<0.000000e+00> : vector<48x32xf32>
    %244 = tpu.matmul %242, %243, %cst_96 {dimension_numbers = #tpu.dot_dimension_numbers<[1], [0], [0], [1], [0, 0, 1, 1], [], []>} : vector<48x8xf32>, vector<8x32xf32>, vector<48x32xf32> -> vector<48x32xf32>
    %245 = vector.extract_strided_slice %222 {offsets = [0, 8], sizes = [48, 8], strides = [1, 1]} : vector<48x96xf32> to vector<48x8xf32>
    %cst_97 = arith.constant 0.353553385 : f32
    %246 = vector.broadcast %cst_97 : f32 to vector<48x8xf32>
    %247 = arith.mulf %245, %246 : vector<48x8xf32>
    %248 = vector.extract_strided_slice %222 {offsets = [0, 40], sizes = [48, 8], strides = [1, 1]} : vector<48x96xf32> to vector<48x8xf32>
    %249 = vector.extract_strided_slice %222 {offsets = [0, 72], sizes = [48, 8], strides = [1, 1]} : vector<48x96xf32> to vector<48x8xf32>
    %cst_98 = arith.constant dense<0.000000e+00> : vector<48x48xf32>
    %250 = tpu.matmul %247, %248, %cst_98 {dimension_numbers = #tpu.dot_dimension_numbers<[1], [1], [0], [0], [0, 0, 1, 0], [], []>} : vector<48x8xf32>, vector<48x8xf32>, vector<48x48xf32> -> vector<48x48xf32>
    %251 = arith.addf %250, %28 : vector<48x48xf32>
    %cst_99 = arith.constant dense<0xFF800000> : vector<48xf32>
    %252 = vector.multi_reduction <maximumf>, %251, %cst_99 [1] : vector<48x48xf32> to vector<48xf32>
    %253 = vector.shape_cast %252 : vector<48xf32> to vector<48x1xf32>
    %254 = vector.broadcast %253 : vector<48x1xf32> to vector<48x48xf32>
    %255 = arith.subf %251, %254 : vector<48x48xf32>
    %256 = math.exp %255 : vector<48x48xf32>
    %cst_100 = arith.constant dense<0.000000e+00> : vector<48xf32>
    %257 = vector.multi_reduction <add>, %256, %cst_100 [1] : vector<48x48xf32> to vector<48xf32>
    %258 = vector.shape_cast %257 : vector<48xf32> to vector<48x1xf32>
    %259 = tpu.reciprocal %258 {approx = true} : vector<48x1xf32> -> vector<48x1xf32>
    %260 = vector.broadcast %259 : vector<48x1xf32> to vector<48x48xf32>
    %261 = arith.mulf %256, %260 : vector<48x48xf32>
    %cst_101 = arith.constant dense<0.000000e+00> : vector<48x8xf32>
    %262 = tpu.matmul %261, %249, %cst_101 {dimension_numbers = #tpu.dot_dimension_numbers<[1], [0], [0], [1], [0, 0, 1, 1], [], []>} : vector<48x48xf32>, vector<48x8xf32>, vector<48x8xf32> -> vector<48x8xf32>
    %263 = vector.extract_strided_slice %224 {offsets = [8, 0], sizes = [8, 32], strides = [1, 1]} : vector<32x32xf32> to vector<8x32xf32>
    %cst_102 = arith.constant dense<0.000000e+00> : vector<48x32xf32>
    %264 = tpu.matmul %262, %263, %cst_102 {dimension_numbers = #tpu.dot_dimension_numbers<[1], [0], [0], [1], [0, 0, 1, 1], [], []>} : vector<48x8xf32>, vector<8x32xf32>, vector<48x32xf32> -> vector<48x32xf32>
    %265 = arith.addf %244, %264 : vector<48x32xf32>
    %266 = vector.extract_strided_slice %222 {offsets = [0, 16], sizes = [48, 8], strides = [1, 1]} : vector<48x96xf32> to vector<48x8xf32>
    %cst_103 = arith.constant 0.353553385 : f32
    %267 = vector.broadcast %cst_103 : f32 to vector<48x8xf32>
    %268 = arith.mulf %266, %267 : vector<48x8xf32>
    %269 = vector.extract_strided_slice %222 {offsets = [0, 48], sizes = [48, 8], strides = [1, 1]} : vector<48x96xf32> to vector<48x8xf32>
    %270 = vector.extract_strided_slice %222 {offsets = [0, 80], sizes = [48, 8], strides = [1, 1]} : vector<48x96xf32> to vector<48x8xf32>
    %cst_104 = arith.constant dense<0.000000e+00> : vector<48x48xf32>
    %271 = tpu.matmul %268, %269, %cst_104 {dimension_numbers = #tpu.dot_dimension_numbers<[1], [1], [0], [0], [0, 0, 1, 0], [], []>} : vector<48x8xf32>, vector<48x8xf32>, vector<48x48xf32> -> vector<48x48xf32>
    %272 = arith.addf %271, %28 : vector<48x48xf32>
    %cst_105 = arith.constant dense<0xFF800000> : vector<48xf32>
    %273 = vector.multi_reduction <maximumf>, %272, %cst_105 [1] : vector<48x48xf32> to vector<48xf32>
    %274 = vector.shape_cast %273 : vector<48xf32> to vector<48x1xf32>
    %275 = vector.broadcast %274 : vector<48x1xf32> to vector<48x48xf32>
    %276 = arith.subf %272, %275 : vector<48x48xf32>
    %277 = math.exp %276 : vector<48x48xf32>
    %cst_106 = arith.constant dense<0.000000e+00> : vector<48xf32>
    %278 = vector.multi_reduction <add>, %277, %cst_106 [1] : vector<48x48xf32> to vector<48xf32>
    %279 = vector.shape_cast %278 : vector<48xf32> to vector<48x1xf32>
    %280 = tpu.reciprocal %279 {approx = true} : vector<48x1xf32> -> vector<48x1xf32>
    %281 = vector.broadcast %280 : vector<48x1xf32> to vector<48x48xf32>
    %282 = arith.mulf %277, %281 : vector<48x48xf32>
    %cst_107 = arith.constant dense<0.000000e+00> : vector<48x8xf32>
    %283 = tpu.matmul %282, %270, %cst_107 {dimension_numbers = #tpu.dot_dimension_numbers<[1], [0], [0], [1], [0, 0, 1, 1], [], []>} : vector<48x48xf32>, vector<48x8xf32>, vector<48x8xf32> -> vector<48x8xf32>
    %284 = vector.extract_strided_slice %224 {offsets = [16, 0], sizes = [8, 32], strides = [1, 1]} : vector<32x32xf32> to vector<8x32xf32>
    %cst_108 = arith.constant dense<0.000000e+00> : vector<48x32xf32>
    %285 = tpu.matmul %283, %284, %cst_108 {dimension_numbers = #tpu.dot_dimension_numbers<[1], [0], [0], [1], [0, 0, 1, 1], [], []>} : vector<48x8xf32>, vector<8x32xf32>, vector<48x32xf32> -> vector<48x32xf32>
    %286 = arith.addf %265, %285 : vector<48x32xf32>
    %287 = vector.extract_strided_slice %222 {offsets = [0, 24], sizes = [48, 8], strides = [1, 1]} : vector<48x96xf32> to vector<48x8xf32>
    %cst_109 = arith.constant 0.353553385 : f32
    %288 = vector.broadcast %cst_109 : f32 to vector<48x8xf32>
    %289 = arith.mulf %287, %288 : vector<48x8xf32>
    %290 = vector.extract_strided_slice %222 {offsets = [0, 56], sizes = [48, 8], strides = [1, 1]} : vector<48x96xf32> to vector<48x8xf32>
    %291 = vector.extract_strided_slice %222 {offsets = [0, 88], sizes = [48, 8], strides = [1, 1]} : vector<48x96xf32> to vector<48x8xf32>
    %cst_110 = arith.constant dense<0.000000e+00> : vector<48x48xf32>
    %292 = tpu.matmul %289, %290, %cst_110 {dimension_numbers = #tpu.dot_dimension_numbers<[1], [1], [0], [0], [0, 0, 1, 0], [], []>} : vector<48x8xf32>, vector<48x8xf32>, vector<48x48xf32> -> vector<48x48xf32>
    %293 = arith.addf %292, %28 : vector<48x48xf32>
    %cst_111 = arith.constant dense<0xFF800000> : vector<48xf32>
    %294 = vector.multi_reduction <maximumf>, %293, %cst_111 [1] : vector<48x48xf32> to vector<48xf32>
    %295 = vector.shape_cast %294 : vector<48xf32> to vector<48x1xf32>
    %296 = vector.broadcast %295 : vector<48x1xf32> to vector<48x48xf32>
    %297 = arith.subf %293, %296 : vector<48x48xf32>
    %298 = math.exp %297 : vector<48x48xf32>
    %cst_112 = arith.constant dense<0.000000e+00> : vector<48xf32>
    %299 = vector.multi_reduction <add>, %298, %cst_112 [1] : vector<48x48xf32> to vector<48xf32>
    %300 = vector.shape_cast %299 : vector<48xf32> to vector<48x1xf32>
    %301 = tpu.reciprocal %300 {approx = true} : vector<48x1xf32> -> vector<48x1xf32>
    %302 = vector.broadcast %301 : vector<48x1xf32> to vector<48x48xf32>
    %303 = arith.mulf %298, %302 : vector<48x48xf32>
    %cst_113 = arith.constant dense<0.000000e+00> : vector<48x8xf32>
    %304 = tpu.matmul %303, %291, %cst_113 {dimension_numbers = #tpu.dot_dimension_numbers<[1], [0], [0], [1], [0, 0, 1, 1], [], []>} : vector<48x48xf32>, vector<48x8xf32>, vector<48x8xf32> -> vector<48x8xf32>
    %305 = vector.extract_strided_slice %224 {offsets = [24, 0], sizes = [8, 32], strides = [1, 1]} : vector<32x32xf32> to vector<8x32xf32>
    %cst_114 = arith.constant dense<0.000000e+00> : vector<48x32xf32>
    %306 = tpu.matmul %304, %305, %cst_114 {dimension_numbers = #tpu.dot_dimension_numbers<[1], [0], [0], [1], [0, 0, 1, 1], [], []>} : vector<48x8xf32>, vector<8x32xf32>, vector<48x32xf32> -> vector<48x32xf32>
    %307 = arith.addf %286, %306 : vector<48x32xf32>
    %308 = arith.addf %191, %307 : vector<48x32xf32>
    %309 = vector.extract_strided_slice %193 {offsets = [2, 0], sizes = [1, 32], strides = [1, 1]} : vector<6x32xf32> to vector<1x32xf32>
    %310 = vector.broadcast %309 : vector<1x32xf32> to vector<48x32xf32>
    %311 = arith.addf %308, %310 : vector<48x32xf32>
    %312 = vector.extract_strided_slice %193 {offsets = [3, 0], sizes = [1, 32], strides = [1, 1]} : vector<6x32xf32> to vector<1x32xf32>
    %313 = vector.extract_strided_slice %193 {offsets = [4, 0], sizes = [1, 32], strides = [1, 1]} : vector<6x32xf32> to vector<1x32xf32>
    %cst_115 = arith.constant dense<0.000000e+00> : vector<48xf32>
    %314 = vector.multi_reduction <add>, %311, %cst_115 [1] : vector<48x32xf32> to vector<48xf32>
    %315 = vector.shape_cast %314 : vector<48xf32> to vector<48x1xf32>
    %cst_116 = arith.constant 3.200000e+01 : f32
    %316 = vector.broadcast %cst_116 : f32 to vector<48x1xf32>
    %317 = arith.divf %315, %316 : vector<48x1xf32>
    %318 = vector.broadcast %317 : vector<48x1xf32> to vector<48x32xf32>
    %319 = arith.subf %311, %318 : vector<48x32xf32>
    %320 = arith.mulf %319, %319 : vector<48x32xf32>
    %cst_117 = arith.constant dense<0.000000e+00> : vector<48xf32>
    %321 = vector.multi_reduction <add>, %320, %cst_117 [1] : vector<48x32xf32> to vector<48xf32>
    %322 = vector.shape_cast %321 : vector<48xf32> to vector<48x1xf32>
    %cst_118 = arith.constant 3.200000e+01 : f32
    %323 = vector.broadcast %cst_118 : f32 to vector<48x1xf32>
    %324 = arith.divf %322, %323 : vector<48x1xf32>
    %cst_119 = arith.constant 9.99999974E-6 : f32
    %325 = vector.broadcast %cst_119 : f32 to vector<48x1xf32>
    %326 = arith.addf %324, %325 : vector<48x1xf32>
    %327 = math.rsqrt %326 : vector<48x1xf32>
    %328 = vector.broadcast %327 : vector<48x1xf32> to vector<48x32xf32>
    %329 = arith.mulf %319, %328 : vector<48x32xf32>
    %330 = vector.broadcast %312 : vector<1x32xf32> to vector<48x32xf32>
    %331 = arith.mulf %329, %330 : vector<48x32xf32>
    %332 = vector.broadcast %313 : vector<1x32xf32> to vector<48x32xf32>
    %333 = arith.addf %331, %332 : vector<48x32xf32>
    %c1_120 = arith.constant 1 : index
    %c0_121 = arith.constant 0 : index
    %c0_122 = arith.constant 0 : index
    %334 = vector.load %arg10[%c1_120, %c0_121, %c0_122] : memref<2x32x128xf32, #tpu.memory_space<vmem>>, vector<1x32x128xf32>
    %335 = vector.shape_cast %334 : vector<1x32x128xf32> to vector<32x128xf32>
    %cst_123 = arith.constant dense<0.000000e+00> : vector<48x128xf32>
    %336 = tpu.matmul %333, %335, %cst_123 {dimension_numbers = #tpu.dot_dimension_numbers<[1], [0], [0], [1], [0, 0, 1, 1], [], []>} : vector<48x32xf32>, vector<32x128xf32>, vector<48x128xf32> -> vector<48x128xf32>
    %c1_124 = arith.constant 1 : index
    %c0_125 = arith.constant 0 : index
    %c0_126 = arith.constant 0 : index
    %337 = vector.load %arg11[%c1_124, %c0_125, %c0_126] : memref<2x1x128xf32, #tpu.memory_space<vmem>>, vector<1x1x128xf32>
    %338 = vector.shape_cast %337 : vector<1x1x128xf32> to vector<1x128xf32>
    %339 = vector.broadcast %338 : vector<1x128xf32> to vector<48x128xf32>
    %340 = arith.addf %336, %339 : vector<48x128xf32>
    %cst_127 = arith.constant -1.702000e+00 : f32
    %341 = vector.broadcast %cst_127 : f32 to vector<48x128xf32>
    %342 = arith.mulf %341, %340 : vector<48x128xf32>
    %343 = math.exp %342 : vector<48x128xf32>
    %cst_128 = arith.constant 1.000000e+00 : f32
    %344 = vector.broadcast %cst_128 : f32 to vector<48x128xf32>
    %345 = arith.addf %344, %343 : vector<48x128xf32>
    %346 = tpu.reciprocal %345 {approx = true} : vector<48x128xf32> -> vector<48x128xf32>
    %347 = arith.mulf %340, %346 : vector<48x128xf32>
    %c1_129 = arith.constant 1 : index
    %c0_130 = arith.constant 0 : index
    %c0_131 = arith.constant 0 : index
    %348 = vector.load %arg12[%c1_129, %c0_130, %c0_131] : memref<2x128x32xf32, #tpu.memory_space<vmem>>, vector<1x128x32xf32>
    %349 = vector.shape_cast %348 : vector<1x128x32xf32> to vector<128x32xf32>
    %cst_132 = arith.constant dense<0.000000e+00> : vector<48x32xf32>
    %350 = tpu.matmul %347, %349, %cst_132 {dimension_numbers = #tpu.dot_dimension_numbers<[1], [0], [0], [1], [0, 0, 1, 1], [], []>} : vector<48x128xf32>, vector<128x32xf32>, vector<48x32xf32> -> vector<48x32xf32>
    %351 = arith.addf %311, %350 : vector<48x32xf32>
    %352 = vector.extract_strided_slice %193 {offsets = [5, 0], sizes = [1, 32], strides = [1, 1]} : vector<6x32xf32> to vector<1x32xf32>
    %353 = vector.broadcast %352 : vector<1x32xf32> to vector<48x32xf32>
    %354 = arith.addf %351, %353 : vector<48x32xf32>
    %c0_133 = arith.constant 0 : index
    %c0_134 = arith.constant 0 : index
    %355 = vector.load %arg13[%c0_133, %c0_134] : memref<32x768xf32, #tpu.memory_space<vmem>>, vector<32x768xf32>
    %cst_135 = arith.constant dense<0.000000e+00> : vector<48x768xf32>
    %356 = tpu.matmul %354, %355, %cst_135 {dimension_numbers = #tpu.dot_dimension_numbers<[1], [0], [0], [1], [0, 0, 1, 1], [], []>} : vector<48x32xf32>, vector<32x768xf32>, vector<48x768xf32> -> vector<48x768xf32>
    %c0_136 = arith.constant 0 : index
    %c0_137 = arith.constant 0 : index
    %357 = vector.load %arg14[%c0_136, %c0_137] : memref<1x768xf32, #tpu.memory_space<vmem>>, vector<1x768xf32>
    %358 = vector.broadcast %357 : vector<1x768xf32> to vector<48x768xf32>
    %359 = arith.addf %356, %358 : vector<48x768xf32>
    %360 = vector.extract_strided_slice %359 {offsets = [0, 0], sizes = [17, 768], strides = [1, 1]} : vector<48x768xf32> to vector<17x768xf32>
    %c0_138 = arith.constant 0 : index
    %c0_139 = arith.constant 0 : index
    %c0_140 = arith.constant 0 : index
    %361 = vector.load %arg15[%c0_138, %c0_139, %c0_140] : memref<2x17x768xf32, #tpu.memory_space<vmem>>, vector<1x17x768xf32>
    %362 = vector.shape_cast %361 : vector<1x17x768xf32> to vector<17x768xf32>
    %363 = vector.shape_cast %360 : vector<17x768xf32> to vector<1x17x768xf32>
    tpu.vector_store %arg15[%c0_138, %c0_139, %c0_140], %363 {strides = array<i32>} : memref<2x17x768xf32, #tpu.memory_space<vmem>>, vector<1x17x768xf32>,
    %364 = vector.extract_strided_slice %359 {offsets = [24, 0], sizes = [17, 768], strides = [1, 1]} : vector<48x768xf32> to vector<17x768xf32>
    %c1_141 = arith.constant 1 : index
    %c0_142 = arith.constant 0 : index
    %c0_143 = arith.constant 0 : index
    %365 = vector.load %arg15[%c1_141, %c0_142, %c0_143] : memref<2x17x768xf32, #tpu.memory_space<vmem>>, vector<1x17x768xf32>
    %366 = vector.shape_cast %365 : vector<1x17x768xf32> to vector<17x768xf32>
    %367 = vector.shape_cast %364 : vector<17x768xf32> to vector<1x17x768xf32>
    tpu.vector_store %arg15[%c1_141, %c0_142, %c0_143], %367 {strides = array<i32>} : memref<2x17x768xf32, #tpu.memory_space<vmem>>, vector<1x17x768xf32>,
    return
  }
  func.func @transform_0(%arg0: i32) -> (i32, i32) {
    %c0_i32 = arith.constant 0 : i32
    %c0_i32_0 = arith.constant 0 : i32
    %c0_i32_1 = arith.constant 0 : i32
    return %c0_i32, %c0_i32_0 : i32, i32
  }
  func.func @transform_1(%arg0: i32) -> (i32, i32) {
    %c0_i32 = arith.constant 0 : i32
    %c0_i32_0 = arith.constant 0 : i32
    %c0_i32_1 = arith.constant 0 : i32
    return %c0_i32, %c0_i32_0 : i32, i32
  }
  func.func @transform_2(%arg0: i32) -> (i32, i32) {
    %c0_i32 = arith.constant 0 : i32
    %c0_i32_0 = arith.constant 0 : i32
    %c0_i32_1 = arith.constant 0 : i32
    return %c0_i32, %c0_i32_0 : i32, i32
  }
  func.func @transform_3(%arg0: i32) -> (i32, i32) {
    %c0_i32 = arith.constant 0 : i32
    %c0_i32_0 = arith.constant 0 : i32
    %c0_i32_1 = arith.constant 0 : i32
    return %c0_i32, %c0_i32_0 : i32, i32
  }
  func.func @transform_4(%arg0: i32) -> (i32, i32) {
    %c0_i32 = arith.constant 0 : i32
    %c0_i32_0 = arith.constant 0 : i32
    %c0_i32_1 = arith.constant 0 : i32
    return %c0_i32, %c0_i32_0 : i32, i32
  }
  func.func @transform_5(%arg0: i32) -> (i32, i32, i32) {
    %c0_i32 = arith.constant 0 : i32
    %c0_i32_0 = arith.constant 0 : i32
    %c0_i32_1 = arith.constant 0 : i32
    %c0_i32_2 = arith.constant 0 : i32
    return %c0_i32, %c0_i32_0, %c0_i32_1 : i32, i32, i32
  }
  func.func @transform_6(%arg0: i32) -> (i32, i32, i32) {
    %c0_i32 = arith.constant 0 : i32
    %c0_i32_0 = arith.constant 0 : i32
    %c0_i32_1 = arith.constant 0 : i32
    %c0_i32_2 = arith.constant 0 : i32
    return %c0_i32, %c0_i32_0, %c0_i32_1 : i32, i32, i32
  }
  func.func @transform_7(%arg0: i32) -> (i32, i32, i32) {
    %c0_i32 = arith.constant 0 : i32
    %c0_i32_0 = arith.constant 0 : i32
    %c0_i32_1 = arith.constant 0 : i32
    %c0_i32_2 = arith.constant 0 : i32
    return %c0_i32, %c0_i32_0, %c0_i32_1 : i32, i32, i32
  }
  func.func @transform_8(%arg0: i32) -> (i32, i32, i32) {
    %c0_i32 = arith.constant 0 : i32
    %c0_i32_0 = arith.constant 0 : i32
    %c0_i32_1 = arith.constant 0 : i32
    %c0_i32_2 = arith.constant 0 : i32
    return %c0_i32, %c0_i32_0, %c0_i32_1 : i32, i32, i32
  }
  func.func @transform_9(%arg0: i32) -> (i32, i32, i32) {
    %c0_i32 = arith.constant 0 : i32
    %c0_i32_0 = arith.constant 0 : i32
    %c0_i32_1 = arith.constant 0 : i32
    %c0_i32_2 = arith.constant 0 : i32
    return %c0_i32, %c0_i32_0, %c0_i32_1 : i32, i32, i32
  }
  func.func @transform_10(%arg0: i32) -> (i32, i32, i32) {
    %c0_i32 = arith.constant 0 : i32
    %c0_i32_0 = arith.constant 0 : i32
    %c0_i32_1 = arith.constant 0 : i32
    %c0_i32_2 = arith.constant 0 : i32
    return %c0_i32, %c0_i32_0, %c0_i32_1 : i32, i32, i32
  }
  func.func @transform_11(%arg0: i32) -> (i32, i32, i32) {
    %c0_i32 = arith.constant 0 : i32
    %c0_i32_0 = arith.constant 0 : i32
    %c0_i32_1 = arith.constant 0 : i32
    %c0_i32_2 = arith.constant 0 : i32
    return %c0_i32, %c0_i32_0, %c0_i32_1 : i32, i32, i32
  }
  func.func @transform_12(%arg0: i32) -> (i32, i32) {
    %c0_i32 = arith.constant 0 : i32
    %c0_i32_0 = arith.constant 0 : i32
    %c0_i32_1 = arith.constant 0 : i32
    return %c0_i32, %c0_i32_0 : i32, i32
  }
  func.func @transform_13(%arg0: i32) -> (i32, i32) {
    %c0_i32 = arith.constant 0 : i32
    %c0_i32_0 = arith.constant 0 : i32
    %c0_i32_1 = arith.constant 0 : i32
    return %c0_i32, %c0_i32_0 : i32, i32
  }
  func.func @transform_14(%arg0: i32) -> (i32, i32, i32) {
    %c0_i32 = arith.constant 0 : i32
    %c0_i32_0 = arith.constant 0 : i32
    %c0_i32_1 = arith.constant 0 : i32
    %c0_i32_2 = arith.constant 0 : i32
    return %c0_i32, %c0_i32_0, %c0_i32_1 : i32, i32, i32
  }
}

</mosaic_0001>

<llo_original>
// kernel: clip_image_encoder.1
$region0: #{clip_image_encoder.1}
  #allocation0 [shape = 'u32[]', space=smem, size = 0x4, offset = 0x4, fixed_abs, tag = 'smem constant byte address 0x4 - core index']
  #allocation1 [shape = 'u32[144,128]{1,0:T(1,128)}', space=vmem, size = 0x12000, scoped, tag = 'internal scratch']
  %s0 = inlined_call_operand.vmem [shape: f32[48,48], index: 0, kind: input, shape index: {}]
  %s1 = inlined_call_operand.vmem [shape: f32[48,32], index: 1, kind: input, shape index: {}]
  %s2 = inlined_call_operand.vmem [shape: f32[48,32], index: 2, kind: input, shape index: {}]
  %s3 = inlined_call_operand.vmem [shape: f32[48,48], index: 3, kind: input, shape index: {}]
  %s4 = inlined_call_operand.vmem [shape: f32[2,32], index: 4, kind: input, shape index: {}]
  %s5 = inlined_call_operand.vmem [shape: f32[2,6,32], index: 5, kind: input, shape index: {}]
  %s6 = inlined_call_operand.vmem [shape: f32[2,32,96], index: 6, kind: input, shape index: {}]
  %s7 = inlined_call_operand.vmem [shape: f32[2,1,96], index: 7, kind: input, shape index: {}]
  %s8 = inlined_call_operand.vmem [shape: f32[2,32,32], index: 8, kind: input, shape index: {}]
  %s9 = inlined_call_operand.vmem [shape: f32[2,32,128], index: 9, kind: input, shape index: {}]
  %s10 = inlined_call_operand.vmem [shape: f32[2,1,128], index: 10, kind: input, shape index: {}]
  %s11 = inlined_call_operand.vmem [shape: f32[2,128,32], index: 11, kind: input, shape index: {}]
  %s12 = inlined_call_operand.vmem [shape: f32[32,768], index: 12, kind: input, shape index: {}]
  %s13 = inlined_call_operand.vmem [shape: f32[1,768], index: 13, kind: input, shape index: {}]
  %s14 = inlined_call_operand.vmem [shape: f32[2,17,768], index: 14, kind: output, shape index: {}]
  %s15 = sld [smem:[#allocation0]]
  $region66: #{clip_image_encoder.1} parent=0
    _
  %s17 = ssub.s32 1, %s15
  %s18 = scalar_select 0, %s17, %s15
  // Predicated region
  $region2: #{clip_image_encoder.1} parent=0 // pred_check
    _
  $region3: #{clip_image_encoder.1} parent=0 // pred_check_branch
    %20 = sbr.rel (0) target = $region5
  $region4: #{clip_image_encoder.1} parent=0 // pred_region
    _
  $region5: #{clip_image_encoder.1} parent=0 // pred_fallthru
    _
  // Predicated region
  $region6: #{clip_image_encoder.1} parent=0 // pred_check
    _
  $region7: #{clip_image_encoder.1} parent=0 // pred_check_branch
    %22 = sbr.rel (0) target = $region9
  $region8: #{clip_image_encoder.1} parent=0 // pred_region
    _
  $region9: #{clip_image_encoder.1} parent=0 // pred_fallthru
    _
  // Predicated region
  $region10: #{clip_image_encoder.1} parent=0 // pred_check
    _
  $region11: #{clip_image_encoder.1} parent=0 // pred_check_branch
    %24 = sbr.rel (0) target = $region13
  $region12: #{clip_image_encoder.1} parent=0 // pred_region
    _
  $region13: #{clip_image_encoder.1} parent=0 // pred_fallthru
    _
  // Predicated region
  $region14: #{clip_image_encoder.1} parent=0 // pred_check
    _
  $region15: #{clip_image_encoder.1} parent=0 // pred_check_branch
    %26 = sbr.rel (0) target = $region17
  $region16: #{clip_image_encoder.1} parent=0 // pred_region
    _
  $region17: #{clip_image_encoder.1} parent=0 // pred_fallthru
    _
  // Predicated region
  $region18: #{clip_image_encoder.1} parent=0 // pred_check
    _
  $region19: #{clip_image_encoder.1} parent=0 // pred_check_branch
    %28 = sbr.rel (0) target = $region21
  $region20: #{clip_image_encoder.1} parent=0 // pred_region
    _
  $region21: #{clip_image_encoder.1} parent=0 // pred_fallthru
    _
  // Predicated region
  $region22: #{clip_image_encoder.1} parent=0 // pred_check
    _
  $region23: #{clip_image_encoder.1} parent=0 // pred_check_branch
    %30 = sbr.rel (0) target = $region25
  $region24: #{clip_image_encoder.1} parent=0 // pred_region
    _
  $region25: #{clip_image_encoder.1} parent=0 // pred_fallthru
    _
  // Predicated region
  $region26: #{clip_image_encoder.1} parent=0 // pred_check
    _
  $region27: #{clip_image_encoder.1} parent=0 // pred_check_branch
    %32 = sbr.rel (0) target = $region29
  $region28: #{clip_image_encoder.1} parent=0 // pred_region
    _
  $region29: #{clip_image_encoder.1} parent=0 // pred_fallthru
    _
  // Predicated region
  $region30: #{clip_image_encoder.1} parent=0 // pred_check
    _
  $region31: #{clip_image_encoder.1} parent=0 // pred_check_branch
    %34 = sbr.rel (0) target = $region33
  $region32: #{clip_image_encoder.1} parent=0 // pred_region
    _
  $region33: #{clip_image_encoder.1} parent=0 // pred_fallthru
    _
  // Predicated region
  $region34: #{clip_image_encoder.1} parent=0 // pred_check
    _
  $region35: #{clip_image_encoder.1} parent=0 // pred_check_branch
    %36 = sbr.rel (0) target = $region37
  $region36: #{clip_image_encoder.1} parent=0 // pred_region
    _
  $region37: #{clip_image_encoder.1} parent=0 // pred_fallthru
    _
  // Predicated region
  $region38: #{clip_image_encoder.1} parent=0 // pred_check
    _
  $region39: #{clip_image_encoder.1} parent=0 // pred_check_branch
    %38 = sbr.rel (0) target = $region41
  $region40: #{clip_image_encoder.1} parent=0 // pred_region
    _
  $region41: #{clip_image_encoder.1} parent=0 // pred_fallthru
    _
  // Predicated region
  $region42: #{clip_image_encoder.1} parent=0 // pred_check
    _
  $region43: #{clip_image_encoder.1} parent=0 // pred_check_branch
    %40 = sbr.rel (0) target = $region45
  $region44: #{clip_image_encoder.1} parent=0 // pred_region
    _
  $region45: #{clip_image_encoder.1} parent=0 // pred_fallthru
    _
  // Predicated region
  $region46: #{clip_image_encoder.1} parent=0 // pred_check
    _
  $region47: #{clip_image_encoder.1} parent=0 // pred_check_branch
    %42 = sbr.rel (0) target = $region49
  $region48: #{clip_image_encoder.1} parent=0 // pred_region
    _
  $region49: #{clip_image_encoder.1} parent=0 // pred_fallthru
    _
  // Predicated region
  $region50: #{clip_image_encoder.1} parent=0 // pred_check
    _
  $region51: #{clip_image_encoder.1} parent=0 // pred_check_branch
    %44 = sbr.rel (0) target = $region53
  $region52: #{clip_image_encoder.1} parent=0 // pred_region
    _
  $region53: #{clip_image_encoder.1} parent=0 // pred_fallthru
    _
  // Predicated region
  $region54: #{clip_image_encoder.1} parent=0 // pred_check
    _
  $region55: #{clip_image_encoder.1} parent=0 // pred_check_branch
    %46 = sbr.rel (0) target = $region57
  $region56: #{clip_image_encoder.1} parent=0 // pred_region
    _
  $region57: #{clip_image_encoder.1} parent=0 // pred_fallthru
    _
  %v47 = vld [vmem:[%s0] sm:$0xff]
  %v48 = vld [vmem:[%s0 + $0x8] sm:$0xff]
  %v49 = vld [vmem:[%s0 + $0x10] sm:$0xff]
  %v50 = vld [vmem:[%s0 + $0x18] sm:$0xff]
  %v51 = vld [vmem:[%s0 + $0x20] sm:$0xff]
  %v52 = vld [vmem:[%s0 + $0x28] sm:$0xff]
  %v53 = vld [vmem:[%s1] sm:$0xff]
  %v54 = vld [vmem:[%s1 + $0x8] sm:$0xff]
  %v55 = vld [vmem:[%s1 + $0x10] sm:$0xff]
  %v56 = vld [vmem:[%s1 + $0x18] sm:$0xff]
  %v57 = vld [vmem:[%s1 + $0x20] sm:$0xff]
  %v58 = vld [vmem:[%s1 + $0x28] sm:$0xff]
  %v59 = vld [vmem:[%s2] sm:$0xff]
  %v60 = vld [vmem:[%s2 + $0x8] sm:$0xff]
  %v61 = vld [vmem:[%s2 + $0x10] sm:$0xff]
  %v62 = vld [vmem:[%s2 + $0x18] sm:$0xff]
  %v63 = vld [vmem:[%s2 + $0x20] sm:$0xff]
  %v64 = vld [vmem:[%s2 + $0x28] sm:$0xff]
  %vm65 = vcmask 392192
  %v67 = vsel %vm65, %v47, 0
  %v70 = vsel %vm65, %v48, 0
  %v73 = vsel %vm65, %v49, 0
  %v76 = vsel %vm65, %v50, 0
  %v79 = vsel %vm65, %v51, 0
  %v82 = vsel %vm65, %v52, 0
  %84 = vmatprep.subr.mxu0 0.0
  %85 = vmatpush1.msra.mxu0 %v53
  %86 = vmatprep.subr.mxu0 0.0
  %87 = vmatpush1.msra.mxu0 %v54
  %88 = vmatprep.subr.mxu0 0.0
  %89 = vmatpush1.msra.mxu0 %v55
  %90 = vmatprep.subr.mxu0 0.0
  %91 = vmatpush1.msra.mxu0 %v56
  %92 = vmatprep.subr.mxu0 0.0
  %93 = vmatpush1.msra.mxu0 %v57
  %94 = vmatprep.subr.mxu0 0.0
  %95 = vmatpush1.msra.mxu0 %v58
  %96 = vmatprep.subr.mxu0 0.0
  %97 = vmatpush1.msra.mxu0 0.0
  %98 = vmatprep.subr.mxu0 0.0
  %99 = vmatpush1.msra.mxu0 0.0
  %100 = vmatprep.subr.mxu0 0.0
  %101 = vmatpush1.msra.mxu0 0.0
  %102 = vmatprep.subr.mxu0 0.0
  %103 = vmatpush1.msra.mxu0 0.0
  %104 = vmatprep.subr.mxu0 0.0
  %105 = vmatpush1.msra.mxu0 0.0
  %106 = vmatprep.subr.mxu0 0.0
  %107 = vmatpush1.msra.mxu0 0.0
  %108 = vmatprep.subr.mxu0 0.0
  %109 = vmatpush1.msra.mxu0 0.0
  %110 = vmatprep.subr.mxu0 0.0
  %111 = vmatpush1.msra.mxu0 0.0
  %112 = vmatprep.subr.mxu0 0.0
  %113 = vmatpush1.msra.mxu0 0.0
  %114 = vmatprep.subr.mxu0 0.0
  %115 = vmatpush1.msra.mxu0 0.0
  %116 = vmatprep.subr.mxu0 0.0
  %117 = vmatpush1.msra.mxu0 0.0
  %118 = vmatprep.subr.mxu0 0.0
  %119 = vmatpush1.msra.mxu0 0.0
  %120 = vmatprep.subr.mxu0 0.0
  %121 = vmatpush1.msra.mxu0 0.0
  %122 = vmatprep.subr.mxu0 0.0
  %123 = vmatpush1.msra.mxu0 0.0
  %124 = vmatprep.subr.mxu0 0.0
  %125 = vmatpush1.msra.mxu0 0.0
  %126 = vmatprep.subr.mxu0 0.0
  %127 = vmatpush1.msra.mxu0 0.0
  %128 = vmatprep.subr.mxu0 0.0
  %129 = vmatpush1.msra.mxu0 0.0
  %130 = vmatprep.subr.mxu0 0.0
  %131 = vmatpush1.msra.mxu0 0.0
  %132 = vmatprep.subr.mxu0 0.0
  %133 = vmatpush1.msra.mxu0 0.0
  %134 = vmatprep.subr.mxu0 0.0
  %135 = vmatpush1.msra.mxu0 0.0
  %136 = vmatprep.subr.mxu0 0.0
  %137 = vmatpush1.msra.mxu0 0.0
  %138 = vmatprep.subr.mxu0 0.0
  %139 = vmatpush1.msra.mxu0 0.0
  %140 = vmatprep.subr.mxu0 0.0
  %141 = vmatpush1.msra.mxu0 0.0
  %142 = vmatprep.subr.mxu0 0.0
  %143 = vmatpush1.msra.mxu0 0.0
  %144 = vmatprep.subr.mxu0 0.0
  %145 = vmatpush1.msra.mxu0 0.0
  %146 = vmatprep.subr.mxu0 0.0
  %147 = vmatpush1.msra.mxu0 0.0
  %148 = vmatprep.mubr.f32.mxu0 0.0
  %149 = vmatmul.mubr.f32.gmra.mrb[0].mxu0 %v67
  %v150 = vpop.f32.mrb[0].mxu0
  %v151 = vadd.f32 %v59, %v150
  %v152 = vpop.f32.mrb[0].mxu0
  %153 = vmatprep.mubr.f32.mxu0 0.0
  %154 = vmatmul.mubr.f32.gmra.mrb[0].mxu0 %v70
  %v155 = vpop.f32.mrb[0].mxu0
  %v156 = vadd.f32 %v60, %v155
  %v157 = vpop.f32.mrb[0].mxu0
  %158 = vmatprep.mubr.f32.mxu0 0.0
  %159 = vmatmul.mubr.f32.gmra.mrb[0].mxu0 %v73
  %v160 = vpop.f32.mrb[0].mxu0
  %v161 = vadd.f32 %v61, %v160
  %v162 = vpop.f32.mrb[0].mxu0
  %163 = vmatprep.mubr.f32.mxu0 0.0
  %164 = vmatmul.mubr.f32.gmra.mrb[0].mxu0 %v76
  %v165 = vpop.f32.mrb[0].mxu0
  %v166 = vadd.f32 %v62, %v165
  %v167 = vpop.f32.mrb[0].mxu0
  %168 = vmatprep.mubr.f32.mxu0 0.0
  %169 = vmatmul.mubr.f32.gmra.mrb[0].mxu0 %v79
  %v170 = vpop.f32.mrb[0].mxu0
  %v171 = vadd.f32 %v63, %v170
  %v172 = vpop.f32.mrb[0].mxu0
  %173 = vmatprep.mubr.f32.mxu0 0.0
  %174 = vmatmul.mubr.f32.gmra.mrb[0].mxu0 %v82
  %v175 = vpop.f32.mrb[0].mxu0
  %v176 = vadd.f32 %v64, %v175
  %v177 = vpop.f32.mrb[0].mxu0
  %178 = vdwg.mxu0
  %v179 = vld [vmem:[%s4] sm:$0x3]
  %vm180 = vcmask 261120
  %v181 = vsel %vm180, %v151, 0.0
  %182 = vadd.xlane.f32.xlu0 %v181
  %v183 = vpop.xlane.xlu0 %182
  %v184 = vsel %vm180, %v156, 0.0
  %185 = vadd.xlane.f32.xlu0 %v184
  %v186 = vpop.xlane.xlu0 %185
  %v187 = vsel %vm180, %v161, 0.0
  %188 = vadd.xlane.f32.xlu0 %v187
  %v189 = vpop.xlane.xlu0 %188
  %v190 = vsel %vm180, %v166, 0.0
  %191 = vadd.xlane.f32.xlu0 %v190
  %v192 = vpop.xlane.xlu0 %191
  %v193 = vsel %vm180, %v171, 0.0
  %194 = vadd.xlane.f32.xlu0 %v193
  %v195 = vpop.xlane.xlu0 %194
  %v196 = vsel %vm180, %v176, 0.0
  %197 = vadd.xlane.f32.xlu0 %v196
  %v198 = vpop.xlane.xlu0 %197
  %v199 = vrcp.pop 32.0
  %v200 = vmul.f32 %v183, %v199
  %v201 = vmul.f32 %v186, %v199
  %v202 = vmul.f32 %v189, %v199
  %v203 = vmul.f32 %v192, %v199
  %v204 = vmul.f32 %v195, %v199
  %v205 = vmul.f32 %v198, %v199
  %v206 = vsub.f32 %v151, %v200
  %v207 = vsub.f32 %v156, %v201
  %v208 = vsub.f32 %v161, %v202
  %v209 = vsub.f32 %v166, %v203
  %v210 = vsub.f32 %v171, %v204
  %v211 = vsub.f32 %v176, %v205
  %v212 = vmul.f32 %v206, %v206
  %v213 = vmul.f32 %v207, %v207
  %v214 = vmul.f32 %v208, %v208
  %v215 = vmul.f32 %v209, %v209
  %v216 = vmul.f32 %v210, %v210
  %v217 = vmul.f32 %v211, %v211
  %v218 = vsel %vm180, %v212, 0.0
  %219 = vadd.xlane.f32.xlu0 %v218
  %v220 = vpop.xlane.xlu0 %219
  %v221 = vsel %vm180, %v213, 0.0
  %222 = vadd.xlane.f32.xlu0 %v221
  %v223 = vpop.xlane.xlu0 %222
  %v224 = vsel %vm180, %v214, 0.0
  %225 = vadd.xlane.f32.xlu0 %v224
  %v226 = vpop.xlane.xlu0 %225
  %v227 = vsel %vm180, %v215, 0.0
  %228 = vadd.xlane.f32.xlu0 %v227
  %v229 = vpop.xlane.xlu0 %228
  %v230 = vsel %vm180, %v216, 0.0
  %231 = vadd.xlane.f32.xlu0 %v230
  %v232 = vpop.xlane.xlu0 %231
  %v233 = vsel %vm180, %v217, 0.0
  %234 = vadd.xlane.f32.xlu0 %v233
  %v235 = vpop.xlane.xlu0 %234
  %v236 = vmul.f32 %v220, %v199
  %v237 = vmul.f32 %v223, %v199
  %v238 = vmul.f32 %v226, %v199
  %v239 = vmul.f32 %v229, %v199
  %v240 = vmul.f32 %v232, %v199
  %v241 = vmul.f32 %v235, %v199
  %v242 = vadd.f32 %v236, 1e-05
  %v243 = vadd.f32 %v237, 1e-05
  %v244 = vadd.f32 %v238, 1e-05
  %v245 = vadd.f32 %v239, 1e-05
  %v246 = vadd.f32 %v240, 1e-05
  %v247 = vadd.f32 %v241, 1e-05
  %v248 = vrsqrt.pop %v242
  %v249 = vrsqrt.pop %v243
  %v250 = vrsqrt.pop %v244
  %v251 = vrsqrt.pop %v245
  %v252 = vrsqrt.pop %v246
  %v253 = vrsqrt.pop %v247
  %v254 = vmul.f32 %v206, %v248
  %v255 = vmul.f32 %v207, %v249
  %v256 = vmul.f32 %v208, %v250
  %v257 = vmul.f32 %v209, %v251
  %v258 = vmul.f32 %v210, %v252
  %v259 = vmul.f32 %v211, %v253
  %v260 = vlaneseq
  %v261 = vshrl.u32 %v260, 7
  %v262 = vsub.s32 0, %v261
  %v263 = vrot.slane %v179, %v262
  %v264 = vmul.f32 %v254, %v263
  %v265 = vmul.f32 %v255, %v263
  %v266 = vmul.f32 %v256, %v263
  %v267 = vmul.f32 %v257, %v263
  %v268 = vmul.f32 %v258, %v263
  %v269 = vmul.f32 %v259, %v263
  %v270 = vlaneseq
  %v271 = vshrl.u32 %v270, 7
  %v272 = vsub.s32 1, %v271
  %v273 = vrot.slane %v179, %v272
  %v274 = vadd.f32 %v264, %v273
  %v275 = vadd.f32 %v265, %v273
  %v276 = vadd.f32 %v266, %v273
  %v277 = vadd.f32 %v267, %v273
  %v278 = vadd.f32 %v268, %v273
  %v279 = vadd.f32 %v269, %v273
  %v280 = vld [vmem:[%s3] sm:$0xff]
  %v281 = vld [vmem:[%s3 + $0x8] sm:$0xff]
  %v282 = vld [vmem:[%s3 + $0x10] sm:$0xff]
  %v283 = vld [vmem:[%s3 + $0x18] sm:$0xff]
  %v284 = vld [vmem:[%s3 + $0x20] sm:$0xff]
  %v285 = vld [vmem:[%s3 + $0x28] sm:$0xff]
  %v286 = vld [vmem:[%s5] sm:$0x3f]
  %v287 = vsel %vm180, %v274, 0.0
  %288 = vadd.xlane.f32.xlu0 %v287
  %v289 = vpop.xlane.xlu0 %288
  %v290 = vsel %vm180, %v275, 0.0
  %291 = vadd.xlane.f32.xlu0 %v290
  %v292 = vpop.xlane.xlu0 %291
  %v293 = vsel %vm180, %v276, 0.0
  %294 = vadd.xlane.f32.xlu0 %v293
  %v295 = vpop.xlane.xlu0 %294
  %v296 = vsel %vm180, %v277, 0.0
  %297 = vadd.xlane.f32.xlu0 %v296
  %v298 = vpop.xlane.xlu0 %297
  %v299 = vsel %vm180, %v278, 0.0
  %300 = vadd.xlane.f32.xlu0 %v299
  %v301 = vpop.xlane.xlu0 %300
  %v302 = vsel %vm180, %v279, 0.0
  %303 = vadd.xlane.f32.xlu0 %v302
  %v304 = vpop.xlane.xlu0 %303
  %v305 = vmul.f32 %v289, %v199
  %v306 = vmul.f32 %v292, %v199
  %v307 = vmul.f32 %v295, %v199
  %v308 = vmul.f32 %v298, %v199
  %v309 = vmul.f32 %v301, %v199
  %v310 = vmul.f32 %v304, %v199
  %v311 = vsub.f32 %v274, %v305
  %v312 = vsub.f32 %v275, %v306
  %v313 = vsub.f32 %v276, %v307
  %v314 = vsub.f32 %v277, %v308
  %v315 = vsub.f32 %v278, %v309
  %v316 = vsub.f32 %v279, %v310
  %v317 = vmul.f32 %v311, %v311
  %v318 = vmul.f32 %v312, %v312
  %v319 = vmul.f32 %v313, %v313
  %v320 = vmul.f32 %v314, %v314
  %v321 = vmul.f32 %v315, %v315
  %v322 = vmul.f32 %v316, %v316
  %v323 = vsel %vm180, %v317, 0.0
  %324 = vadd.xlane.f32.xlu0 %v323
  %v325 = vpop.xlane.xlu0 %324
  %v326 = vsel %vm180, %v318, 0.0
  %327 = vadd.xlane.f32.xlu0 %v326
  %v328 = vpop.xlane.xlu0 %327
  %v329 = vsel %vm180, %v319, 0.0
  %330 = vadd.xlane.f32.xlu0 %v329
  %v331 = vpop.xlane.xlu0 %330
  %v332 = vsel %vm180, %v320, 0.0
  %333 = vadd.xlane.f32.xlu0 %v332
  %v334 = vpop.xlane.xlu0 %333
  %v335 = vsel %vm180, %v321, 0.0
  %336 = vadd.xlane.f32.xlu0 %v335
  %v337 = vpop.xlane.xlu0 %336
  %v338 = vsel %vm180, %v322, 0.0
  %339 = vadd.xlane.f32.xlu0 %v338
  %v340 = vpop.xlane.xlu0 %339
  %v341 = vmul.f32 %v325, %v199
  %v342 = vmul.f32 %v328, %v199
  %v343 = vmul.f32 %v331, %v199
  %v344 = vmul.f32 %v334, %v199
  %v345 = vmul.f32 %v337, %v199
  %v346 = vmul.f32 %v340, %v199
  %v347 = vadd.f32 %v341, 1e-05
  %v348 = vadd.f32 %v342, 1e-05
  %v349 = vadd.f32 %v343, 1e-05
  %v350 = vadd.f32 %v344, 1e-05
  %v351 = vadd.f32 %v345, 1e-05
  %v352 = vadd.f32 %v346, 1e-05
  %v353 = vrsqrt.pop %v347
  %v354 = vrsqrt.pop %v348
  %v355 = vrsqrt.pop %v349
  %v356 = vrsqrt.pop %v350
  %v357 = vrsqrt.pop %v351
  %v358 = vrsqrt.pop %v352
  %v359 = vmul.f32 %v311, %v353
  %v360 = vmul.f32 %v312, %v354
  %v361 = vmul.f32 %v313, %v355
  %v362 = vmul.f32 %v314, %v356
  %v363 = vmul.f32 %v315, %v357
  %v364 = vmul.f32 %v316, %v358
  %v365 = vlaneseq
  %v366 = vshrl.u32 %v365, 7
  %v367 = vsub.s32 0, %v366
  %v368 = vrot.slane %v286, %v367
  %v369 = vmul.f32 %v359, %v368
  %v370 = vmul.f32 %v360, %v368
  %v371 = vmul.f32 %v361, %v368
  %v372 = vmul.f32 %v362, %v368
  %v373 = vmul.f32 %v363, %v368
  %v374 = vmul.f32 %v364, %v368
  %v375 = vlaneseq
  %v376 = vshrl.u32 %v375, 7
  %v377 = vsub.s32 1, %v376
  %v378 = vrot.slane %v286, %v377
  %v379 = vadd.f32 %v369, %v378
  %v380 = vadd.f32 %v370, %v378
  %v381 = vadd.f32 %v371, %v378
  %v382 = vadd.f32 %v372, %v378
  %v383 = vadd.f32 %v373, %v378
  %v384 = vadd.f32 %v374, %v378
  %v385 = vld [vmem:[%s6] sm:$0xff]
  %v386 = vld [vmem:[%s6 + $0x8] sm:$0xff]
  %v387 = vld [vmem:[%s6 + $0x10] sm:$0xff]
  %v388 = vld [vmem:[%s6 + $0x18] sm:$0xff]
  %v389 = vld [vmem:[%s7] sm:$0x1]
  %v391 = vlaneseq
  %v392 = vshrl.u32 %v391, 7
  %v393 = vsub.s32 0, %v392
  %v394 = vrot.slane %v389, %v393
  %v397 = vsel %vm180, %v379, 0
  %v400 = vsel %vm180, %v380, 0
  %v403 = vsel %vm180, %v381, 0
  %v406 = vsel %vm180, %v382, 0
  %v409 = vsel %vm180, %v383, 0
  %v412 = vsel %vm180, %v384, 0
  %414 = vmatprep.subr.mxu0 0.0
  %415 = vmatpush1.msra.mxu0 %v385
  %416 = vmatprep.subr.mxu0 0.0
  %417 = vmatpush1.msra.mxu0 %v386
  %418 = vmatprep.subr.mxu0 0.0
  %419 = vmatpush1.msra.mxu0 %v387
  %420 = vmatprep.subr.mxu0 0.0
  %421 = vmatpush1.msra.mxu0 %v388
  %422 = vmatprep.subr.mxu0 0.0
  %423 = vmatpush1.msra.mxu0 0.0
  %424 = vmatprep.subr.mxu0 0.0
  %425 = vmatpush1.msra.mxu0 0.0
  %426 = vmatprep.subr.mxu0 0.0
  %427 = vmatpush1.msra.mxu0 0.0
  %428 = vmatprep.subr.mxu0 0.0
  %429 = vmatpush1.msra.mxu0 0.0
  %430 = vmatprep.subr.mxu0 0.0
  %431 = vmatpush1.msra.mxu0 0.0
  %432 = vmatprep.subr.mxu0 0.0
  %433 = vmatpush1.msra.mxu0 0.0
  %434 = vmatprep.subr.mxu0 0.0
  %435 = vmatpush1.msra.mxu0 0.0
  %436 = vmatprep.subr.mxu0 0.0
  %437 = vmatpush1.msra.mxu0 0.0
  %438 = vmatprep.subr.mxu0 0.0
  %439 = vmatpush1.msra.mxu0 0.0
  %440 = vmatprep.subr.mxu0 0.0
  %441 = vmatpush1.msra.mxu0 0.0
  %442 = vmatprep.subr.mxu0 0.0
  %443 = vmatpush1.msra.mxu0 0.0
  %444 = vmatprep.subr.mxu0 0.0
  %445 = vmatpush1.msra.mxu0 0.0
  %446 = vmatprep.subr.mxu0 0.0
  %447 = vmatpush1.msra.mxu0 0.0
  %448 = vmatprep.subr.mxu0 0.0
  %449 = vmatpush1.msra.mxu0 0.0
  %450 = vmatprep.subr.mxu0 0.0
  %451 = vmatpush1.msra.mxu0 0.0
  %452 = vmatprep.subr.mxu0 0.0
  %453 = vmatpush1.msra.mxu0 0.0
  %454 = vmatprep.subr.mxu0 0.0
  %455 = vmatpush1.msra.mxu0 0.0
  %456 = vmatprep.subr.mxu0 0.0
  %457 = vmatpush1.msra.mxu0 0.0
  %458 = vmatprep.subr.mxu0 0.0
  %459 = vmatpush1.msra.mxu0 0.0
  %460 = vmatprep.subr.mxu0 0.0
  %461 = vmatpush1.msra.mxu0 0.0
  %462 = vmatprep.subr.mxu0 0.0
  %463 = vmatpush1.msra.mxu0 0.0
  %464 = vmatprep.subr.mxu0 0.0
  %465 = vmatpush1.msra.mxu0 0.0
  %466 = vmatprep.subr.mxu0 0.0
  %467 = vmatpush1.msra.mxu0 0.0
  %468 = vmatprep.subr.mxu0 0.0
  %469 = vmatpush1.msra.mxu0 0.0
  %470 = vmatprep.subr.mxu0 0.0
  %471 = vmatpush1.msra.mxu0 0.0
  %472 = vmatprep.subr.mxu0 0.0
  %473 = vmatpush1.msra.mxu0 0.0
  %474 = vmatprep.subr.mxu0 0.0
  %475 = vmatpush1.msra.mxu0 0.0
  %476 = vmatprep.subr.mxu0 0.0
  %477 = vmatpush1.msra.mxu0 0.0
  %478 = vmatprep.mubr.f32.mxu0 0.0
  %479 = vmatmul.mubr.f32.gmra.mrb[0].mxu0 %v397
  %v480 = vpop.f32.mrb[0].mxu0
  %v481 = vadd.f32 %v394, %v480
  %v482 = vpop.f32.mrb[0].mxu0
  %483 = vmatprep.mubr.f32.mxu0 0.0
  %484 = vmatmul.mubr.f32.gmra.mrb[0].mxu0 %v400
  %v485 = vpop.f32.mrb[0].mxu0
  %v486 = vadd.f32 %v394, %v485
  %v487 = vpop.f32.mrb[0].mxu0
  %488 = vmatprep.mubr.f32.mxu0 0.0
  %489 = vmatmul.mubr.f32.gmra.mrb[0].mxu0 %v403
  %v490 = vpop.f32.mrb[0].mxu0
  %v491 = vadd.f32 %v394, %v490
  %v492 = vpop.f32.mrb[0].mxu0
  %493 = vmatprep.mubr.f32.mxu0 0.0
  %494 = vmatmul.mubr.f32.gmra.mrb[0].mxu0 %v406
  %v495 = vpop.f32.mrb[0].mxu0
  %v496 = vadd.f32 %v394, %v495
  %v497 = vpop.f32.mrb[0].mxu0
  %498 = vmatprep.mubr.f32.mxu0 0.0
  %499 = vmatmul.mubr.f32.gmra.mrb[0].mxu0 %v409
  %v500 = vpop.f32.mrb[0].mxu0
  %v501 = vadd.f32 %v394, %v500
  %v502 = vpop.f32.mrb[0].mxu0
  %503 = vmatprep.mubr.f32.mxu0 0.0
  %504 = vmatmul.mubr.f32.gmra.mrb[0].mxu0 %v412
  %v505 = vpop.f32.mrb[0].mxu0
  %v506 = vadd.f32 %v394, %v505
  %v507 = vpop.f32.mrb[0].mxu0
  %508 = vdwg.mxu0
  %v509 = vld [vmem:[%s8] sm:$0xff]
  %v510 = vld [vmem:[%s8 + $0x8] sm:$0xff]
  %v511 = vld [vmem:[%s8 + $0x10] sm:$0xff]
  %v512 = vld [vmem:[%s8 + $0x18] sm:$0xff]
  %v513 = vmul.f32 %v481, 0.35355338
  %v514 = vmul.f32 %v486, 0.35355338
  %v515 = vmul.f32 %v491, 0.35355338
  %v516 = vmul.f32 %v496, 0.35355338
  %v517 = vmul.f32 %v501, 0.35355338
  %v518 = vmul.f32 %v506, 0.35355338
  %525 = vrot.lane.b32.xlu0 %v481, 96
  %v526 = vpop.permute.xlu0 %525
  %527 = vrot.lane.b32.xlu0 %v486, 96
  %v528 = vpop.permute.xlu0 %527
  %529 = vrot.lane.b32.xlu0 %v491, 96
  %v530 = vpop.permute.xlu0 %529
  %531 = vrot.lane.b32.xlu0 %v496, 96
  %v532 = vpop.permute.xlu0 %531
  %533 = vrot.lane.b32.xlu0 %v501, 96
  %v534 = vpop.permute.xlu0 %533
  %535 = vrot.lane.b32.xlu0 %v506, 96
  %v536 = vpop.permute.xlu0 %535
  %vm537 = vcmask 64512
  %v539 = vsel %vm537, %v513, 0
  %v542 = vsel %vm537, %v514, 0
  %v545 = vsel %vm537, %v515, 0
  %v548 = vsel %vm537, %v516, 0
  %v551 = vsel %vm537, %v517, 0
  %v554 = vsel %vm537, %v518, 0
  %v556 = vsel %vm537, %v526, 0
  %v558 = vsel %vm537, %v528, 0
  %v560 = vsel %vm537, %v530, 0
  %v562 = vsel %vm537, %v532, 0
  %v564 = vsel %vm537, %v534, 0
  %v566 = vsel %vm537, %v536, 0
  %568 = vmatprep.subr.mxu0 0.0
  %569 = vmatpush1.xpose.msra.mxu0 %v556
  %570 = vmatprep.subr.mxu0 0.0
  %571 = vmatpush1.xpose.msra.mxu0 %v558
  %572 = vmatprep.subr.mxu0 0.0
  %573 = vmatpush1.xpose.msra.mxu0 %v560
  %574 = vmatprep.subr.mxu0 0.0
  %575 = vmatpush1.xpose.msra.mxu0 %v562
  %576 = vmatprep.subr.mxu0 0.0
  %577 = vmatpush1.xpose.msra.mxu0 %v564
  %578 = vmatprep.subr.mxu0 0.0
  %579 = vmatpush1.xpose.msra.mxu0 %v566
  %580 = vmatprep.subr.mxu0 0.0
  %581 = vmatpush1.xpose.msra.mxu0 0.0
  %582 = vmatprep.subr.mxu0 0.0
  %583 = vmatpush1.xpose.msra.mxu0 0.0
  %584 = vmatprep.subr.mxu0 0.0
  %585 = vmatpush1.xpose.msra.mxu0 0.0
  %586 = vmatprep.subr.mxu0 0.0
  %587 = vmatpush1.xpose.msra.mxu0 0.0
  %588 = vmatprep.subr.mxu0 0.0
  %589 = vmatpush1.xpose.msra.mxu0 0.0
  %590 = vmatprep.subr.mxu0 0.0
  %591 = vmatpush1.xpose.msra.mxu0 0.0
  %592 = vmatprep.subr.mxu0 0.0
  %593 = vmatpush1.xpose.msra.mxu0 0.0
  %594 = vmatprep.subr.mxu0 0.0
  %595 = vmatpush1.xpose.msra.mxu0 0.0
  %596 = vmatprep.subr.mxu0 0.0
  %597 = vmatpush1.xpose.msra.mxu0 0.0
  %598 = vmatprep.subr.mxu0 0.0
  %599 = vmatpush1.xpose.msra.mxu0 0.0
  %600 = vmatprep.subr.mxu0 0.0
  %601 = vmatpush1.xpose.msra.mxu0 0.0
  %602 = vmatprep.subr.mxu0 0.0
  %603 = vmatpush1.xpose.msra.mxu0 0.0
  %604 = vmatprep.subr.mxu0 0.0
  %605 = vmatpush1.xpose.msra.mxu0 0.0
  %606 = vmatprep.subr.mxu0 0.0
  %607 = vmatpush1.xpose.msra.mxu0 0.0
  %608 = vmatprep.subr.mxu0 0.0
  %609 = vmatpush1.xpose.msra.mxu0 0.0
  %610 = vmatprep.subr.mxu0 0.0
  %611 = vmatpush1.xpose.msra.mxu0 0.0
  %612 = vmatprep.subr.mxu0 0.0
  %613 = vmatpush1.xpose.msra.mxu0 0.0
  %614 = vmatprep.subr.mxu0 0.0
  %615 = vmatpush1.xpose.msra.mxu0 0.0
  %616 = vmatprep.subr.mxu0 0.0
  %617 = vmatpush1.xpose.msra.mxu0 0.0
  %618 = vmatprep.subr.mxu0 0.0
  %619 = vmatpush1.xpose.msra.mxu0 0.0
  %620 = vmatprep.subr.mxu0 0.0
  %621 = vmatpush1.xpose.msra.mxu0 0.0
  %622 = vmatprep.subr.mxu0 0.0
  %623 = vmatpush1.xpose.msra.mxu0 0.0
  %624 = vmatprep.subr.mxu0 0.0
  %625 = vmatpush1.xpose.msra.mxu0 0.0
  %626 = vmatprep.subr.mxu0 0.0
  %627 = vmatpush1.xpose.msra.mxu0 0.0
  %628 = vmatprep.subr.mxu0 0.0
  %629 = vmatpush1.xpose.msra.mxu0 0.0
  %630 = vmatprep.subr.mxu0 0.0
  %631 = vmatpush1.xpose.msra.mxu0 0.0
  %632 = vmatprep.mubr.f32.mxu0 0.0
  %633 = vmatmul.mubr.f32.gmra.mrb[0].mxu0 %v539
  %v634 = vpop.f32.mrb[0].mxu0
  %v635 = vadd.f32 %v280, %v634
  %v636 = vpop.f32.mrb[0].mxu0
  %637 = vmatprep.mubr.f32.mxu0 0.0
  %638 = vmatmul.mubr.f32.gmra.mrb[0].mxu0 %v542
  %v639 = vpop.f32.mrb[0].mxu0
  %v640 = vadd.f32 %v281, %v639
  %v641 = vpop.f32.mrb[0].mxu0
  %642 = vmatprep.mubr.f32.mxu0 0.0
  %643 = vmatmul.mubr.f32.gmra.mrb[0].mxu0 %v545
  %v644 = vpop.f32.mrb[0].mxu0
  %v645 = vadd.f32 %v282, %v644
  %v646 = vpop.f32.mrb[0].mxu0
  %647 = vmatprep.mubr.f32.mxu0 0.0
  %648 = vmatmul.mubr.f32.gmra.mrb[0].mxu0 %v548
  %v649 = vpop.f32.mrb[0].mxu0
  %v650 = vadd.f32 %v283, %v649
  %v651 = vpop.f32.mrb[0].mxu0
  %652 = vmatprep.mubr.f32.mxu0 0.0
  %653 = vmatmul.mubr.f32.gmra.mrb[0].mxu0 %v551
  %v654 = vpop.f32.mrb[0].mxu0
  %v655 = vadd.f32 %v284, %v654
  %v656 = vpop.f32.mrb[0].mxu0
  %657 = vmatprep.mubr.f32.mxu0 0.0
  %658 = vmatmul.mubr.f32.gmra.mrb[0].mxu0 %v554
  %v659 = vpop.f32.mrb[0].mxu0
  %v660 = vadd.f32 %v285, %v659
  %v661 = vpop.f32.mrb[0].mxu0
  %662 = vdwg.mxu0
  %v663 = vsel %vm65, %v635, -inf
  %664 = vmax.xlane.f32.xlu0 %v663
  %v665 = vpop.xlane.xlu0 %664
  %v666 = vsel %vm65, %v640, -inf
  %667 = vmax.xlane.f32.xlu0 %v666
  %v668 = vpop.xlane.xlu0 %667
  %v669 = vsel %vm65, %v645, -inf
  %670 = vmax.xlane.f32.xlu0 %v669
  %v671 = vpop.xlane.xlu0 %670
  %v672 = vsel %vm65, %v650, -inf
  %673 = vmax.xlane.f32.xlu0 %v672
  %v674 = vpop.xlane.xlu0 %673
  %v675 = vsel %vm65, %v655, -inf
  %676 = vmax.xlane.f32.xlu0 %v675
  %v677 = vpop.xlane.xlu0 %676
  %v678 = vsel %vm65, %v660, -inf
  %679 = vmax.xlane.f32.xlu0 %v678
  %v680 = vpop.xlane.xlu0 %679
  %v681 = vsub.f32 %v635, %v665
  %v682 = vsub.f32 %v640, %v668
  %v683 = vsub.f32 %v645, %v671
  %v684 = vsub.f32 %v650, %v674
  %v685 = vsub.f32 %v655, %v677
  %v686 = vsub.f32 %v660, %v680
  %v687 = vmul.f32 %v681, 1.442695
  %v688 = vpow.pop %v687
  %v689 = vmul.f32 %v682, 1.442695
  %v690 = vpow.pop %v689
  %v691 = vmul.f32 %v683, 1.442695
  %v692 = vpow.pop %v691
  %v693 = vmul.f32 %v684, 1.442695
  %v694 = vpow.pop %v693
  %v695 = vmul.f32 %v685, 1.442695
  %v696 = vpow.pop %v695
  %v697 = vmul.f32 %v686, 1.442695
  %v698 = vpow.pop %v697
  %v699 = vsel %vm65, %v688, 0.0
  %700 = vadd.xlane.f32.xlu0 %v699
  %v701 = vpop.xlane.xlu0 %700
  %v702 = vsel %vm65, %v690, 0.0
  %703 = vadd.xlane.f32.xlu0 %v702
  %v704 = vpop.xlane.xlu0 %703
  %v705 = vsel %vm65, %v692, 0.0
  %706 = vadd.xlane.f32.xlu0 %v705
  %v707 = vpop.xlane.xlu0 %706
  %v708 = vsel %vm65, %v694, 0.0
  %709 = vadd.xlane.f32.xlu0 %v708
  %v710 = vpop.xlane.xlu0 %709
  %v711 = vsel %vm65, %v696, 0.0
  %712 = vadd.xlane.f32.xlu0 %v711
  %v713 = vpop.xlane.xlu0 %712
  %v714 = vsel %vm65, %v698, 0.0
  %715 = vadd.xlane.f32.xlu0 %v714
  %v716 = vpop.xlane.xlu0 %715
  %v717 = vrcp.pop %v701
  %v718 = vrcp.pop %v704
  %v719 = vrcp.pop %v707
  %v720 = vrcp.pop %v710
  %v721 = vrcp.pop %v713
  %v722 = vrcp.pop %v716
  %v723 = vmul.f32 %v688, %v717
  %v724 = vmul.f32 %v690, %v718
  %v725 = vmul.f32 %v692, %v719
  %v726 = vmul.f32 %v694, %v720
  %v727 = vmul.f32 %v696, %v721
  %v728 = vmul.f32 %v698, %v722
  %729 = vrot.lane.b32.xlu0 %v481, 64
  %v730 = vpop.permute.xlu0 %729
  %731 = vrot.lane.b32.xlu0 %v486, 64
  %v732 = vpop.permute.xlu0 %731
  %733 = vrot.lane.b32.xlu0 %v491, 64
  %v734 = vpop.permute.xlu0 %733
  %735 = vrot.lane.b32.xlu0 %v496, 64
  %v736 = vpop.permute.xlu0 %735
  %737 = vrot.lane.b32.xlu0 %v501, 64
  %v738 = vpop.permute.xlu0 %737
  %739 = vrot.lane.b32.xlu0 %v506, 64
  %v740 = vpop.permute.xlu0 %739
  %v748 = vsel %vm65, %v723, 0
  %v751 = vsel %vm65, %v724, 0
  %v754 = vsel %vm65, %v725, 0
  %v757 = vsel %vm65, %v726, 0
  %v760 = vsel %vm65, %v727, 0
  %v763 = vsel %vm65, %v728, 0
  %765 = vmatprep.subr.mxu0 0.0
  %766 = vmatpush1.msra.mxu0 %v730
  %767 = vmatprep.subr.mxu0 0.0
  %768 = vmatpush1.msra.mxu0 %v732
  %769 = vmatprep.subr.mxu0 0.0
  %770 = vmatpush1.msra.mxu0 %v734
  %771 = vmatprep.subr.mxu0 0.0
  %772 = vmatpush1.msra.mxu0 %v736
  %773 = vmatprep.subr.mxu0 0.0
  %774 = vmatpush1.msra.mxu0 %v738
  %775 = vmatprep.subr.mxu0 0.0
  %776 = vmatpush1.msra.mxu0 %v740
  %777 = vmatprep.subr.mxu0 0.0
  %778 = vmatpush1.msra.mxu0 0.0
  %779 = vmatprep.subr.mxu0 0.0
  %780 = vmatpush1.msra.mxu0 0.0
  %781 = vmatprep.subr.mxu0 0.0
  %782 = vmatpush1.msra.mxu0 0.0
  %783 = vmatprep.subr.mxu0 0.0
  %784 = vmatpush1.msra.mxu0 0.0
  %785 = vmatprep.subr.mxu0 0.0
  %786 = vmatpush1.msra.mxu0 0.0
  %787 = vmatprep.subr.mxu0 0.0
  %788 = vmatpush1.msra.mxu0 0.0
  %789 = vmatprep.subr.mxu0 0.0
  %790 = vmatpush1.msra.mxu0 0.0
  %791 = vmatprep.subr.mxu0 0.0
  %792 = vmatpush1.msra.mxu0 0.0
  %793 = vmatprep.subr.mxu0 0.0
  %794 = vmatpush1.msra.mxu0 0.0
  %795 = vmatprep.subr.mxu0 0.0
  %796 = vmatpush1.msra.mxu0 0.0
  %797 = vmatprep.subr.mxu0 0.0
  %798 = vmatpush1.msra.mxu0 0.0
  %799 = vmatprep.subr.mxu0 0.0
  %800 = vmatpush1.msra.mxu0 0.0
  %801 = vmatprep.subr.mxu0 0.0
  %802 = vmatpush1.msra.mxu0 0.0
  %803 = vmatprep.subr.mxu0 0.0
  %804 = vmatpush1.msra.mxu0 0.0
  %805 = vmatprep.subr.mxu0 0.0
  %806 = vmatpush1.msra.mxu0 0.0
  %807 = vmatprep.subr.mxu0 0.0
  %808 = vmatpush1.msra.mxu0 0.0
  %809 = vmatprep.subr.mxu0 0.0
  %810 = vmatpush1.msra.mxu0 0.0
  %811 = vmatprep.subr.mxu0 0.0
  %812 = vmatpush1.msra.mxu0 0.0
  %813 = vmatprep.subr.mxu0 0.0
  %814 = vmatpush1.msra.mxu0 0.0
  %815 = vmatprep.subr.mxu0 0.0
  %816 = vmatpush1.msra.mxu0 0.0
  %817 = vmatprep.subr.mxu0 0.0
  %818 = vmatpush1.msra.mxu0 0.0
  %819 = vmatprep.subr.mxu0 0.0
  %820 = vmatpush1.msra.mxu0 0.0
  %821 = vmatprep.subr.mxu0 0.0
  %822 = vmatpush1.msra.mxu0 0.0
  %823 = vmatprep.subr.mxu0 0.0
  %824 = vmatpush1.msra.mxu0 0.0
  %825 = vmatprep.subr.mxu0 0.0
  %826 = vmatpush1.msra.mxu0 0.0
  %827 = vmatprep.subr.mxu0 0.0
  %828 = vmatpush1.msra.mxu0 0.0
  %829 = vmatprep.mubr.f32.mxu0 0.0
  %830 = vmatmul.mubr.f32.gmra.mrb[0].mxu0 %v748
  %v831 = vpop.f32.mrb[0].mxu0
  %v832 = vadd.f32 0.0, %v831
  %v833 = vpop.f32.mrb[0].mxu0
  %834 = vmatprep.mubr.f32.mxu0 0.0
  %835 = vmatmul.mubr.f32.gmra.mrb[0].mxu0 %v751
  %v836 = vpop.f32.mrb[0].mxu0
  %v837 = vadd.f32 0.0, %v836
  %v838 = vpop.f32.mrb[0].mxu0
  %839 = vmatprep.mubr.f32.mxu0 0.0
  %840 = vmatmul.mubr.f32.gmra.mrb[0].mxu0 %v754
  %v841 = vpop.f32.mrb[0].mxu0
  %v842 = vadd.f32 0.0, %v841
  %v843 = vpop.f32.mrb[0].mxu0
  %844 = vmatprep.mubr.f32.mxu0 0.0
  %845 = vmatmul.mubr.f32.gmra.mrb[0].mxu0 %v757
  %v846 = vpop.f32.mrb[0].mxu0
  %v847 = vadd.f32 0.0, %v846
  %v848 = vpop.f32.mrb[0].mxu0
  %849 = vmatprep.mubr.f32.mxu0 0.0
  %850 = vmatmul.mubr.f32.gmra.mrb[0].mxu0 %v760
  %v851 = vpop.f32.mrb[0].mxu0
  %v852 = vadd.f32 0.0, %v851
  %v853 = vpop.f32.mrb[0].mxu0
  %854 = vmatprep.mubr.f32.mxu0 0.0
  %855 = vmatmul.mubr.f32.gmra.mrb[0].mxu0 %v763
  %v856 = vpop.f32.mrb[0].mxu0
  %v857 = vadd.f32 0.0, %v856
  %v858 = vpop.f32.mrb[0].mxu0
  %859 = vdwg.mxu0
  %860 = vrot.lane.b32.xlu0 %v513, 120
  %v861 = vpop.permute.xlu0 %860
  %862 = vrot.lane.b32.xlu0 %v514, 120
  %v863 = vpop.permute.xlu0 %862
  %864 = vrot.lane.b32.xlu0 %v515, 120
  %v865 = vpop.permute.xlu0 %864
  %866 = vrot.lane.b32.xlu0 %v516, 120
  %v867 = vpop.permute.xlu0 %866
  %868 = vrot.lane.b32.xlu0 %v517, 120
  %v869 = vpop.permute.xlu0 %868
  %870 = vrot.lane.b32.xlu0 %v518, 120
  %v871 = vpop.permute.xlu0 %870
  %872 = vrot.lane.b32.xlu0 %v481, 88
  %v873 = vpop.permute.xlu0 %872
  %874 = vrot.lane.b32.xlu0 %v486, 88
  %v875 = vpop.permute.xlu0 %874
  %876 = vrot.lane.b32.xlu0 %v491, 88
  %v877 = vpop.permute.xlu0 %876
  %878 = vrot.lane.b32.xlu0 %v496, 88
  %v879 = vpop.permute.xlu0 %878
  %880 = vrot.lane.b32.xlu0 %v501, 88
  %v881 = vpop.permute.xlu0 %880
  %882 = vrot.lane.b32.xlu0 %v506, 88
  %v883 = vpop.permute.xlu0 %882
  %v884 = vsel %vm537, %v861, 0
  %v886 = vsel %vm537, %v863, 0
  %v888 = vsel %vm537, %v865, 0
  %v890 = vsel %vm537, %v867, 0
  %v892 = vsel %vm537, %v869, 0
  %v894 = vsel %vm537, %v871, 0
  %v896 = vsel %vm537, %v873, 0
  %v898 = vsel %vm537, %v875, 0
  %v900 = vsel %vm537, %v877, 0
  %v902 = vsel %vm537, %v879, 0
  %v904 = vsel %vm537, %v881, 0
  %v906 = vsel %vm537, %v883, 0
  %908 = vmatprep.subr.mxu0 0.0
  %909 = vmatpush1.xpose.msra.mxu0 %v896
  %910 = vmatprep.subr.mxu0 0.0
  %911 = vmatpush1.xpose.msra.mxu0 %v898
  %912 = vmatprep.subr.mxu0 0.0
  %913 = vmatpush1.xpose.msra.mxu0 %v900
  %914 = vmatprep.subr.mxu0 0.0
  %915 = vmatpush1.xpose.msra.mxu0 %v902
  %916 = vmatprep.subr.mxu0 0.0
  %917 = vmatpush1.xpose.msra.mxu0 %v904
  %918 = vmatprep.subr.mxu0 0.0
  %919 = vmatpush1.xpose.msra.mxu0 %v906
  %920 = vmatprep.subr.mxu0 0.0
  %921 = vmatpush1.xpose.msra.mxu0 0.0
  %922 = vmatprep.subr.mxu0 0.0
  %923 = vmatpush1.xpose.msra.mxu0 0.0
  %924 = vmatprep.subr.mxu0 0.0
  %925 = vmatpush1.xpose.msra.mxu0 0.0
  %926 = vmatprep.subr.mxu0 0.0
  %927 = vmatpush1.xpose.msra.mxu0 0.0
  %928 = vmatprep.subr.mxu0 0.0
  %929 = vmatpush1.xpose.msra.mxu0 0.0
  %930 = vmatprep.subr.mxu0 0.0
  %931 = vmatpush1.xpose.msra.mxu0 0.0
  %932 = vmatprep.subr.mxu0 0.0
  %933 = vmatpush1.xpose.msra.mxu0 0.0
  %934 = vmatprep.subr.mxu0 0.0
  %935 = vmatpush1.xpose.msra.mxu0 0.0
  %936 = vmatprep.subr.mxu0 0.0
  %937 = vmatpush1.xpose.msra.mxu0 0.0
  %938 = vmatprep.subr.mxu0 0.0
  %939 = vmatpush1.xpose.msra.mxu0 0.0
  %940 = vmatprep.subr.mxu0 0.0
  %941 = vmatpush1.xpose.msra.mxu0 0.0
  %942 = vmatprep.subr.mxu0 0.0
  %943 = vmatpush1.xpose.msra.mxu0 0.0
  %944 = vmatprep.subr.mxu0 0.0
  %945 = vmatpush1.xpose.msra.mxu0 0.0
  %946 = vmatprep.subr.mxu0 0.0
  %947 = vmatpush1.xpose.msra.mxu0 0.0
  %948 = vmatprep.subr.mxu0 0.0
  %949 = vmatpush1.xpose.msra.mxu0 0.0
  %950 = vmatprep.subr.mxu0 0.0
  %951 = vmatpush1.xpose.msra.mxu0 0.0
  %952 = vmatprep.subr.mxu0 0.0
  %953 = vmatpush1.xpose.msra.mxu0 0.0
  %954 = vmatprep.subr.mxu0 0.0
  %955 = vmatpush1.xpose.msra.mxu0 0.0
  %956 = vmatprep.subr.mxu0 0.0
  %957 = vmatpush1.xpose.msra.mxu0 0.0
  %958 = vmatprep.subr.mxu0 0.0
  %959 = vmatpush1.xpose.msra.mxu0 0.0
  %960 = vmatprep.subr.mxu0 0.0
  %961 = vmatpush1.xpose.msra.mxu0 0.0
  %962 = vmatprep.subr.mxu0 0.0
  %963 = vmatpush1.xpose.msra.mxu0 0.0
  %964 = vmatprep.subr.mxu0 0.0
  %965 = vmatpush1.xpose.msra.mxu0 0.0
  %966 = vmatprep.subr.mxu0 0.0
  %967 = vmatpush1.xpose.msra.mxu0 0.0
  %968 = vmatprep.subr.mxu0 0.0
  %969 = vmatpush1.xpose.msra.mxu0 0.0
  %970 = vmatprep.subr.mxu0 0.0
  %971 = vmatpush1.xpose.msra.mxu0 0.0
  %972 = vmatprep.mubr.f32.mxu0 0.0
  %973 = vmatmul.mubr.f32.gmra.mrb[0].mxu0 %v884
  %v974 = vpop.f32.mrb[0].mxu0
  %v975 = vadd.f32 %v280, %v974
  %v976 = vpop.f32.mrb[0].mxu0
  %977 = vmatprep.mubr.f32.mxu0 0.0
  %978 = vmatmul.mubr.f32.gmra.mrb[0].mxu0 %v886
  %v979 = vpop.f32.mrb[0].mxu0
  %v980 = vadd.f32 %v281, %v979
  %v981 = vpop.f32.mrb[0].mxu0
  %982 = vmatprep.mubr.f32.mxu0 0.0
  %983 = vmatmul.mubr.f32.gmra.mrb[0].mxu0 %v888
  %v984 = vpop.f32.mrb[0].mxu0
  %v985 = vadd.f32 %v282, %v984
  %v986 = vpop.f32.mrb[0].mxu0
  %987 = vmatprep.mubr.f32.mxu0 0.0
  %988 = vmatmul.mubr.f32.gmra.mrb[0].mxu0 %v890
  %v989 = vpop.f32.mrb[0].mxu0
  %v990 = vadd.f32 %v283, %v989
  %v991 = vpop.f32.mrb[0].mxu0
  %992 = vmatprep.mubr.f32.mxu0 0.0
  %993 = vmatmul.mubr.f32.gmra.mrb[0].mxu0 %v892
  %v994 = vpop.f32.mrb[0].mxu0
  %v995 = vadd.f32 %v284, %v994
  %v996 = vpop.f32.mrb[0].mxu0
  %997 = vmatprep.mubr.f32.mxu0 0.0
  %998 = vmatmul.mubr.f32.gmra.mrb[0].mxu0 %v894
  %v999 = vpop.f32.mrb[0].mxu0
  %v1000 = vadd.f32 %v285, %v999
  %v1001 = vpop.f32.mrb[0].mxu0
  %1002 = vdwg.mxu0
  %v1003 = vsel %vm65, %v975, -inf
  %1004 = vmax.xlane.f32.xlu0 %v1003
  %v1005 = vpop.xlane.xlu0 %1004
  %v1006 = vsel %vm65, %v980, -inf
  %1007 = vmax.xlane.f32.xlu0 %v1006
  %v1008 = vpop.xlane.xlu0 %1007
  %v1009 = vsel %vm65, %v985, -inf
  %1010 = vmax.xlane.f32.xlu0 %v1009
  %v1011 = vpop.xlane.xlu0 %1010
  %v1012 = vsel %vm65, %v990, -inf
  %1013 = vmax.xlane.f32.xlu0 %v1012
  %v1014 = vpop.xlane.xlu0 %1013
  %v1015 = vsel %vm65, %v995, -inf
  %1016 = vmax.xlane.f32.xlu0 %v1015
  %v1017 = vpop.xlane.xlu0 %1016
  %v1018 = vsel %vm65, %v1000, -inf
  %1019 = vmax.xlane.f32.xlu0 %v1018
  %v1020 = vpop.xlane.xlu0 %1019
  %v1021 = vsub.f32 %v975, %v1005
  %v1022 = vsub.f32 %v980, %v1008
  %v1023 = vsub.f32 %v985, %v1011
  %v1024 = vsub.f32 %v990, %v1014
  %v1025 = vsub.f32 %v995, %v1017
  %v1026 = vsub.f32 %v1000, %v1020
  %v1027 = vmul.f32 %v1021, 1.442695
  %v1028 = vpow.pop %v1027
  %v1029 = vmul.f32 %v1022, 1.442695
  %v1030 = vpow.pop %v1029
  %v1031 = vmul.f32 %v1023, 1.442695
  %v1032 = vpow.pop %v1031
  %v1033 = vmul.f32 %v1024, 1.442695
  %v1034 = vpow.pop %v1033
  %v1035 = vmul.f32 %v1025, 1.442695
  %v1036 = vpow.pop %v1035
  %v1037 = vmul.f32 %v1026, 1.442695
  %v1038 = vpow.pop %v1037
  %v1039 = vsel %vm65, %v1028, 0.0
  %1040 = vadd.xlane.f32.xlu0 %v1039
  %v1041 = vpop.xlane.xlu0 %1040
  %v1042 = vsel %vm65, %v1030, 0.0
  %1043 = vadd.xlane.f32.xlu0 %v1042
  %v1044 = vpop.xlane.xlu0 %1043
  %v1045 = vsel %vm65, %v1032, 0.0
  %1046 = vadd.xlane.f32.xlu0 %v1045
  %v1047 = vpop.xlane.xlu0 %1046
  %v1048 = vsel %vm65, %v1034, 0.0
  %1049 = vadd.xlane.f32.xlu0 %v1048
  %v1050 = vpop.xlane.xlu0 %1049
  %v1051 = vsel %vm65, %v1036, 0.0
  %1052 = vadd.xlane.f32.xlu0 %v1051
  %v1053 = vpop.xlane.xlu0 %1052
  %v1054 = vsel %vm65, %v1038, 0.0
  %1055 = vadd.xlane.f32.xlu0 %v1054
  %v1056 = vpop.xlane.xlu0 %1055
  %v1057 = vrcp.pop %v1041
  %v1058 = vrcp.pop %v1044
  %v1059 = vrcp.pop %v1047
  %v1060 = vrcp.pop %v1050
  %v1061 = vrcp.pop %v1053
  %v1062 = vrcp.pop %v1056
  %v1063 = vmul.f32 %v1028, %v1057
  %v1064 = vmul.f32 %v1030, %v1058
  %v1065 = vmul.f32 %v1032, %v1059
  %v1066 = vmul.f32 %v1034, %v1060
  %v1067 = vmul.f32 %v1036, %v1061
  %v1068 = vmul.f32 %v1038, %v1062
  %1069 = vrot.lane.b32.xlu0 %v481, 56
  %v1070 = vpop.permute.xlu0 %1069
  %1071 = vrot.lane.b32.xlu0 %v486, 56
  %v1072 = vpop.permute.xlu0 %1071
  %1073 = vrot.lane.b32.xlu0 %v491, 56
  %v1074 = vpop.permute.xlu0 %1073
  %1075 = vrot.lane.b32.xlu0 %v496, 56
  %v1076 = vpop.permute.xlu0 %1075
  %1077 = vrot.lane.b32.xlu0 %v501, 56
  %v1078 = vpop.permute.xlu0 %1077
  %1079 = vrot.lane.b32.xlu0 %v506, 56
  %v1080 = vpop.permute.xlu0 %1079
  %v1088 = vsel %vm65, %v1063, 0
  %v1091 = vsel %vm65, %v1064, 0
  %v1094 = vsel %vm65, %v1065, 0
  %v1097 = vsel %vm65, %v1066, 0
  %v1100 = vsel %vm65, %v1067, 0
  %v1103 = vsel %vm65, %v1068, 0
  %1105 = vmatprep.subr.mxu0 0.0
  %1106 = vmatpush1.msra.mxu0 %v1070
  %1107 = vmatprep.subr.mxu0 0.0
  %1108 = vmatpush1.msra.mxu0 %v1072
  %1109 = vmatprep.subr.mxu0 0.0
  %1110 = vmatpush1.msra.mxu0 %v1074
  %1111 = vmatprep.subr.mxu0 0.0
  %1112 = vmatpush1.msra.mxu0 %v1076
  %1113 = vmatprep.subr.mxu0 0.0
  %1114 = vmatpush1.msra.mxu0 %v1078
  %1115 = vmatprep.subr.mxu0 0.0
  %1116 = vmatpush1.msra.mxu0 %v1080
  %1117 = vmatprep.subr.mxu0 0.0
  %1118 = vmatpush1.msra.mxu0 0.0
  %1119 = vmatprep.subr.mxu0 0.0
  %1120 = vmatpush1.msra.mxu0 0.0
  %1121 = vmatprep.subr.mxu0 0.0
  %1122 = vmatpush1.msra.mxu0 0.0
  %1123 = vmatprep.subr.mxu0 0.0
  %1124 = vmatpush1.msra.mxu0 0.0
  %1125 = vmatprep.subr.mxu0 0.0
  %1126 = vmatpush1.msra.mxu0 0.0
  %1127 = vmatprep.subr.mxu0 0.0
  %1128 = vmatpush1.msra.mxu0 0.0
  %1129 = vmatprep.subr.mxu0 0.0
  %1130 = vmatpush1.msra.mxu0 0.0
  %1131 = vmatprep.subr.mxu0 0.0
  %1132 = vmatpush1.msra.mxu0 0.0
  %1133 = vmatprep.subr.mxu0 0.0
  %1134 = vmatpush1.msra.mxu0 0.0
  %1135 = vmatprep.subr.mxu0 0.0
  %1136 = vmatpush1.msra.mxu0 0.0
  %1137 = vmatprep.subr.mxu0 0.0
  %1138 = vmatpush1.msra.mxu0 0.0
  %1139 = vmatprep.subr.mxu0 0.0
  %1140 = vmatpush1.msra.mxu0 0.0
  %1141 = vmatprep.subr.mxu0 0.0
  %1142 = vmatpush1.msra.mxu0 0.0
  %1143 = vmatprep.subr.mxu0 0.0
  %1144 = vmatpush1.msra.mxu0 0.0
  %1145 = vmatprep.subr.mxu0 0.0
  %1146 = vmatpush1.msra.mxu0 0.0
  %1147 = vmatprep.subr.mxu0 0.0
  %1148 = vmatpush1.msra.mxu0 0.0
  %1149 = vmatprep.subr.mxu0 0.0
  %1150 = vmatpush1.msra.mxu0 0.0
  %1151 = vmatprep.subr.mxu0 0.0
  %1152 = vmatpush1.msra.mxu0 0.0
  %1153 = vmatprep.subr.mxu0 0.0
  %1154 = vmatpush1.msra.mxu0 0.0
  %1155 = vmatprep.subr.mxu0 0.0
  %1156 = vmatpush1.msra.mxu0 0.0
  %1157 = vmatprep.subr.mxu0 0.0
  %1158 = vmatpush1.msra.mxu0 0.0
  %1159 = vmatprep.subr.mxu0 0.0
  %1160 = vmatpush1.msra.mxu0 0.0
  %1161 = vmatprep.subr.mxu0 0.0
  %1162 = vmatpush1.msra.mxu0 0.0
  %1163 = vmatprep.subr.mxu0 0.0
  %1164 = vmatpush1.msra.mxu0 0.0
  %1165 = vmatprep.subr.mxu0 0.0
  %1166 = vmatpush1.msra.mxu0 0.0
  %1167 = vmatprep.subr.mxu0 0.0
  %1168 = vmatpush1.msra.mxu0 0.0
  %1169 = vmatprep.mubr.f32.mxu0 0.0
  %1170 = vmatmul.mubr.f32.gmra.mrb[0].mxu0 %v1088
  %v1171 = vpop.f32.mrb[0].mxu0
  %v1172 = vadd.f32 0.0, %v1171
  %v1173 = vpop.f32.mrb[0].mxu0
  %1174 = vmatprep.mubr.f32.mxu0 0.0
  %1175 = vmatmul.mubr.f32.gmra.mrb[0].mxu0 %v1091
  %v1176 = vpop.f32.mrb[0].mxu0
  %v1177 = vadd.f32 0.0, %v1176
  %v1178 = vpop.f32.mrb[0].mxu0
  %1179 = vmatprep.mubr.f32.mxu0 0.0
  %1180 = vmatmul.mubr.f32.gmra.mrb[0].mxu0 %v1094
  %v1181 = vpop.f32.mrb[0].mxu0
  %v1182 = vadd.f32 0.0, %v1181
  %v1183 = vpop.f32.mrb[0].mxu0
  %1184 = vmatprep.mubr.f32.mxu0 0.0
  %1185 = vmatmul.mubr.f32.gmra.mrb[0].mxu0 %v1097
  %v1186 = vpop.f32.mrb[0].mxu0
  %v1187 = vadd.f32 0.0, %v1186
  %v1188 = vpop.f32.mrb[0].mxu0
  %1189 = vmatprep.mubr.f32.mxu0 0.0
  %1190 = vmatmul.mubr.f32.gmra.mrb[0].mxu0 %v1100
  %v1191 = vpop.f32.mrb[0].mxu0
  %v1192 = vadd.f32 0.0, %v1191
  %v1193 = vpop.f32.mrb[0].mxu0
  %1194 = vmatprep.mubr.f32.mxu0 0.0
  %1195 = vmatmul.mubr.f32.gmra.mrb[0].mxu0 %v1103
  %v1196 = vpop.f32.mrb[0].mxu0
  %v1197 = vadd.f32 0.0, %v1196
  %v1198 = vpop.f32.mrb[0].mxu0
  %1199 = vdwg.mxu0
  %v1201 = vsel %vm537, %v1172, 0
  %v1204 = vsel %vm537, %v1177, 0
  %v1207 = vsel %vm537, %v1182, 0
  %v1210 = vsel %vm537, %v1187, 0
  %v1213 = vsel %vm537, %v1192, 0
  %v1216 = vsel %vm537, %v1197, 0
  %1218 = vmatprep.subr.mxu0 0.0
  %1219 = vmatpush1.msra.mxu0 %v510
  %1220 = vmatprep.subr.mxu0 0.0
  %1221 = vmatpush1.msra.mxu0 0.0
  %1222 = vmatprep.subr.mxu0 0.0
  %1223 = vmatpush1.msra.mxu0 0.0
  %1224 = vmatprep.subr.mxu0 0.0
  %1225 = vmatpush1.msra.mxu0 0.0
  %1226 = vmatprep.subr.mxu0 0.0
  %1227 = vmatpush1.msra.mxu0 0.0
  %1228 = vmatprep.subr.mxu0 0.0
  %1229 = vmatpush1.msra.mxu0 0.0
  %1230 = vmatprep.subr.mxu0 0.0
  %1231 = vmatpush1.msra.mxu0 0.0
  %1232 = vmatprep.subr.mxu0 0.0
  %1233 = vmatpush1.msra.mxu0 0.0
  %1234 = vmatprep.subr.mxu0 0.0
  %1235 = vmatpush1.msra.mxu0 0.0
  %1236 = vmatprep.subr.mxu0 0.0
  %1237 = vmatpush1.msra.mxu0 0.0
  %1238 = vmatprep.subr.mxu0 0.0
  %1239 = vmatpush1.msra.mxu0 0.0
  %1240 = vmatprep.subr.mxu0 0.0
  %1241 = vmatpush1.msra.mxu0 0.0
  %1242 = vmatprep.subr.mxu0 0.0
  %1243 = vmatpush1.msra.mxu0 0.0
  %1244 = vmatprep.subr.mxu0 0.0
  %1245 = vmatpush1.msra.mxu0 0.0
  %1246 = vmatprep.subr.mxu0 0.0
  %1247 = vmatpush1.msra.mxu0 0.0
  %1248 = vmatprep.subr.mxu0 0.0
  %1249 = vmatpush1.msra.mxu0 0.0
  %1250 = vmatprep.subr.mxu0 0.0
  %1251 = vmatpush1.msra.mxu0 0.0
  %1252 = vmatprep.subr.mxu0 0.0
  %1253 = vmatpush1.msra.mxu0 0.0
  %1254 = vmatprep.subr.mxu0 0.0
  %1255 = vmatpush1.msra.mxu0 0.0
  %1256 = vmatprep.subr.mxu0 0.0
  %1257 = vmatpush1.msra.mxu0 0.0
  %1258 = vmatprep.subr.mxu0 0.0
  %1259 = vmatpush1.msra.mxu0 0.0
  %1260 = vmatprep.subr.mxu0 0.0
  %1261 = vmatpush1.msra.mxu0 0.0
  %1262 = vmatprep.subr.mxu0 0.0
  %1263 = vmatpush1.msra.mxu0 0.0
  %1264 = vmatprep.subr.mxu0 0.0
  %1265 = vmatpush1.msra.mxu0 0.0
  %1266 = vmatprep.subr.mxu0 0.0
  %1267 = vmatpush1.msra.mxu0 0.0
  %1268 = vmatprep.subr.mxu0 0.0
  %1269 = vmatpush1.msra.mxu0 0.0
  %1270 = vmatprep.subr.mxu0 0.0
  %1271 = vmatpush1.msra.mxu0 0.0
  %1272 = vmatprep.subr.mxu0 0.0
  %1273 = vmatpush1.msra.mxu0 0.0
  %1274 = vmatprep.subr.mxu0 0.0
  %1275 = vmatpush1.msra.mxu0 0.0
  %1276 = vmatprep.subr.mxu0 0.0
  %1277 = vmatpush1.msra.mxu0 0.0
  %1278 = vmatprep.subr.mxu0 0.0
  %1279 = vmatpush1.msra.mxu0 0.0
  %1280 = vmatprep.subr.mxu0 0.0
  %1281 = vmatpush1.msra.mxu0 0.0
  %1282 = vmatprep.mubr.f32.mxu0 0.0
  %1283 = vmatmul.mubr.f32.gmra.mrb[0].mxu0 %v1201
  %v1284 = vpop.f32.mrb[0].mxu0
  %v1285 = vadd.f32 0.0, %v1284
  %v1286 = vpop.f32.mrb[0].mxu0
  %1287 = vmatprep.mubr.f32.mxu0 0.0
  %1288 = vmatmul.mubr.f32.gmra.mrb[0].mxu0 %v1204
  %v1289 = vpop.f32.mrb[0].mxu0
  %v1290 = vadd.f32 0.0, %v1289
  %v1291 = vpop.f32.mrb[0].mxu0
  %1292 = vmatprep.mubr.f32.mxu0 0.0
  %1293 = vmatmul.mubr.f32.gmra.mrb[0].mxu0 %v1207
  %v1294 = vpop.f32.mrb[0].mxu0
  %v1295 = vadd.f32 0.0, %v1294
  %v1296 = vpop.f32.mrb[0].mxu0
  %1297 = vmatprep.mubr.f32.mxu0 0.0
  %1298 = vmatmul.mubr.f32.gmra.mrb[0].mxu0 %v1210
  %v1299 = vpop.f32.mrb[0].mxu0
  %v1300 = vadd.f32 0.0, %v1299
  %v1301 = vpop.f32.mrb[0].mxu0
  %1302 = vmatprep.mubr.f32.mxu0 0.0
  %1303 = vmatmul.mubr.f32.gmra.mrb[0].mxu0 %v1213
  %v1304 = vpop.f32.mrb[0].mxu0
  %v1305 = vadd.f32 0.0, %v1304
  %v1306 = vpop.f32.mrb[0].mxu0
  %1307 = vmatprep.mubr.f32.mxu0 0.0
  %1308 = vmatmul.mubr.f32.gmra.mrb[0].mxu0 %v1216
  %v1309 = vpop.f32.mrb[0].mxu0
  %v1310 = vadd.f32 0.0, %v1309
  %v1311 = vpop.f32.mrb[0].mxu0
  %1312 = vdwg.mxu0
  %v1314 = vsel %vm537, %v832, 0
  %v1317 = vsel %vm537, %v837, 0
  %v1320 = vsel %vm537, %v842, 0
  %v1323 = vsel %vm537, %v847, 0
  %v1326 = vsel %vm537, %v852, 0
  %v1329 = vsel %vm537, %v857, 0
  %1331 = vmatprep.subr.mxu0 0.0
  %1332 = vmatpush1.msra.mxu0 %v509
  %1333 = vmatprep.subr.mxu0 0.0
  %1334 = vmatpush1.msra.mxu0 0.0
  %1335 = vmatprep.subr.mxu0 0.0
  %1336 = vmatpush1.msra.mxu0 0.0
  %1337 = vmatprep.subr.mxu0 0.0
  %1338 = vmatpush1.msra.mxu0 0.0
  %1339 = vmatprep.subr.mxu0 0.0
  %1340 = vmatpush1.msra.mxu0 0.0
  %1341 = vmatprep.subr.mxu0 0.0
  %1342 = vmatpush1.msra.mxu0 0.0
  %1343 = vmatprep.subr.mxu0 0.0
  %1344 = vmatpush1.msra.mxu0 0.0
  %1345 = vmatprep.subr.mxu0 0.0
  %1346 = vmatpush1.msra.mxu0 0.0
  %1347 = vmatprep.subr.mxu0 0.0
  %1348 = vmatpush1.msra.mxu0 0.0
  %1349 = vmatprep.subr.mxu0 0.0
  %1350 = vmatpush1.msra.mxu0 0.0
  %1351 = vmatprep.subr.mxu0 0.0
  %1352 = vmatpush1.msra.mxu0 0.0
  %1353 = vmatprep.subr.mxu0 0.0
  %1354 = vmatpush1.msra.mxu0 0.0
  %1355 = vmatprep.subr.mxu0 0.0
  %1356 = vmatpush1.msra.mxu0 0.0
  %1357 = vmatprep.subr.mxu0 0.0
  %1358 = vmatpush1.msra.mxu0 0.0
  %1359 = vmatprep.subr.mxu0 0.0
  %1360 = vmatpush1.msra.mxu0 0.0
  %1361 = vmatprep.subr.mxu0 0.0
  %1362 = vmatpush1.msra.mxu0 0.0
  %1363 = vmatprep.subr.mxu0 0.0
  %1364 = vmatpush1.msra.mxu0 0.0
  %1365 = vmatprep.subr.mxu0 0.0
  %1366 = vmatpush1.msra.mxu0 0.0
  %1367 = vmatprep.subr.mxu0 0.0
  %1368 = vmatpush1.msra.mxu0 0.0
  %1369 = vmatprep.subr.mxu0 0.0
  %1370 = vmatpush1.msra.mxu0 0.0
  %1371 = vmatprep.subr.mxu0 0.0
  %1372 = vmatpush1.msra.mxu0 0.0
  %1373 = vmatprep.subr.mxu0 0.0
  %1374 = vmatpush1.msra.mxu0 0.0
  %1375 = vmatprep.subr.mxu0 0.0
  %1376 = vmatpush1.msra.mxu0 0.0
  %1377 = vmatprep.subr.mxu0 0.0
  %1378 = vmatpush1.msra.mxu0 0.0
  %1379 = vmatprep.subr.mxu0 0.0
  %1380 = vmatpush1.msra.mxu0 0.0
  %1381 = vmatprep.subr.mxu0 0.0
  %1382 = vmatpush1.msra.mxu0 0.0
  %1383 = vmatprep.subr.mxu0 0.0
  %1384 = vmatpush1.msra.mxu0 0.0
  %1385 = vmatprep.subr.mxu0 0.0
  %1386 = vmatpush1.msra.mxu0 0.0
  %1387 = vmatprep.subr.mxu0 0.0
  %1388 = vmatpush1.msra.mxu0 0.0
  %1389 = vmatprep.subr.mxu0 0.0
  %1390 = vmatpush1.msra.mxu0 0.0
  %1391 = vmatprep.subr.mxu0 0.0
  %1392 = vmatpush1.msra.mxu0 0.0
  %1393 = vmatprep.subr.mxu0 0.0
  %1394 = vmatpush1.msra.mxu0 0.0
  %1395 = vmatprep.mubr.f32.mxu0 0.0
  %1396 = vmatmul.mubr.f32.gmra.mrb[0].mxu0 %v1314
  %v1397 = vpop.f32.mrb[0].mxu0
  %v1398 = vadd.f32 %v1285, %v1397
  %v1399 = vpop.f32.mrb[0].mxu0
  %1400 = vmatprep.mubr.f32.mxu0 0.0
  %1401 = vmatmul.mubr.f32.gmra.mrb[0].mxu0 %v1317
  %v1402 = vpop.f32.mrb[0].mxu0
  %v1403 = vadd.f32 %v1290, %v1402
  %v1404 = vpop.f32.mrb[0].mxu0
  %1405 = vmatprep.mubr.f32.mxu0 0.0
  %1406 = vmatmul.mubr.f32.gmra.mrb[0].mxu0 %v1320
  %v1407 = vpop.f32.mrb[0].mxu0
  %v1408 = vadd.f32 %v1295, %v1407
  %v1409 = vpop.f32.mrb[0].mxu0
  %1410 = vmatprep.mubr.f32.mxu0 0.0
  %1411 = vmatmul.mubr.f32.gmra.mrb[0].mxu0 %v1323
  %v1412 = vpop.f32.mrb[0].mxu0
  %v1413 = vadd.f32 %v1300, %v1412
  %v1414 = vpop.f32.mrb[0].mxu0
  %1415 = vmatprep.mubr.f32.mxu0 0.0
  %1416 = vmatmul.mubr.f32.gmra.mrb[0].mxu0 %v1326
  %v1417 = vpop.f32.mrb[0].mxu0
  %v1418 = vadd.f32 %v1305, %v1417
  %v1419 = vpop.f32.mrb[0].mxu0
  %1420 = vmatprep.mubr.f32.mxu0 0.0
  %1421 = vmatmul.mubr.f32.gmra.mrb[0].mxu0 %v1329
  %v1422 = vpop.f32.mrb[0].mxu0
  %v1423 = vadd.f32 %v1310, %v1422
  %v1424 = vpop.f32.mrb[0].mxu0
  %1425 = vdwg.mxu0
  %1426 = vrot.lane.b32.xlu0 %v513, 112
  %v1427 = vpop.permute.xlu0 %1426
  %1428 = vrot.lane.b32.xlu0 %v514, 112
  %v1429 = vpop.permute.xlu0 %1428
  %1430 = vrot.lane.b32.xlu0 %v515, 112
  %v1431 = vpop.permute.xlu0 %1430
  %1432 = vrot.lane.b32.xlu0 %v516, 112
  %v1433 = vpop.permute.xlu0 %1432
  %1434 = vrot.lane.b32.xlu0 %v517, 112
  %v1435 = vpop.permute.xlu0 %1434
  %1436 = vrot.lane.b32.xlu0 %v518, 112
  %v1437 = vpop.permute.xlu0 %1436
  %1438 = vrot.lane.b32.xlu0 %v481, 80
  %v1439 = vpop.permute.xlu0 %1438
  %1440 = vrot.lane.b32.xlu0 %v486, 80
  %v1441 = vpop.permute.xlu0 %1440
  %1442 = vrot.lane.b32.xlu0 %v491, 80
  %v1443 = vpop.permute.xlu0 %1442
  %1444 = vrot.lane.b32.xlu0 %v496, 80
  %v1445 = vpop.permute.xlu0 %1444
  %1446 = vrot.lane.b32.xlu0 %v501, 80
  %v1447 = vpop.permute.xlu0 %1446
  %1448 = vrot.lane.b32.xlu0 %v506, 80
  %v1449 = vpop.permute.xlu0 %1448
  %v1450 = vsel %vm537, %v1427, 0
  %v1452 = vsel %vm537, %v1429, 0
  %v1454 = vsel %vm537, %v1431, 0
  %v1456 = vsel %vm537, %v1433, 0
  %v1458 = vsel %vm537, %v1435, 0
  %v1460 = vsel %vm537, %v1437, 0
  %v1462 = vsel %vm537, %v1439, 0
  %v1464 = vsel %vm537, %v1441, 0
  %v1466 = vsel %vm537, %v1443, 0
  %v1468 = vsel %vm537, %v1445, 0
  %v1470 = vsel %vm537, %v1447, 0
  %v1472 = vsel %vm537, %v1449, 0
  %1474 = vmatprep.subr.mxu0 0.0
  %1475 = vmatpush1.xpose.msra.mxu0 %v1462
  %1476 = vmatprep.subr.mxu0 0.0
  %1477 = vmatpush1.xpose.msra.mxu0 %v1464
  %1478 = vmatprep.subr.mxu0 0.0
  %1479 = vmatpush1.xpose.msra.mxu0 %v1466
  %1480 = vmatprep.subr.mxu0 0.0
  %1481 = vmatpush1.xpose.msra.mxu0 %v1468
  %1482 = vmatprep.subr.mxu0 0.0
  %1483 = vmatpush1.xpose.msra.mxu0 %v1470
  %1484 = vmatprep.subr.mxu0 0.0
  %1485 = vmatpush1.xpose.msra.mxu0 %v1472
  %1486 = vmatprep.subr.mxu0 0.0
  %1487 = vmatpush1.xpose.msra.mxu0 0.0
  %1488 = vmatprep.subr.mxu0 0.0
  %1489 = vmatpush1.xpose.msra.mxu0 0.0
  %1490 = vmatprep.subr.mxu0 0.0
  %1491 = vmatpush1.xpose.msra.mxu0 0.0
  %1492 = vmatprep.subr.mxu0 0.0
  %1493 = vmatpush1.xpose.msra.mxu0 0.0
  %1494 = vmatprep.subr.mxu0 0.0
  %1495 = vmatpush1.xpose.msra.mxu0 0.0
  %1496 = vmatprep.subr.mxu0 0.0
  %1497 = vmatpush1.xpose.msra.mxu0 0.0
  %1498 = vmatprep.subr.mxu0 0.0
  %1499 = vmatpush1.xpose.msra.mxu0 0.0
  %1500 = vmatprep.subr.mxu0 0.0
  %1501 = vmatpush1.xpose.msra.mxu0 0.0
  %1502 = vmatprep.subr.mxu0 0.0
  %1503 = vmatpush1.xpose.msra.mxu0 0.0
  %1504 = vmatprep.subr.mxu0 0.0
  %1505 = vmatpush1.xpose.msra.mxu0 0.0
  %1506 = vmatprep.subr.mxu0 0.0
  %1507 = vmatpush1.xpose.msra.mxu0 0.0
  %1508 = vmatprep.subr.mxu0 0.0
  %1509 = vmatpush1.xpose.msra.mxu0 0.0
  %1510 = vmatprep.subr.mxu0 0.0
  %1511 = vmatpush1.xpose.msra.mxu0 0.0
  %1512 = vmatprep.subr.mxu0 0.0
  %1513 = vmatpush1.xpose.msra.mxu0 0.0
  %1514 = vmatprep.subr.mxu0 0.0
  %1515 = vmatpush1.xpose.msra.mxu0 0.0
  %1516 = vmatprep.subr.mxu0 0.0
  %1517 = vmatpush1.xpose.msra.mxu0 0.0
  %1518 = vmatprep.subr.mxu0 0.0
  %1519 = vmatpush1.xpose.msra.mxu0 0.0
  %1520 = vmatprep.subr.mxu0 0.0
  %1521 = vmatpush1.xpose.msra.mxu0 0.0
  %1522 = vmatprep.subr.mxu0 0.0
  %1523 = vmatpush1.xpose.msra.mxu0 0.0
  %1524 = vmatprep.subr.mxu0 0.0
  %1525 = vmatpush1.xpose.msra.mxu0 0.0
  %1526 = vmatprep.subr.mxu0 0.0
  %1527 = vmatpush1.xpose.msra.mxu0 0.0
  %1528 = vmatprep.subr.mxu0 0.0
  %1529 = vmatpush1.xpose.msra.mxu0 0.0
  %1530 = vmatprep.subr.mxu0 0.0
  %1531 = vmatpush1.xpose.msra.mxu0 0.0
  %1532 = vmatprep.subr.mxu0 0.0
  %1533 = vmatpush1.xpose.msra.mxu0 0.0
  %1534 = vmatprep.subr.mxu0 0.0
  %1535 = vmatpush1.xpose.msra.mxu0 0.0
  %1536 = vmatprep.subr.mxu0 0.0
  %1537 = vmatpush1.xpose.msra.mxu0 0.0
  %1538 = vmatprep.mubr.f32.mxu0 0.0
  %1539 = vmatmul.mubr.f32.gmra.mrb[0].mxu0 %v1450
  %v1540 = vpop.f32.mrb[0].mxu0
  %v1541 = vadd.f32 %v280, %v1540
  %v1542 = vpop.f32.mrb[0].mxu0
  %1543 = vmatprep.mubr.f32.mxu0 0.0
  %1544 = vmatmul.mubr.f32.gmra.mrb[0].mxu0 %v1452
  %v1545 = vpop.f32.mrb[0].mxu0
  %v1546 = vadd.f32 %v281, %v1545
  %v1547 = vpop.f32.mrb[0].mxu0
  %1548 = vmatprep.mubr.f32.mxu0 0.0
  %1549 = vmatmul.mubr.f32.gmra.mrb[0].mxu0 %v1454
  %v1550 = vpop.f32.mrb[0].mxu0
  %v1551 = vadd.f32 %v282, %v1550
  %v1552 = vpop.f32.mrb[0].mxu0
  %1553 = vmatprep.mubr.f32.mxu0 0.0
  %1554 = vmatmul.mubr.f32.gmra.mrb[0].mxu0 %v1456
  %v1555 = vpop.f32.mrb[0].mxu0
  %v1556 = vadd.f32 %v283, %v1555
  %v1557 = vpop.f32.mrb[0].mxu0
  %1558 = vmatprep.mubr.f32.mxu0 0.0
  %1559 = vmatmul.mubr.f32.gmra.mrb[0].mxu0 %v1458
  %v1560 = vpop.f32.mrb[0].mxu0
  %v1561 = vadd.f32 %v284, %v1560
  %v1562 = vpop.f32.mrb[0].mxu0
  %1563 = vmatprep.mubr.f32.mxu0 0.0
  %1564 = vmatmul.mubr.f32.gmra.mrb[0].mxu0 %v1460
  %v1565 = vpop.f32.mrb[0].mxu0
  %v1566 = vadd.f32 %v285, %v1565
  %v1567 = vpop.f32.mrb[0].mxu0
  %1568 = vdwg.mxu0
  %v1569 = vsel %vm65, %v1541, -inf
  %1570 = vmax.xlane.f32.xlu0 %v1569
  %v1571 = vpop.xlane.xlu0 %1570
  %v1572 = vsel %vm65, %v1546, -inf
  %1573 = vmax.xlane.f32.xlu0 %v1572
  %v1574 = vpop.xlane.xlu0 %1573
  %v1575 = vsel %vm65, %v1551, -inf
  %1576 = vmax.xlane.f32.xlu0 %v1575
  %v1577 = vpop.xlane.xlu0 %1576
  %v1578 = vsel %vm65, %v1556, -inf
  %1579 = vmax.xlane.f32.xlu0 %v1578
  %v1580 = vpop.xlane.xlu0 %1579
  %v1581 = vsel %vm65, %v1561, -inf
  %1582 = vmax.xlane.f32.xlu0 %v1581
  %v1583 = vpop.xlane.xlu0 %1582
  %v1584 = vsel %vm65, %v1566, -inf
  %1585 = vmax.xlane.f32.xlu0 %v1584
  %v1586 = vpop.xlane.xlu0 %1585
  %v1587 = vsub.f32 %v1541, %v1571
  %v1588 = vsub.f32 %v1546, %v1574
  %v1589 = vsub.f32 %v1551, %v1577
  %v1590 = vsub.f32 %v1556, %v1580
  %v1591 = vsub.f32 %v1561, %v1583
  %v1592 = vsub.f32 %v1566, %v1586
  %v1593 = vmul.f32 %v1587, 1.442695
  %v1594 = vpow.pop %v1593
  %v1595 = vmul.f32 %v1588, 1.442695
  %v1596 = vpow.pop %v1595
  %v1597 = vmul.f32 %v1589, 1.442695
  %v1598 = vpow.pop %v1597
  %v1599 = vmul.f32 %v1590, 1.442695
  %v1600 = vpow.pop %v1599
  %v1601 = vmul.f32 %v1591, 1.442695
  %v1602 = vpow.pop %v1601
  %v1603 = vmul.f32 %v1592, 1.442695
  %v1604 = vpow.pop %v1603
  %v1605 = vsel %vm65, %v1594, 0.0
  %1606 = vadd.xlane.f32.xlu0 %v1605
  %v1607 = vpop.xlane.xlu0 %1606
  %v1608 = vsel %vm65, %v1596, 0.0
  %1609 = vadd.xlane.f32.xlu0 %v1608
  %v1610 = vpop.xlane.xlu0 %1609
  %v1611 = vsel %vm65, %v1598, 0.0
  %1612 = vadd.xlane.f32.xlu0 %v1611
  %v1613 = vpop.xlane.xlu0 %1612
  %v1614 = vsel %vm65, %v1600, 0.0
  %1615 = vadd.xlane.f32.xlu0 %v1614
  %v1616 = vpop.xlane.xlu0 %1615
  %v1617 = vsel %vm65, %v1602, 0.0
  %1618 = vadd.xlane.f32.xlu0 %v1617
  %v1619 = vpop.xlane.xlu0 %1618
  %v1620 = vsel %vm65, %v1604, 0.0
  %1621 = vadd.xlane.f32.xlu0 %v1620
  %v1622 = vpop.xlane.xlu0 %1621
  %v1623 = vrcp.pop %v1607
  %v1624 = vrcp.pop %v1610
  %v1625 = vrcp.pop %v1613
  %v1626 = vrcp.pop %v1616
  %v1627 = vrcp.pop %v1619
  %v1628 = vrcp.pop %v1622
  %v1629 = vmul.f32 %v1594, %v1623
  %v1630 = vmul.f32 %v1596, %v1624
  %v1631 = vmul.f32 %v1598, %v1625
  %v1632 = vmul.f32 %v1600, %v1626
  %v1633 = vmul.f32 %v1602, %v1627
  %v1634 = vmul.f32 %v1604, %v1628
  %1635 = vrot.lane.b32.xlu0 %v481, 48
  %v1636 = vpop.permute.xlu0 %1635
  %1637 = vrot.lane.b32.xlu0 %v486, 48
  %v1638 = vpop.permute.xlu0 %1637
  %1639 = vrot.lane.b32.xlu0 %v491, 48
  %v1640 = vpop.permute.xlu0 %1639
  %1641 = vrot.lane.b32.xlu0 %v496, 48
  %v1642 = vpop.permute.xlu0 %1641
  %1643 = vrot.lane.b32.xlu0 %v501, 48
  %v1644 = vpop.permute.xlu0 %1643
  %1645 = vrot.lane.b32.xlu0 %v506, 48
  %v1646 = vpop.permute.xlu0 %1645
  %v1654 = vsel %vm65, %v1629, 0
  %v1657 = vsel %vm65, %v1630, 0
  %v1660 = vsel %vm65, %v1631, 0
  %v1663 = vsel %vm65, %v1632, 0
  %v1666 = vsel %vm65, %v1633, 0
  %v1669 = vsel %vm65, %v1634, 0
  %1671 = vmatprep.subr.mxu0 0.0
  %1672 = vmatpush1.msra.mxu0 %v1636
  %1673 = vmatprep.subr.mxu0 0.0
  %1674 = vmatpush1.msra.mxu0 %v1638
  %1675 = vmatprep.subr.mxu0 0.0
  %1676 = vmatpush1.msra.mxu0 %v1640
  %1677 = vmatprep.subr.mxu0 0.0
  %1678 = vmatpush1.msra.mxu0 %v1642
  %1679 = vmatprep.subr.mxu0 0.0
  %1680 = vmatpush1.msra.mxu0 %v1644
  %1681 = vmatprep.subr.mxu0 0.0
  %1682 = vmatpush1.msra.mxu0 %v1646
  %1683 = vmatprep.subr.mxu0 0.0
  %1684 = vmatpush1.msra.mxu0 0.0
  %1685 = vmatprep.subr.mxu0 0.0
  %1686 = vmatpush1.msra.mxu0 0.0
  %1687 = vmatprep.subr.mxu0 0.0
  %1688 = vmatpush1.msra.mxu0 0.0
  %1689 = vmatprep.subr.mxu0 0.0
  %1690 = vmatpush1.msra.mxu0 0.0
  %1691 = vmatprep.subr.mxu0 0.0
  %1692 = vmatpush1.msra.mxu0 0.0
  %1693 = vmatprep.subr.mxu0 0.0
  %1694 = vmatpush1.msra.mxu0 0.0
  %1695 = vmatprep.subr.mxu0 0.0
  %1696 = vmatpush1.msra.mxu0 0.0
  %1697 = vmatprep.subr.mxu0 0.0
  %1698 = vmatpush1.msra.mxu0 0.0
  %1699 = vmatprep.subr.mxu0 0.0
  %1700 = vmatpush1.msra.mxu0 0.0
  %1701 = vmatprep.subr.mxu0 0.0
  %1702 = vmatpush1.msra.mxu0 0.0
  %1703 = vmatprep.subr.mxu0 0.0
  %1704 = vmatpush1.msra.mxu0 0.0
  %1705 = vmatprep.subr.mxu0 0.0
  %1706 = vmatpush1.msra.mxu0 0.0
  %1707 = vmatprep.subr.mxu0 0.0
  %1708 = vmatpush1.msra.mxu0 0.0
  %1709 = vmatprep.subr.mxu0 0.0
  %1710 = vmatpush1.msra.mxu0 0.0
  %1711 = vmatprep.subr.mxu0 0.0
  %1712 = vmatpush1.msra.mxu0 0.0
  %1713 = vmatprep.subr.mxu0 0.0
  %1714 = vmatpush1.msra.mxu0 0.0
  %1715 = vmatprep.subr.mxu0 0.0
  %1716 = vmatpush1.msra.mxu0 0.0
  %1717 = vmatprep.subr.mxu0 0.0
  %1718 = vmatpush1.msra.mxu0 0.0
  %1719 = vmatprep.subr.mxu0 0.0
  %1720 = vmatpush1.msra.mxu0 0.0
  %1721 = vmatprep.subr.mxu0 0.0
  %1722 = vmatpush1.msra.mxu0 0.0
  %1723 = vmatprep.subr.mxu0 0.0
  %1724 = vmatpush1.msra.mxu0 0.0
  %1725 = vmatprep.subr.mxu0 0.0
  %1726 = vmatpush1.msra.mxu0 0.0
  %1727 = vmatprep.subr.mxu0 0.0
  %1728 = vmatpush1.msra.mxu0 0.0
  %1729 = vmatprep.subr.mxu0 0.0
  %1730 = vmatpush1.msra.mxu0 0.0
  %1731 = vmatprep.subr.mxu0 0.0
  %1732 = vmatpush1.msra.mxu0 0.0
  %1733 = vmatprep.subr.mxu0 0.0
  %1734 = vmatpush1.msra.mxu0 0.0
  %1735 = vmatprep.mubr.f32.mxu0 0.0
  %1736 = vmatmul.mubr.f32.gmra.mrb[0].mxu0 %v1654
  %v1737 = vpop.f32.mrb[0].mxu0
  %v1738 = vadd.f32 0.0, %v1737
  %v1739 = vpop.f32.mrb[0].mxu0
  %1740 = vmatprep.mubr.f32.mxu0 0.0
  %1741 = vmatmul.mubr.f32.gmra.mrb[0].mxu0 %v1657
  %v1742 = vpop.f32.mrb[0].mxu0
  %v1743 = vadd.f32 0.0, %v1742
  %v1744 = vpop.f32.mrb[0].mxu0
  %1745 = vmatprep.mubr.f32.mxu0 0.0
  %1746 = vmatmul.mubr.f32.gmra.mrb[0].mxu0 %v1660
  %v1747 = vpop.f32.mrb[0].mxu0
  %v1748 = vadd.f32 0.0, %v1747
  %v1749 = vpop.f32.mrb[0].mxu0
  %1750 = vmatprep.mubr.f32.mxu0 0.0
  %1751 = vmatmul.mubr.f32.gmra.mrb[0].mxu0 %v1663
  %v1752 = vpop.f32.mrb[0].mxu0
  %v1753 = vadd.f32 0.0, %v1752
  %v1754 = vpop.f32.mrb[0].mxu0
  %1755 = vmatprep.mubr.f32.mxu0 0.0
  %1756 = vmatmul.mubr.f32.gmra.mrb[0].mxu0 %v1666
  %v1757 = vpop.f32.mrb[0].mxu0
  %v1758 = vadd.f32 0.0, %v1757
  %v1759 = vpop.f32.mrb[0].mxu0
  %1760 = vmatprep.mubr.f32.mxu0 0.0
  %1761 = vmatmul.mubr.f32.gmra.mrb[0].mxu0 %v1669
  %v1762 = vpop.f32.mrb[0].mxu0
  %v1763 = vadd.f32 0.0, %v1762
  %v1764 = vpop.f32.mrb[0].mxu0
  %1765 = vdwg.mxu0
  %v1767 = vsel %vm537, %v1738, 0
  %v1770 = vsel %vm537, %v1743, 0
  %v1773 = vsel %vm537, %v1748, 0
  %v1776 = vsel %vm537, %v1753, 0
  %v1779 = vsel %vm537, %v1758, 0
  %v1782 = vsel %vm537, %v1763, 0
  %1784 = vmatprep.subr.mxu0 0.0
  %1785 = vmatpush1.msra.mxu0 %v511
  %1786 = vmatprep.subr.mxu0 0.0
  %1787 = vmatpush1.msra.mxu0 0.0
  %1788 = vmatprep.subr.mxu0 0.0
  %1789 = vmatpush1.msra.mxu0 0.0
  %1790 = vmatprep.subr.mxu0 0.0
  %1791 = vmatpush1.msra.mxu0 0.0
  %1792 = vmatprep.subr.mxu0 0.0
  %1793 = vmatpush1.msra.mxu0 0.0
  %1794 = vmatprep.subr.mxu0 0.0
  %1795 = vmatpush1.msra.mxu0 0.0
  %1796 = vmatprep.subr.mxu0 0.0
  %1797 = vmatpush1.msra.mxu0 0.0
  %1798 = vmatprep.subr.mxu0 0.0
  %1799 = vmatpush1.msra.mxu0 0.0
  %1800 = vmatprep.subr.mxu0 0.0
  %1801 = vmatpush1.msra.mxu0 0.0
  %1802 = vmatprep.subr.mxu0 0.0
  %1803 = vmatpush1.msra.mxu0 0.0
  %1804 = vmatprep.subr.mxu0 0.0
  %1805 = vmatpush1.msra.mxu0 0.0
  %1806 = vmatprep.subr.mxu0 0.0
  %1807 = vmatpush1.msra.mxu0 0.0
  %1808 = vmatprep.subr.mxu0 0.0
  %1809 = vmatpush1.msra.mxu0 0.0
  %1810 = vmatprep.subr.mxu0 0.0
  %1811 = vmatpush1.msra.mxu0 0.0
  %1812 = vmatprep.subr.mxu0 0.0
  %1813 = vmatpush1.msra.mxu0 0.0
  %1814 = vmatprep.subr.mxu0 0.0
  %1815 = vmatpush1.msra.mxu0 0.0
  %1816 = vmatprep.subr.mxu0 0.0
  %1817 = vmatpush1.msra.mxu0 0.0
  %1818 = vmatprep.subr.mxu0 0.0
  %1819 = vmatpush1.msra.mxu0 0.0
  %1820 = vmatprep.subr.mxu0 0.0
  %1821 = vmatpush1.msra.mxu0 0.0
  %1822 = vmatprep.subr.mxu0 0.0
  %1823 = vmatpush1.msra.mxu0 0.0
  %1824 = vmatprep.subr.mxu0 0.0
  %1825 = vmatpush1.msra.mxu0 0.0
  %1826 = vmatprep.subr.mxu0 0.0
  %1827 = vmatpush1.msra.mxu0 0.0
  %1828 = vmatprep.subr.mxu0 0.0
  %1829 = vmatpush1.msra.mxu0 0.0
  %1830 = vmatprep.subr.mxu0 0.0
  %1831 = vmatpush1.msra.mxu0 0.0
  %1832 = vmatprep.subr.mxu0 0.0
  %1833 = vmatpush1.msra.mxu0 0.0
  %1834 = vmatprep.subr.mxu0 0.0
  %1835 = vmatpush1.msra.mxu0 0.0
  %1836 = vmatprep.subr.mxu0 0.0
  %1837 = vmatpush1.msra.mxu0 0.0
  %1838 = vmatprep.subr.mxu0 0.0
  %1839 = vmatpush1.msra.mxu0 0.0
  %1840 = vmatprep.subr.mxu0 0.0
  %1841 = vmatpush1.msra.mxu0 0.0
  %1842 = vmatprep.subr.mxu0 0.0
  %1843 = vmatpush1.msra.mxu0 0.0
  %1844 = vmatprep.subr.mxu0 0.0
  %1845 = vmatpush1.msra.mxu0 0.0
  %1846 = vmatprep.subr.mxu0 0.0
  %1847 = vmatpush1.msra.mxu0 0.0
  %1848 = vmatprep.mubr.f32.mxu0 0.0
  %1849 = vmatmul.mubr.f32.gmra.mrb[0].mxu0 %v1767
  %v1850 = vpop.f32.mrb[0].mxu0
  %v1851 = vadd.f32 0.0, %v1850
  %v1852 = vpop.f32.mrb[0].mxu0
  %1853 = vmatprep.mubr.f32.mxu0 0.0
  %1854 = vmatmul.mubr.f32.gmra.mrb[0].mxu0 %v1770
  %v1855 = vpop.f32.mrb[0].mxu0
  %v1856 = vadd.f32 0.0, %v1855
  %v1857 = vpop.f32.mrb[0].mxu0
  %1858 = vmatprep.mubr.f32.mxu0 0.0
  %1859 = vmatmul.mubr.f32.gmra.mrb[0].mxu0 %v1773
  %v1860 = vpop.f32.mrb[0].mxu0
  %v1861 = vadd.f32 0.0, %v1860
  %v1862 = vpop.f32.mrb[0].mxu0
  %1863 = vmatprep.mubr.f32.mxu0 0.0
  %1864 = vmatmul.mubr.f32.gmra.mrb[0].mxu0 %v1776
  %v1865 = vpop.f32.mrb[0].mxu0
  %v1866 = vadd.f32 0.0, %v1865
  %v1867 = vpop.f32.mrb[0].mxu0
  %1868 = vmatprep.mubr.f32.mxu0 0.0
  %1869 = vmatmul.mubr.f32.gmra.mrb[0].mxu0 %v1779
  %v1870 = vpop.f32.mrb[0].mxu0
  %v1871 = vadd.f32 0.0, %v1870
  %v1872 = vpop.f32.mrb[0].mxu0
  %1873 = vmatprep.mubr.f32.mxu0 0.0
  %1874 = vmatmul.mubr.f32.gmra.mrb[0].mxu0 %v1782
  %v1875 = vpop.f32.mrb[0].mxu0
  %v1876 = vadd.f32 0.0, %v1875
  %v1877 = vpop.f32.mrb[0].mxu0
  %1878 = vdwg.mxu0
  %v1879 = vadd.f32 %v1398, %v1851
  %v1880 = vadd.f32 %v1403, %v1856
  %v1881 = vadd.f32 %v1408, %v1861
  %v1882 = vadd.f32 %v1413, %v1866
  %v1883 = vadd.f32 %v1418, %v1871
  %v1884 = vadd.f32 %v1423, %v1876
  %1885 = vrot.lane.b32.xlu0 %v513, 104
  %v1886 = vpop.permute.xlu0 %1885
  %1887 = vrot.lane.b32.xlu0 %v514, 104
  %v1888 = vpop.permute.xlu0 %1887
  %1889 = vrot.lane.b32.xlu0 %v515, 104
  %v1890 = vpop.permute.xlu0 %1889
  %1891 = vrot.lane.b32.xlu0 %v516, 104
  %v1892 = vpop.permute.xlu0 %1891
  %1893 = vrot.lane.b32.xlu0 %v517, 104
  %v1894 = vpop.permute.xlu0 %1893
  %1895 = vrot.lane.b32.xlu0 %v518, 104
  %v1896 = vpop.permute.xlu0 %1895
  %1897 = vrot.lane.b32.xlu0 %v481, 72
  %v1898 = vpop.permute.xlu0 %1897
  %1899 = vrot.lane.b32.xlu0 %v486, 72
  %v1900 = vpop.permute.xlu0 %1899
  %1901 = vrot.lane.b32.xlu0 %v491, 72
  %v1902 = vpop.permute.xlu0 %1901
  %1903 = vrot.lane.b32.xlu0 %v496, 72
  %v1904 = vpop.permute.xlu0 %1903
  %1905 = vrot.lane.b32.xlu0 %v501, 72
  %v1906 = vpop.permute.xlu0 %1905
  %1907 = vrot.lane.b32.xlu0 %v506, 72
  %v1908 = vpop.permute.xlu0 %1907
  %v1909 = vsel %vm537, %v1886, 0
  %v1911 = vsel %vm537, %v1888, 0
  %v1913 = vsel %vm537, %v1890, 0
  %v1915 = vsel %vm537, %v1892, 0
  %v1917 = vsel %vm537, %v1894, 0
  %v1919 = vsel %vm537, %v1896, 0
  %v1921 = vsel %vm537, %v1898, 0
  %v1923 = vsel %vm537, %v1900, 0
  %v1925 = vsel %vm537, %v1902, 0
  %v1927 = vsel %vm537, %v1904, 0
  %v1929 = vsel %vm537, %v1906, 0
  %v1931 = vsel %vm537, %v1908, 0
  %1933 = vmatprep.subr.mxu0 0.0
  %1934 = vmatpush1.xpose.msra.mxu0 %v1921
  %1935 = vmatprep.subr.mxu0 0.0
  %1936 = vmatpush1.xpose.msra.mxu0 %v1923
  %1937 = vmatprep.subr.mxu0 0.0
  %1938 = vmatpush1.xpose.msra.mxu0 %v1925
  %1939 = vmatprep.subr.mxu0 0.0
  %1940 = vmatpush1.xpose.msra.mxu0 %v1927
  %1941 = vmatprep.subr.mxu0 0.0
  %1942 = vmatpush1.xpose.msra.mxu0 %v1929
  %1943 = vmatprep.subr.mxu0 0.0
  %1944 = vmatpush1.xpose.msra.mxu0 %v1931
  %1945 = vmatprep.subr.mxu0 0.0
  %1946 = vmatpush1.xpose.msra.mxu0 0.0
  %1947 = vmatprep.subr.mxu0 0.0
  %1948 = vmatpush1.xpose.msra.mxu0 0.0
  %1949 = vmatprep.subr.mxu0 0.0
  %1950 = vmatpush1.xpose.msra.mxu0 0.0
  %1951 = vmatprep.subr.mxu0 0.0
  %1952 = vmatpush1.xpose.msra.mxu0 0.0
  %1953 = vmatprep.subr.mxu0 0.0
  %1954 = vmatpush1.xpose.msra.mxu0 0.0
  %1955 = vmatprep.subr.mxu0 0.0
  %1956 = vmatpush1.xpose.msra.mxu0 0.0
  %1957 = vmatprep.subr.mxu0 0.0
  %1958 = vmatpush1.xpose.msra.mxu0 0.0
  %1959 = vmatprep.subr.mxu0 0.0
  %1960 = vmatpush1.xpose.msra.mxu0 0.0
  %1961 = vmatprep.subr.mxu0 0.0
  %1962 = vmatpush1.xpose.msra.mxu0 0.0
  %1963 = vmatprep.subr.mxu0 0.0
  %1964 = vmatpush1.xpose.msra.mxu0 0.0
  %1965 = vmatprep.subr.mxu0 0.0
  %1966 = vmatpush1.xpose.msra.mxu0 0.0
  %1967 = vmatprep.subr.mxu0 0.0
  %1968 = vmatpush1.xpose.msra.mxu0 0.0
  %1969 = vmatprep.subr.mxu0 0.0
  %1970 = vmatpush1.xpose.msra.mxu0 0.0
  %1971 = vmatprep.subr.mxu0 0.0
  %1972 = vmatpush1.xpose.msra.mxu0 0.0
  %1973 = vmatprep.subr.mxu0 0.0
  %1974 = vmatpush1.xpose.msra.mxu0 0.0
  %1975 = vmatprep.subr.mxu0 0.0
  %1976 = vmatpush1.xpose.msra.mxu0 0.0
  %1977 = vmatprep.subr.mxu0 0.0
  %1978 = vmatpush1.xpose.msra.mxu0 0.0
  %1979 = vmatprep.subr.mxu0 0.0
  %1980 = vmatpush1.xpose.msra.mxu0 0.0
  %1981 = vmatprep.subr.mxu0 0.0
  %1982 = vmatpush1.xpose.msra.mxu0 0.0
  %1983 = vmatprep.subr.mxu0 0.0
  %1984 = vmatpush1.xpose.msra.mxu0 0.0
  %1985 = vmatprep.subr.mxu0 0.0
  %1986 = vmatpush1.xpose.msra.mxu0 0.0
  %1987 = vmatprep.subr.mxu0 0.0
  %1988 = vmatpush1.xpose.msra.mxu0 0.0
  %1989 = vmatprep.subr.mxu0 0.0
  %1990 = vmatpush1.xpose.msra.mxu0 0.0
  %1991 = vmatprep.subr.mxu0 0.0
  %1992 = vmatpush1.xpose.msra.mxu0 0.0
  %1993 = vmatprep.subr.mxu0 0.0
  %1994 = vmatpush1.xpose.msra.mxu0 0.0
  %1995 = vmatprep.subr.mxu0 0.0
  %1996 = vmatpush1.xpose.msra.mxu0 0.0
  %1997 = vmatprep.mubr.f32.mxu0 0.0
  %1998 = vmatmul.mubr.f32.gmra.mrb[0].mxu0 %v1909
  %v1999 = vpop.f32.mrb[0].mxu0
  %v2000 = vadd.f32 %v280, %v1999
  %v2001 = vpop.f32.mrb[0].mxu0
  %2002 = vmatprep.mubr.f32.mxu0 0.0
  %2003 = vmatmul.mubr.f32.gmra.mrb[0].mxu0 %v1911
  %v2004 = vpop.f32.mrb[0].mxu0
  %v2005 = vadd.f32 %v281, %v2004
  %v2006 = vpop.f32.mrb[0].mxu0
  %2007 = vmatprep.mubr.f32.mxu0 0.0
  %2008 = vmatmul.mubr.f32.gmra.mrb[0].mxu0 %v1913
  %v2009 = vpop.f32.mrb[0].mxu0
  %v2010 = vadd.f32 %v282, %v2009
  %v2011 = vpop.f32.mrb[0].mxu0
  %2012 = vmatprep.mubr.f32.mxu0 0.0
  %2013 = vmatmul.mubr.f32.gmra.mrb[0].mxu0 %v1915
  %v2014 = vpop.f32.mrb[0].mxu0
  %v2015 = vadd.f32 %v283, %v2014
  %v2016 = vpop.f32.mrb[0].mxu0
  %2017 = vmatprep.mubr.f32.mxu0 0.0
  %2018 = vmatmul.mubr.f32.gmra.mrb[0].mxu0 %v1917
  %v2019 = vpop.f32.mrb[0].mxu0
  %v2020 = vadd.f32 %v284, %v2019
  %v2021 = vpop.f32.mrb[0].mxu0
  %2022 = vmatprep.mubr.f32.mxu0 0.0
  %2023 = vmatmul.mubr.f32.gmra.mrb[0].mxu0 %v1919
  %v2024 = vpop.f32.mrb[0].mxu0
  %v2025 = vadd.f32 %v285, %v2024
  %v2026 = vpop.f32.mrb[0].mxu0
  %2027 = vdwg.mxu0
  %v2028 = vsel %vm65, %v2000, -inf
  %2029 = vmax.xlane.f32.xlu0 %v2028
  %v2030 = vpop.xlane.xlu0 %2029
  %v2031 = vsel %vm65, %v2005, -inf
  %2032 = vmax.xlane.f32.xlu0 %v2031
  %v2033 = vpop.xlane.xlu0 %2032
  %v2034 = vsel %vm65, %v2010, -inf
  %2035 = vmax.xlane.f32.xlu0 %v2034
  %v2036 = vpop.xlane.xlu0 %2035
  %v2037 = vsel %vm65, %v2015, -inf
  %2038 = vmax.xlane.f32.xlu0 %v2037
  %v2039 = vpop.xlane.xlu0 %2038
  %v2040 = vsel %vm65, %v2020, -inf
  %2041 = vmax.xlane.f32.xlu0 %v2040
  %v2042 = vpop.xlane.xlu0 %2041
  %v2043 = vsel %vm65, %v2025, -inf
  %2044 = vmax.xlane.f32.xlu0 %v2043
  %v2045 = vpop.xlane.xlu0 %2044
  %v2046 = vsub.f32 %v2000, %v2030
  %v2047 = vsub.f32 %v2005, %v2033
  %v2048 = vsub.f32 %v2010, %v2036
  %v2049 = vsub.f32 %v2015, %v2039
  %v2050 = vsub.f32 %v2020, %v2042
  %v2051 = vsub.f32 %v2025, %v2045
  %v2052 = vmul.f32 %v2046, 1.442695
  %v2053 = vpow.pop %v2052
  %v2054 = vmul.f32 %v2047, 1.442695
  %v2055 = vpow.pop %v2054
  %v2056 = vmul.f32 %v2048, 1.442695
  %v2057 = vpow.pop %v2056
  %v2058 = vmul.f32 %v2049, 1.442695
  %v2059 = vpow.pop %v2058
  %v2060 = vmul.f32 %v2050, 1.442695
  %v2061 = vpow.pop %v2060
  %v2062 = vmul.f32 %v2051, 1.442695
  %v2063 = vpow.pop %v2062
  %v2064 = vsel %vm65, %v2053, 0.0
  %2065 = vadd.xlane.f32.xlu0 %v2064
  %v2066 = vpop.xlane.xlu0 %2065
  %v2067 = vsel %vm65, %v2055, 0.0
  %2068 = vadd.xlane.f32.xlu0 %v2067
  %v2069 = vpop.xlane.xlu0 %2068
  %v2070 = vsel %vm65, %v2057, 0.0
  %2071 = vadd.xlane.f32.xlu0 %v2070
  %v2072 = vpop.xlane.xlu0 %2071
  %v2073 = vsel %vm65, %v2059, 0.0
  %2074 = vadd.xlane.f32.xlu0 %v2073
  %v2075 = vpop.xlane.xlu0 %2074
  %v2076 = vsel %vm65, %v2061, 0.0
  %2077 = vadd.xlane.f32.xlu0 %v2076
  %v2078 = vpop.xlane.xlu0 %2077
  %v2079 = vsel %vm65, %v2063, 0.0
  %2080 = vadd.xlane.f32.xlu0 %v2079
  %v2081 = vpop.xlane.xlu0 %2080
  %v2082 = vrcp.pop %v2066
  %v2083 = vrcp.pop %v2069
  %v2084 = vrcp.pop %v2072
  %v2085 = vrcp.pop %v2075
  %v2086 = vrcp.pop %v2078
  %v2087 = vrcp.pop %v2081
  %v2088 = vmul.f32 %v2053, %v2082
  %v2089 = vmul.f32 %v2055, %v2083
  %v2090 = vmul.f32 %v2057, %v2084
  %v2091 = vmul.f32 %v2059, %v2085
  %v2092 = vmul.f32 %v2061, %v2086
  %v2093 = vmul.f32 %v2063, %v2087
  %2094 = vrot.lane.b32.xlu0 %v481, 40
  %v2095 = vpop.permute.xlu0 %2094
  %2096 = vrot.lane.b32.xlu0 %v486, 40
  %v2097 = vpop.permute.xlu0 %2096
  %2098 = vrot.lane.b32.xlu0 %v491, 40
  %v2099 = vpop.permute.xlu0 %2098
  %2100 = vrot.lane.b32.xlu0 %v496, 40
  %v2101 = vpop.permute.xlu0 %2100
  %2102 = vrot.lane.b32.xlu0 %v501, 40
  %v2103 = vpop.permute.xlu0 %2102
  %2104 = vrot.lane.b32.xlu0 %v506, 40
  %v2105 = vpop.permute.xlu0 %2104
  %v2113 = vsel %vm65, %v2088, 0
  %v2116 = vsel %vm65, %v2089, 0
  %v2119 = vsel %vm65, %v2090, 0
  %v2122 = vsel %vm65, %v2091, 0
  %v2125 = vsel %vm65, %v2092, 0
  %v2128 = vsel %vm65, %v2093, 0
  %2130 = vmatprep.subr.mxu0 0.0
  %2131 = vmatpush1.msra.mxu0 %v2095
  %2132 = vmatprep.subr.mxu0 0.0
  %2133 = vmatpush1.msra.mxu0 %v2097
  %2134 = vmatprep.subr.mxu0 0.0
  %2135 = vmatpush1.msra.mxu0 %v2099
  %2136 = vmatprep.subr.mxu0 0.0
  %2137 = vmatpush1.msra.mxu0 %v2101
  %2138 = vmatprep.subr.mxu0 0.0
  %2139 = vmatpush1.msra.mxu0 %v2103
  %2140 = vmatprep.subr.mxu0 0.0
  %2141 = vmatpush1.msra.mxu0 %v2105
  %2142 = vmatprep.subr.mxu0 0.0
  %2143 = vmatpush1.msra.mxu0 0.0
  %2144 = vmatprep.subr.mxu0 0.0
  %2145 = vmatpush1.msra.mxu0 0.0
  %2146 = vmatprep.subr.mxu0 0.0
  %2147 = vmatpush1.msra.mxu0 0.0
  %2148 = vmatprep.subr.mxu0 0.0
  %2149 = vmatpush1.msra.mxu0 0.0
  %2150 = vmatprep.subr.mxu0 0.0
  %2151 = vmatpush1.msra.mxu0 0.0
  %2152 = vmatprep.subr.mxu0 0.0
  %2153 = vmatpush1.msra.mxu0 0.0
  %2154 = vmatprep.subr.mxu0 0.0
  %2155 = vmatpush1.msra.mxu0 0.0
  %2156 = vmatprep.subr.mxu0 0.0
  %2157 = vmatpush1.msra.mxu0 0.0
  %2158 = vmatprep.subr.mxu0 0.0
  %2159 = vmatpush1.msra.mxu0 0.0
  %2160 = vmatprep.subr.mxu0 0.0
  %2161 = vmatpush1.msra.mxu0 0.0
  %2162 = vmatprep.subr.mxu0 0.0
  %2163 = vmatpush1.msra.mxu0 0.0
  %2164 = vmatprep.subr.mxu0 0.0
  %2165 = vmatpush1.msra.mxu0 0.0
  %2166 = vmatprep.subr.mxu0 0.0
  %2167 = vmatpush1.msra.mxu0 0.0
  %2168 = vmatprep.subr.mxu0 0.0
  %2169 = vmatpush1.msra.mxu0 0.0
  %2170 = vmatprep.subr.mxu0 0.0
  %2171 = vmatpush1.msra.mxu0 0.0
  %2172 = vmatprep.subr.mxu0 0.0
  %2173 = vmatpush1.msra.mxu0 0.0
  %2174 = vmatprep.subr.mxu0 0.0
  %2175 = vmatpush1.msra.mxu0 0.0
  %2176 = vmatprep.subr.mxu0 0.0
  %2177 = vmatpush1.msra.mxu0 0.0
  %2178 = vmatprep.subr.mxu0 0.0
  %2179 = vmatpush1.msra.mxu0 0.0
  %2180 = vmatprep.subr.mxu0 0.0
  %2181 = vmatpush1.msra.mxu0 0.0
  %2182 = vmatprep.subr.mxu0 0.0
  %2183 = vmatpush1.msra.mxu0 0.0
  %2184 = vmatprep.subr.mxu0 0.0
  %2185 = vmatpush1.msra.mxu0 0.0
  %2186 = vmatprep.subr.mxu0 0.0
  %2187 = vmatpush1.msra.mxu0 0.0
  %2188 = vmatprep.subr.mxu0 0.0
  %2189 = vmatpush1.msra.mxu0 0.0
  %2190 = vmatprep.subr.mxu0 0.0
  %2191 = vmatpush1.msra.mxu0 0.0
  %2192 = vmatprep.subr.mxu0 0.0
  %2193 = vmatpush1.msra.mxu0 0.0
  %2194 = vmatprep.mubr.f32.mxu0 0.0
  %2195 = vmatmul.mubr.f32.gmra.mrb[0].mxu0 %v2113
  %v2196 = vpop.f32.mrb[0].mxu0
  %v2197 = vadd.f32 0.0, %v2196
  %v2198 = vpop.f32.mrb[0].mxu0
  %2199 = vmatprep.mubr.f32.mxu0 0.0
  %2200 = vmatmul.mubr.f32.gmra.mrb[0].mxu0 %v2116
  %v2201 = vpop.f32.mrb[0].mxu0
  %v2202 = vadd.f32 0.0, %v2201
  %v2203 = vpop.f32.mrb[0].mxu0
  %2204 = vmatprep.mubr.f32.mxu0 0.0
  %2205 = vmatmul.mubr.f32.gmra.mrb[0].mxu0 %v2119
  %v2206 = vpop.f32.mrb[0].mxu0
  %v2207 = vadd.f32 0.0, %v2206
  %v2208 = vpop.f32.mrb[0].mxu0
  %2209 = vmatprep.mubr.f32.mxu0 0.0
  %2210 = vmatmul.mubr.f32.gmra.mrb[0].mxu0 %v2122
  %v2211 = vpop.f32.mrb[0].mxu0
  %v2212 = vadd.f32 0.0, %v2211
  %v2213 = vpop.f32.mrb[0].mxu0
  %2214 = vmatprep.mubr.f32.mxu0 0.0
  %2215 = vmatmul.mubr.f32.gmra.mrb[0].mxu0 %v2125
  %v2216 = vpop.f32.mrb[0].mxu0
  %v2217 = vadd.f32 0.0, %v2216
  %v2218 = vpop.f32.mrb[0].mxu0
  %2219 = vmatprep.mubr.f32.mxu0 0.0
  %2220 = vmatmul.mubr.f32.gmra.mrb[0].mxu0 %v2128
  %v2221 = vpop.f32.mrb[0].mxu0
  %v2222 = vadd.f32 0.0, %v2221
  %v2223 = vpop.f32.mrb[0].mxu0
  %2224 = vdwg.mxu0
  %v2226 = vsel %vm537, %v2197, 0
  %v2229 = vsel %vm537, %v2202, 0
  %v2232 = vsel %vm537, %v2207, 0
  %v2235 = vsel %vm537, %v2212, 0
  %v2238 = vsel %vm537, %v2217, 0
  %v2241 = vsel %vm537, %v2222, 0
  %2243 = vmatprep.subr.mxu0 0.0
  %2244 = vmatpush1.msra.mxu0 %v512
  %2245 = vmatprep.subr.mxu0 0.0
  %2246 = vmatpush1.msra.mxu0 0.0
  %2247 = vmatprep.subr.mxu0 0.0
  %2248 = vmatpush1.msra.mxu0 0.0
  %2249 = vmatprep.subr.mxu0 0.0
  %2250 = vmatpush1.msra.mxu0 0.0
  %2251 = vmatprep.subr.mxu0 0.0
  %2252 = vmatpush1.msra.mxu0 0.0
  %2253 = vmatprep.subr.mxu0 0.0
  %2254 = vmatpush1.msra.mxu0 0.0
  %2255 = vmatprep.subr.mxu0 0.0
  %2256 = vmatpush1.msra.mxu0 0.0
  %2257 = vmatprep.subr.mxu0 0.0
  %2258 = vmatpush1.msra.mxu0 0.0
  %2259 = vmatprep.subr.mxu0 0.0
  %2260 = vmatpush1.msra.mxu0 0.0
  %2261 = vmatprep.subr.mxu0 0.0
  %2262 = vmatpush1.msra.mxu0 0.0
  %2263 = vmatprep.subr.mxu0 0.0
  %2264 = vmatpush1.msra.mxu0 0.0
  %2265 = vmatprep.subr.mxu0 0.0
  %2266 = vmatpush1.msra.mxu0 0.0
  %2267 = vmatprep.subr.mxu0 0.0
  %2268 = vmatpush1.msra.mxu0 0.0
  %2269 = vmatprep.subr.mxu0 0.0
  %2270 = vmatpush1.msra.mxu0 0.0
  %2271 = vmatprep.subr.mxu0 0.0
  %2272 = vmatpush1.msra.mxu0 0.0
  %2273 = vmatprep.subr.mxu0 0.0
  %2274 = vmatpush1.msra.mxu0 0.0
  %2275 = vmatprep.subr.mxu0 0.0
  %2276 = vmatpush1.msra.mxu0 0.0
  %2277 = vmatprep.subr.mxu0 0.0
  %2278 = vmatpush1.msra.mxu0 0.0
  %2279 = vmatprep.subr.mxu0 0.0
  %2280 = vmatpush1.msra.mxu0 0.0
  %2281 = vmatprep.subr.mxu0 0.0
  %2282 = vmatpush1.msra.mxu0 0.0
  %2283 = vmatprep.subr.mxu0 0.0
  %2284 = vmatpush1.msra.mxu0 0.0
  %2285 = vmatprep.subr.mxu0 0.0
  %2286 = vmatpush1.msra.mxu0 0.0
  %2287 = vmatprep.subr.mxu0 0.0
  %2288 = vmatpush1.msra.mxu0 0.0
  %2289 = vmatprep.subr.mxu0 0.0
  %2290 = vmatpush1.msra.mxu0 0.0
  %2291 = vmatprep.subr.mxu0 0.0
  %2292 = vmatpush1.msra.mxu0 0.0
  %2293 = vmatprep.subr.mxu0 0.0
  %2294 = vmatpush1.msra.mxu0 0.0
  %2295 = vmatprep.subr.mxu0 0.0
  %2296 = vmatpush1.msra.mxu0 0.0
  %2297 = vmatprep.subr.mxu0 0.0
  %2298 = vmatpush1.msra.mxu0 0.0
  %2299 = vmatprep.subr.mxu0 0.0
  %2300 = vmatpush1.msra.mxu0 0.0
  %2301 = vmatprep.subr.mxu0 0.0
  %2302 = vmatpush1.msra.mxu0 0.0
  %2303 = vmatprep.subr.mxu0 0.0
  %2304 = vmatpush1.msra.mxu0 0.0
  %2305 = vmatprep.subr.mxu0 0.0
  %2306 = vmatpush1.msra.mxu0 0.0
  %2307 = vmatprep.mubr.f32.mxu0 0.0
  %2308 = vmatmul.mubr.f32.gmra.mrb[0].mxu0 %v2226
  %v2309 = vpop.f32.mrb[0].mxu0
  %v2310 = vadd.f32 0.0, %v2309
  %v2311 = vpop.f32.mrb[0].mxu0
  %2312 = vmatprep.mubr.f32.mxu0 0.0
  %2313 = vmatmul.mubr.f32.gmra.mrb[0].mxu0 %v2229
  %v2314 = vpop.f32.mrb[0].mxu0
  %v2315 = vadd.f32 0.0, %v2314
  %v2316 = vpop.f32.mrb[0].mxu0
  %2317 = vmatprep.mubr.f32.mxu0 0.0
  %2318 = vmatmul.mubr.f32.gmra.mrb[0].mxu0 %v2232
  %v2319 = vpop.f32.mrb[0].mxu0
  %v2320 = vadd.f32 0.0, %v2319
  %v2321 = vpop.f32.mrb[0].mxu0
  %2322 = vmatprep.mubr.f32.mxu0 0.0
  %2323 = vmatmul.mubr.f32.gmra.mrb[0].mxu0 %v2235
  %v2324 = vpop.f32.mrb[0].mxu0
  %v2325 = vadd.f32 0.0, %v2324
  %v2326 = vpop.f32.mrb[0].mxu0
  %2327 = vmatprep.mubr.f32.mxu0 0.0
  %2328 = vmatmul.mubr.f32.gmra.mrb[0].mxu0 %v2238
  %v2329 = vpop.f32.mrb[0].mxu0
  %v2330 = vadd.f32 0.0, %v2329
  %v2331 = vpop.f32.mrb[0].mxu0
  %2332 = vmatprep.mubr.f32.mxu0 0.0
  %2333 = vmatmul.mubr.f32.gmra.mrb[0].mxu0 %v2241
  %v2334 = vpop.f32.mrb[0].mxu0
  %v2335 = vadd.f32 0.0, %v2334
  %v2336 = vpop.f32.mrb[0].mxu0
  %2337 = vdwg.mxu0
  %v2338 = vadd.f32 %v1879, %v2310
  %v2339 = vadd.f32 %v1880, %v2315
  %v2340 = vadd.f32 %v1881, %v2320
  %v2341 = vadd.f32 %v1882, %v2325
  %v2342 = vadd.f32 %v1883, %v2330
  %v2343 = vadd.f32 %v1884, %v2335
  %v2344 = vadd.f32 %v274, %v2338
  %v2345 = vadd.f32 %v275, %v2339
  %v2346 = vadd.f32 %v276, %v2340
  %v2347 = vadd.f32 %v277, %v2341
  %v2348 = vadd.f32 %v278, %v2342
  %v2349 = vadd.f32 %v279, %v2343
  %v2350 = vlaneseq
  %v2351 = vshrl.u32 %v2350, 7
  %v2352 = vsub.s32 2, %v2351
  %v2353 = vrot.slane %v286, %v2352
  %v2354 = vadd.f32 %v2344, %v2353
  %v2355 = vadd.f32 %v2345, %v2353
  %v2356 = vadd.f32 %v2346, %v2353
  %v2357 = vadd.f32 %v2347, %v2353
  %v2358 = vadd.f32 %v2348, %v2353
  %v2359 = vadd.f32 %v2349, %v2353
  %v2360 = vsel %vm180, %v2354, 0.0
  %2361 = vadd.xlane.f32.xlu0 %v2360
  %v2362 = vpop.xlane.xlu0 %2361
  %v2363 = vsel %vm180, %v2355, 0.0
  %2364 = vadd.xlane.f32.xlu0 %v2363
  %v2365 = vpop.xlane.xlu0 %2364
  %v2366 = vsel %vm180, %v2356, 0.0
  %2367 = vadd.xlane.f32.xlu0 %v2366
  %v2368 = vpop.xlane.xlu0 %2367
  %v2369 = vsel %vm180, %v2357, 0.0
  %2370 = vadd.xlane.f32.xlu0 %v2369
  %v2371 = vpop.xlane.xlu0 %2370
  %v2372 = vsel %vm180, %v2358, 0.0
  %2373 = vadd.xlane.f32.xlu0 %v2372
  %v2374 = vpop.xlane.xlu0 %2373
  %v2375 = vsel %vm180, %v2359, 0.0
  %2376 = vadd.xlane.f32.xlu0 %v2375
  %v2377 = vpop.xlane.xlu0 %2376
  %v2378 = vmul.f32 %v2362, %v199
  %v2379 = vmul.f32 %v2365, %v199
  %v2380 = vmul.f32 %v2368, %v199
  %v2381 = vmul.f32 %v2371, %v199
  %v2382 = vmul.f32 %v2374, %v199
  %v2383 = vmul.f32 %v2377, %v199
  %v2384 = vsub.f32 %v2354, %v2378
  %v2385 = vsub.f32 %v2355, %v2379
  %v2386 = vsub.f32 %v2356, %v2380
  %v2387 = vsub.f32 %v2357, %v2381
  %v2388 = vsub.f32 %v2358, %v2382
  %v2389 = vsub.f32 %v2359, %v2383
  %v2390 = vmul.f32 %v2384, %v2384
  %v2391 = vmul.f32 %v2385, %v2385
  %v2392 = vmul.f32 %v2386, %v2386
  %v2393 = vmul.f32 %v2387, %v2387
  %v2394 = vmul.f32 %v2388, %v2388
  %v2395 = vmul.f32 %v2389, %v2389
  %v2396 = vsel %vm180, %v2390, 0.0
  %2397 = vadd.xlane.f32.xlu0 %v2396
  %v2398 = vpop.xlane.xlu0 %2397
  %v2399 = vsel %vm180, %v2391, 0.0
  %2400 = vadd.xlane.f32.xlu0 %v2399
  %v2401 = vpop.xlane.xlu0 %2400
  %v2402 = vsel %vm180, %v2392, 0.0
  %2403 = vadd.xlane.f32.xlu0 %v2402
  %v2404 = vpop.xlane.xlu0 %2403
  %v2405 = vsel %vm180, %v2393, 0.0
  %2406 = vadd.xlane.f32.xlu0 %v2405
  %v2407 = vpop.xlane.xlu0 %2406
  %v2408 = vsel %vm180, %v2394, 0.0
  %2409 = vadd.xlane.f32.xlu0 %v2408
  %v2410 = vpop.xlane.xlu0 %2409
  %v2411 = vsel %vm180, %v2395, 0.0
  %2412 = vadd.xlane.f32.xlu0 %v2411
  %v2413 = vpop.xlane.xlu0 %2412
  %v2414 = vmul.f32 %v2398, %v199
  %v2415 = vmul.f32 %v2401, %v199
  %v2416 = vmul.f32 %v2404, %v199
  %v2417 = vmul.f32 %v2407, %v199
  %v2418 = vmul.f32 %v2410, %v199
  %v2419 = vmul.f32 %v2413, %v199
  %v2420 = vadd.f32 %v2414, 1e-05
  %v2421 = vadd.f32 %v2415, 1e-05
  %v2422 = vadd.f32 %v2416, 1e-05
  %v2423 = vadd.f32 %v2417, 1e-05
  %v2424 = vadd.f32 %v2418, 1e-05
  %v2425 = vadd.f32 %v2419, 1e-05
  %v2426 = vrsqrt.pop %v2420
  %v2427 = vrsqrt.pop %v2421
  %v2428 = vrsqrt.pop %v2422
  %v2429 = vrsqrt.pop %v2423
  %v2430 = vrsqrt.pop %v2424
  %v2431 = vrsqrt.pop %v2425
  %v2432 = vmul.f32 %v2384, %v2426
  %v2433 = vmul.f32 %v2385, %v2427
  %v2434 = vmul.f32 %v2386, %v2428
  %v2435 = vmul.f32 %v2387, %v2429
  %v2436 = vmul.f32 %v2388, %v2430
  %v2437 = vmul.f32 %v2389, %v2431
  %v2438 = vlaneseq
  %v2439 = vshrl.u32 %v2438, 7
  %v2440 = vsub.s32 3, %v2439
  %v2441 = vrot.slane %v286, %v2440
  %v2442 = vmul.f32 %v2432, %v2441
  %v2443 = vmul.f32 %v2433, %v2441
  %v2444 = vmul.f32 %v2434, %v2441
  %v2445 = vmul.f32 %v2435, %v2441
  %v2446 = vmul.f32 %v2436, %v2441
  %v2447 = vmul.f32 %v2437, %v2441
  %v2448 = vlaneseq
  %v2449 = vshrl.u32 %v2448, 7
  %v2450 = vsub.s32 4, %v2449
  %v2451 = vrot.slane %v286, %v2450
  %v2452 = vadd.f32 %v2442, %v2451
  %v2453 = vadd.f32 %v2443, %v2451
  %v2454 = vadd.f32 %v2444, %v2451
  %v2455 = vadd.f32 %v2445, %v2451
  %v2456 = vadd.f32 %v2446, %v2451
  %v2457 = vadd.f32 %v2447, %v2451
  %v2458 = vld [vmem:[%s9] sm:$0xff]
  %v2459 = vld [vmem:[%s9 + $0x8] sm:$0xff]
  %v2460 = vld [vmem:[%s9 + $0x10] sm:$0xff]
  %v2461 = vld [vmem:[%s9 + $0x18] sm:$0xff]
  %v2462 = vld [vmem:[%s10] sm:$0x1]
  %v2464 = vlaneseq
  %v2465 = vshrl.u32 %v2464, 7
  %v2466 = vsub.s32 0, %v2465
  %v2467 = vrot.slane %v2462, %v2466
  %v2470 = vsel %vm180, %v2452, 0
  %v2473 = vsel %vm180, %v2453, 0
  %v2476 = vsel %vm180, %v2454, 0
  %v2479 = vsel %vm180, %v2455, 0
  %v2482 = vsel %vm180, %v2456, 0
  %v2485 = vsel %vm180, %v2457, 0
  %2487 = vmatprep.subr.mxu0 0.0
  %2488 = vmatpush1.msra.mxu0 %v2458
  %2489 = vmatprep.subr.mxu0 0.0
  %2490 = vmatpush1.msra.mxu0 %v2459
  %2491 = vmatprep.subr.mxu0 0.0
  %2492 = vmatpush1.msra.mxu0 %v2460
  %2493 = vmatprep.subr.mxu0 0.0
  %2494 = vmatpush1.msra.mxu0 %v2461
  %2495 = vmatprep.subr.mxu0 0.0
  %2496 = vmatpush1.msra.mxu0 0.0
  %2497 = vmatprep.subr.mxu0 0.0
  %2498 = vmatpush1.msra.mxu0 0.0
  %2499 = vmatprep.subr.mxu0 0.0
  %2500 = vmatpush1.msra.mxu0 0.0
  %2501 = vmatprep.subr.mxu0 0.0
  %2502 = vmatpush1.msra.mxu0 0.0
  %2503 = vmatprep.subr.mxu0 0.0
  %2504 = vmatpush1.msra.mxu0 0.0
  %2505 = vmatprep.subr.mxu0 0.0
  %2506 = vmatpush1.msra.mxu0 0.0
  %2507 = vmatprep.subr.mxu0 0.0
  %2508 = vmatpush1.msra.mxu0 0.0
  %2509 = vmatprep.subr.mxu0 0.0
  %2510 = vmatpush1.msra.mxu0 0.0
  %2511 = vmatprep.subr.mxu0 0.0
  %2512 = vmatpush1.msra.mxu0 0.0
  %2513 = vmatprep.subr.mxu0 0.0
  %2514 = vmatpush1.msra.mxu0 0.0
  %2515 = vmatprep.subr.mxu0 0.0
  %2516 = vmatpush1.msra.mxu0 0.0
  %2517 = vmatprep.subr.mxu0 0.0
  %2518 = vmatpush1.msra.mxu0 0.0
  %2519 = vmatprep.subr.mxu0 0.0
  %2520 = vmatpush1.msra.mxu0 0.0
  %2521 = vmatprep.subr.mxu0 0.0
  %2522 = vmatpush1.msra.mxu0 0.0
  %2523 = vmatprep.subr.mxu0 0.0
  %2524 = vmatpush1.msra.mxu0 0.0
  %2525 = vmatprep.subr.mxu0 0.0
  %2526 = vmatpush1.msra.mxu0 0.0
  %2527 = vmatprep.subr.mxu0 0.0
  %2528 = vmatpush1.msra.mxu0 0.0
  %2529 = vmatprep.subr.mxu0 0.0
  %2530 = vmatpush1.msra.mxu0 0.0
  %2531 = vmatprep.subr.mxu0 0.0
  %2532 = vmatpush1.msra.mxu0 0.0
  %2533 = vmatprep.subr.mxu0 0.0
  %2534 = vmatpush1.msra.mxu0 0.0
  %2535 = vmatprep.subr.mxu0 0.0
  %2536 = vmatpush1.msra.mxu0 0.0
  %2537 = vmatprep.subr.mxu0 0.0
  %2538 = vmatpush1.msra.mxu0 0.0
  %2539 = vmatprep.subr.mxu0 0.0
  %2540 = vmatpush1.msra.mxu0 0.0
  %2541 = vmatprep.subr.mxu0 0.0
  %2542 = vmatpush1.msra.mxu0 0.0
  %2543 = vmatprep.subr.mxu0 0.0
  %2544 = vmatpush1.msra.mxu0 0.0
  %2545 = vmatprep.subr.mxu0 0.0
  %2546 = vmatpush1.msra.mxu0 0.0
  %2547 = vmatprep.subr.mxu0 0.0
  %2548 = vmatpush1.msra.mxu0 0.0
  %2549 = vmatprep.subr.mxu0 0.0
  %2550 = vmatpush1.msra.mxu0 0.0
  %2551 = vmatprep.mubr.f32.mxu0 0.0
  %2552 = vmatmul.mubr.f32.gmra.mrb[0].mxu0 %v2470
  %v2553 = vpop.f32.mrb[0].mxu0
  %v2554 = vadd.f32 %v2467, %v2553
  %v2555 = vpop.f32.mrb[0].mxu0
  %2556 = vmatprep.mubr.f32.mxu0 0.0
  %2557 = vmatmul.mubr.f32.gmra.mrb[0].mxu0 %v2473
  %v2558 = vpop.f32.mrb[0].mxu0
  %v2559 = vadd.f32 %v2467, %v2558
  %v2560 = vpop.f32.mrb[0].mxu0
  %2561 = vmatprep.mubr.f32.mxu0 0.0
  %2562 = vmatmul.mubr.f32.gmra.mrb[0].mxu0 %v2476
  %v2563 = vpop.f32.mrb[0].mxu0
  %v2564 = vadd.f32 %v2467, %v2563
  %v2565 = vpop.f32.mrb[0].mxu0
  %2566 = vmatprep.mubr.f32.mxu0 0.0
  %2567 = vmatmul.mubr.f32.gmra.mrb[0].mxu0 %v2479
  %v2568 = vpop.f32.mrb[0].mxu0
  %v2569 = vadd.f32 %v2467, %v2568
  %v2570 = vpop.f32.mrb[0].mxu0
  %2571 = vmatprep.mubr.f32.mxu0 0.0
  %2572 = vmatmul.mubr.f32.gmra.mrb[0].mxu0 %v2482
  %v2573 = vpop.f32.mrb[0].mxu0
  %v2574 = vadd.f32 %v2467, %v2573
  %v2575 = vpop.f32.mrb[0].mxu0
  %2576 = vmatprep.mubr.f32.mxu0 0.0
  %2577 = vmatmul.mubr.f32.gmra.mrb[0].mxu0 %v2485
  %v2578 = vpop.f32.mrb[0].mxu0
  %v2579 = vadd.f32 %v2467, %v2578
  %v2580 = vpop.f32.mrb[0].mxu0
  %2581 = vdwg.mxu0
  %v2582 = vmul.f32 %v2554, -1.702
  %v2583 = vmul.f32 %v2559, -1.702
  %v2584 = vmul.f32 %v2564, -1.702
  %v2585 = vmul.f32 %v2569, -1.702
  %v2586 = vmul.f32 %v2574, -1.702
  %v2587 = vmul.f32 %v2579, -1.702
  %v2588 = vmul.f32 %v2582, 1.442695
  %v2589 = vpow.pop %v2588
  %v2590 = vmul.f32 %v2583, 1.442695
  %v2591 = vpow.pop %v2590
  %v2592 = vmul.f32 %v2584, 1.442695
  %v2593 = vpow.pop %v2592
  %v2594 = vmul.f32 %v2585, 1.442695
  %v2595 = vpow.pop %v2594
  %v2596 = vmul.f32 %v2586, 1.442695
  %v2597 = vpow.pop %v2596
  %v2598 = vmul.f32 %v2587, 1.442695
  %v2599 = vpow.pop %v2598
  %v2600 = vadd.f32 %v2589, 1.0
  %v2601 = vadd.f32 %v2591, 1.0
  %v2602 = vadd.f32 %v2593, 1.0
  %v2603 = vadd.f32 %v2595, 1.0
  %v2604 = vadd.f32 %v2597, 1.0
  %v2605 = vadd.f32 %v2599, 1.0
  %v2606 = vrcp.pop %v2600
  %v2607 = vrcp.pop %v2601
  %v2608 = vrcp.pop %v2602
  %v2609 = vrcp.pop %v2603
  %v2610 = vrcp.pop %v2604
  %v2611 = vrcp.pop %v2605
  %v2612 = vmul.f32 %v2554, %v2606
  %v2613 = vmul.f32 %v2559, %v2607
  %v2614 = vmul.f32 %v2564, %v2608
  %v2615 = vmul.f32 %v2569, %v2609
  %v2616 = vmul.f32 %v2574, %v2610
  %v2617 = vmul.f32 %v2579, %v2611
  %v2618 = vld [vmem:[%s11] sm:$0xff]
  %v2619 = vld [vmem:[%s11 + $0x8] sm:$0xff]
  %v2620 = vld [vmem:[%s11 + $0x10] sm:$0xff]
  %v2621 = vld [vmem:[%s11 + $0x18] sm:$0xff]
  %v2622 = vld [vmem:[%s11 + $0x20] sm:$0xff]
  %v2623 = vld [vmem:[%s11 + $0x28] sm:$0xff]
  %v2624 = vld [vmem:[%s11 + $0x30] sm:$0xff]
  %v2625 = vld [vmem:[%s11 + $0x38] sm:$0xff]
  %v2626 = vld [vmem:[%s11 + $0x40] sm:$0xff]
  %v2627 = vld [vmem:[%s11 + $0x48] sm:$0xff]
  %v2628 = vld [vmem:[%s11 + $0x50] sm:$0xff]
  %v2629 = vld [vmem:[%s11 + $0x58] sm:$0xff]
  %v2630 = vld [vmem:[%s11 + $0x60] sm:$0xff]
  %v2631 = vld [vmem:[%s11 + $0x68] sm:$0xff]
  %v2632 = vld [vmem:[%s11 + $0x70] sm:$0xff]
  %v2633 = vld [vmem:[%s11 + $0x78] sm:$0xff]
  %2634 = vmatprep.subr.mxu0 0.0
  %2635 = vmatpush1.msra.mxu0 %v2618
  %2636 = vmatprep.subr.mxu0 0.0
  %2637 = vmatpush1.msra.mxu0 %v2619
  %2638 = vmatprep.subr.mxu0 0.0
  %2639 = vmatpush1.msra.mxu0 %v2620
  %2640 = vmatprep.subr.mxu0 0.0
  %2641 = vmatpush1.msra.mxu0 %v2621
  %2642 = vmatprep.subr.mxu0 0.0
  %2643 = vmatpush1.msra.mxu0 %v2622
  %2644 = vmatprep.subr.mxu0 0.0
  %2645 = vmatpush1.msra.mxu0 %v2623
  %2646 = vmatprep.subr.mxu0 0.0
  %2647 = vmatpush1.msra.mxu0 %v2624
  %2648 = vmatprep.subr.mxu0 0.0
  %2649 = vmatpush1.msra.mxu0 %v2625
  %2650 = vmatprep.subr.mxu0 0.0
  %2651 = vmatpush1.msra.mxu0 %v2626
  %2652 = vmatprep.subr.mxu0 0.0
  %2653 = vmatpush1.msra.mxu0 %v2627
  %2654 = vmatprep.subr.mxu0 0.0
  %2655 = vmatpush1.msra.mxu0 %v2628
  %2656 = vmatprep.subr.mxu0 0.0
  %2657 = vmatpush1.msra.mxu0 %v2629
  %2658 = vmatprep.subr.mxu0 0.0
  %2659 = vmatpush1.msra.mxu0 %v2630
  %2660 = vmatprep.subr.mxu0 0.0
  %2661 = vmatpush1.msra.mxu0 %v2631
  %2662 = vmatprep.subr.mxu0 0.0
  %2663 = vmatpush1.msra.mxu0 %v2632
  %2664 = vmatprep.subr.mxu0 0.0
  %2665 = vmatpush1.msra.mxu0 %v2633
  %2666 = vmatprep.subr.mxu0 0.0
  %2667 = vmatpush1.msra.mxu0 0.0
  %2668 = vmatprep.subr.mxu0 0.0
  %2669 = vmatpush1.msra.mxu0 0.0
  %2670 = vmatprep.subr.mxu0 0.0
  %2671 = vmatpush1.msra.mxu0 0.0
  %2672 = vmatprep.subr.mxu0 0.0
  %2673 = vmatpush1.msra.mxu0 0.0
  %2674 = vmatprep.subr.mxu0 0.0
  %2675 = vmatpush1.msra.mxu0 0.0
  %2676 = vmatprep.subr.mxu0 0.0
  %2677 = vmatpush1.msra.mxu0 0.0
  %2678 = vmatprep.subr.mxu0 0.0
  %2679 = vmatpush1.msra.mxu0 0.0
  %2680 = vmatprep.subr.mxu0 0.0
  %2681 = vmatpush1.msra.mxu0 0.0
  %2682 = vmatprep.subr.mxu0 0.0
  %2683 = vmatpush1.msra.mxu0 0.0
  %2684 = vmatprep.subr.mxu0 0.0
  %2685 = vmatpush1.msra.mxu0 0.0
  %2686 = vmatprep.subr.mxu0 0.0
  %2687 = vmatpush1.msra.mxu0 0.0
  %2688 = vmatprep.subr.mxu0 0.0
  %2689 = vmatpush1.msra.mxu0 0.0
  %2690 = vmatprep.subr.mxu0 0.0
  %2691 = vmatpush1.msra.mxu0 0.0
  %2692 = vmatprep.subr.mxu0 0.0
  %2693 = vmatpush1.msra.mxu0 0.0
  %2694 = vmatprep.subr.mxu0 0.0
  %2695 = vmatpush1.msra.mxu0 0.0
  %2696 = vmatprep.subr.mxu0 0.0
  %2697 = vmatpush1.msra.mxu0 0.0
  %2698 = vmatprep.mubr.f32.mxu0 0.0
  %2699 = vmatmul.mubr.f32.gmra.mrb[0].mxu0 %v2612
  %v2700 = vpop.f32.mrb[0].mxu0
  %v2701 = vadd.f32 0.0, %v2700
  %v2702 = vpop.f32.mrb[0].mxu0
  %2703 = vmatprep.mubr.f32.mxu0 0.0
  %2704 = vmatmul.mubr.f32.gmra.mrb[0].mxu0 %v2613
  %v2705 = vpop.f32.mrb[0].mxu0
  %v2706 = vadd.f32 0.0, %v2705
  %v2707 = vpop.f32.mrb[0].mxu0
  %2708 = vmatprep.mubr.f32.mxu0 0.0
  %2709 = vmatmul.mubr.f32.gmra.mrb[0].mxu0 %v2614
  %v2710 = vpop.f32.mrb[0].mxu0
  %v2711 = vadd.f32 0.0, %v2710
  %v2712 = vpop.f32.mrb[0].mxu0
  %2713 = vmatprep.mubr.f32.mxu0 0.0
  %2714 = vmatmul.mubr.f32.gmra.mrb[0].mxu0 %v2615
  %v2715 = vpop.f32.mrb[0].mxu0
  %v2716 = vadd.f32 0.0, %v2715
  %v2717 = vpop.f32.mrb[0].mxu0
  %2718 = vmatprep.mubr.f32.mxu0 0.0
  %2719 = vmatmul.mubr.f32.gmra.mrb[0].mxu0 %v2616
  %v2720 = vpop.f32.mrb[0].mxu0
  %v2721 = vadd.f32 0.0, %v2720
  %v2722 = vpop.f32.mrb[0].mxu0
  %2723 = vmatprep.mubr.f32.mxu0 0.0
  %2724 = vmatmul.mubr.f32.gmra.mrb[0].mxu0 %v2617
  %v2725 = vpop.f32.mrb[0].mxu0
  %v2726 = vadd.f32 0.0, %v2725
  %v2727 = vpop.f32.mrb[0].mxu0
  %2728 = vdwg.mxu0
  %v2729 = vadd.f32 %v2354, %v2701
  %v2730 = vadd.f32 %v2355, %v2706
  %v2731 = vadd.f32 %v2356, %v2711
  %v2732 = vadd.f32 %v2357, %v2716
  %v2733 = vadd.f32 %v2358, %v2721
  %v2734 = vadd.f32 %v2359, %v2726
  %v2735 = vlaneseq
  %v2736 = vshrl.u32 %v2735, 7
  %v2737 = vsub.s32 5, %v2736
  %v2738 = vrot.slane %v286, %v2737
  %v2739 = vadd.f32 %v2729, %v2738
  %v2740 = vadd.f32 %v2730, %v2738
  %v2741 = vadd.f32 %v2731, %v2738
  %v2742 = vadd.f32 %v2732, %v2738
  %v2743 = vadd.f32 %v2733, %v2738
  %v2744 = vadd.f32 %v2734, %v2738
  %s2745 = scalar_lea.vmem %s5, 8
  %v2746 = vld [vmem:[%s2745] sm:$0x3f]
  %v2747 = vsel %vm180, %v2739, 0.0
  %2748 = vadd.xlane.f32.xlu0 %v2747
  %v2749 = vpop.xlane.xlu0 %2748
  %v2750 = vsel %vm180, %v2740, 0.0
  %2751 = vadd.xlane.f32.xlu0 %v2750
  %v2752 = vpop.xlane.xlu0 %2751
  %v2753 = vsel %vm180, %v2741, 0.0
  %2754 = vadd.xlane.f32.xlu0 %v2753
  %v2755 = vpop.xlane.xlu0 %2754
  %v2756 = vsel %vm180, %v2742, 0.0
  %2757 = vadd.xlane.f32.xlu0 %v2756
  %v2758 = vpop.xlane.xlu0 %2757
  %v2759 = vsel %vm180, %v2743, 0.0
  %2760 = vadd.xlane.f32.xlu0 %v2759
  %v2761 = vpop.xlane.xlu0 %2760
  %v2762 = vsel %vm180, %v2744, 0.0
  %2763 = vadd.xlane.f32.xlu0 %v2762
  %v2764 = vpop.xlane.xlu0 %2763
  %v2765 = vmul.f32 %v2749, %v199
  %v2766 = vmul.f32 %v2752, %v199
  %v2767 = vmul.f32 %v2755, %v199
  %v2768 = vmul.f32 %v2758, %v199
  %v2769 = vmul.f32 %v2761, %v199
  %v2770 = vmul.f32 %v2764, %v199
  %v2771 = vsub.f32 %v2739, %v2765
  %v2772 = vsub.f32 %v2740, %v2766
  %v2773 = vsub.f32 %v2741, %v2767
  %v2774 = vsub.f32 %v2742, %v2768
  %v2775 = vsub.f32 %v2743, %v2769
  %v2776 = vsub.f32 %v2744, %v2770
  %v2777 = vmul.f32 %v2771, %v2771
  %v2778 = vmul.f32 %v2772, %v2772
  %v2779 = vmul.f32 %v2773, %v2773
  %v2780 = vmul.f32 %v2774, %v2774
  %v2781 = vmul.f32 %v2775, %v2775
  %v2782 = vmul.f32 %v2776, %v2776
  %v2783 = vsel %vm180, %v2777, 0.0
  %2784 = vadd.xlane.f32.xlu0 %v2783
  %v2785 = vpop.xlane.xlu0 %2784
  %v2786 = vsel %vm180, %v2778, 0.0
  %2787 = vadd.xlane.f32.xlu0 %v2786
  %v2788 = vpop.xlane.xlu0 %2787
  %v2789 = vsel %vm180, %v2779, 0.0
  %2790 = vadd.xlane.f32.xlu0 %v2789
  %v2791 = vpop.xlane.xlu0 %2790
  %v2792 = vsel %vm180, %v2780, 0.0
  %2793 = vadd.xlane.f32.xlu0 %v2792
  %v2794 = vpop.xlane.xlu0 %2793
  %v2795 = vsel %vm180, %v2781, 0.0
  %2796 = vadd.xlane.f32.xlu0 %v2795
  %v2797 = vpop.xlane.xlu0 %2796
  %v2798 = vsel %vm180, %v2782, 0.0
  %2799 = vadd.xlane.f32.xlu0 %v2798
  %v2800 = vpop.xlane.xlu0 %2799
  %v2801 = vmul.f32 %v2785, %v199
  %v2802 = vmul.f32 %v2788, %v199
  %v2803 = vmul.f32 %v2791, %v199
  %v2804 = vmul.f32 %v2794, %v199
  %v2805 = vmul.f32 %v2797, %v199
  %v2806 = vmul.f32 %v2800, %v199
  %v2807 = vadd.f32 %v2801, 1e-05
  %v2808 = vadd.f32 %v2802, 1e-05
  %v2809 = vadd.f32 %v2803, 1e-05
  %v2810 = vadd.f32 %v2804, 1e-05
  %v2811 = vadd.f32 %v2805, 1e-05
  %v2812 = vadd.f32 %v2806, 1e-05
  %v2813 = vrsqrt.pop %v2807
  %v2814 = vrsqrt.pop %v2808
  %v2815 = vrsqrt.pop %v2809
  %v2816 = vrsqrt.pop %v2810
  %v2817 = vrsqrt.pop %v2811
  %v2818 = vrsqrt.pop %v2812
  %v2819 = vmul.f32 %v2771, %v2813
  %v2820 = vmul.f32 %v2772, %v2814
  %v2821 = vmul.f32 %v2773, %v2815
  %v2822 = vmul.f32 %v2774, %v2816
  %v2823 = vmul.f32 %v2775, %v2817
  %v2824 = vmul.f32 %v2776, %v2818
  %v2825 = vlaneseq
  %v2826 = vshrl.u32 %v2825, 7
  %v2827 = vsub.s32 0, %v2826
  %v2828 = vrot.slane %v2746, %v2827
  %v2829 = vmul.f32 %v2819, %v2828
  %v2830 = vmul.f32 %v2820, %v2828
  %v2831 = vmul.f32 %v2821, %v2828
  %v2832 = vmul.f32 %v2822, %v2828
  %v2833 = vmul.f32 %v2823, %v2828
  %v2834 = vmul.f32 %v2824, %v2828
  %v2835 = vlaneseq
  %v2836 = vshrl.u32 %v2835, 7
  %v2837 = vsub.s32 1, %v2836
  %v2838 = vrot.slane %v2746, %v2837
  %v2839 = vadd.f32 %v2829, %v2838
  %v2840 = vadd.f32 %v2830, %v2838
  %v2841 = vadd.f32 %v2831, %v2838
  %v2842 = vadd.f32 %v2832, %v2838
  %v2843 = vadd.f32 %v2833, %v2838
  %v2844 = vadd.f32 %v2834, %v2838
  %s2845 = scalar_lea.vmem %s6, 32
  %v2846 = vld [vmem:[%s2845] sm:$0xff]
  %v2847 = vld [vmem:[%s2845 + $0x8] sm:$0xff]
  %v2848 = vld [vmem:[%s2845 + $0x10] sm:$0xff]
  %v2849 = vld [vmem:[%s2845 + $0x18] sm:$0xff]
  %s2850 = scalar_lea.vmem %s7, 1
  %v2851 = vld [vmem:[%s2850] sm:$0x1]
  %v2853 = vlaneseq
  %v2854 = vshrl.u32 %v2853, 7
  %v2855 = vsub.s32 0, %v2854
  %v2856 = vrot.slane %v2851, %v2855
  %v2859 = vsel %vm180, %v2839, 0
  %v2862 = vsel %vm180, %v2840, 0
  %v2865 = vsel %vm180, %v2841, 0
  %v2868 = vsel %vm180, %v2842, 0
  %v2871 = vsel %vm180, %v2843, 0
  %v2874 = vsel %vm180, %v2844, 0
  %2876 = vmatprep.subr.mxu0 0.0
  %2877 = vmatpush1.msra.mxu0 %v2846
  %2878 = vmatprep.subr.mxu0 0.0
  %2879 = vmatpush1.msra.mxu0 %v2847
  %2880 = vmatprep.subr.mxu0 0.0
  %2881 = vmatpush1.msra.mxu0 %v2848
  %2882 = vmatprep.subr.mxu0 0.0
  %2883 = vmatpush1.msra.mxu0 %v2849
  %2884 = vmatprep.subr.mxu0 0.0
  %2885 = vmatpush1.msra.mxu0 0.0
  %2886 = vmatprep.subr.mxu0 0.0
  %2887 = vmatpush1.msra.mxu0 0.0
  %2888 = vmatprep.subr.mxu0 0.0
  %2889 = vmatpush1.msra.mxu0 0.0
  %2890 = vmatprep.subr.mxu0 0.0
  %2891 = vmatpush1.msra.mxu0 0.0
  %2892 = vmatprep.subr.mxu0 0.0
  %2893 = vmatpush1.msra.mxu0 0.0
  %2894 = vmatprep.subr.mxu0 0.0
  %2895 = vmatpush1.msra.mxu0 0.0
  %2896 = vmatprep.subr.mxu0 0.0
  %2897 = vmatpush1.msra.mxu0 0.0
  %2898 = vmatprep.subr.mxu0 0.0
  %2899 = vmatpush1.msra.mxu0 0.0
  %2900 = vmatprep.subr.mxu0 0.0
  %2901 = vmatpush1.msra.mxu0 0.0
  %2902 = vmatprep.subr.mxu0 0.0
  %2903 = vmatpush1.msra.mxu0 0.0
  %2904 = vmatprep.subr.mxu0 0.0
  %2905 = vmatpush1.msra.mxu0 0.0
  %2906 = vmatprep.subr.mxu0 0.0
  %2907 = vmatpush1.msra.mxu0 0.0
  %2908 = vmatprep.subr.mxu0 0.0
  %2909 = vmatpush1.msra.mxu0 0.0
  %2910 = vmatprep.subr.mxu0 0.0
  %2911 = vmatpush1.msra.mxu0 0.0
  %2912 = vmatprep.subr.mxu0 0.0
  %2913 = vmatpush1.msra.mxu0 0.0
  %2914 = vmatprep.subr.mxu0 0.0
  %2915 = vmatpush1.msra.mxu0 0.0
  %2916 = vmatprep.subr.mxu0 0.0
  %2917 = vmatpush1.msra.mxu0 0.0
  %2918 = vmatprep.subr.mxu0 0.0
  %2919 = vmatpush1.msra.mxu0 0.0
  %2920 = vmatprep.subr.mxu0 0.0
  %2921 = vmatpush1.msra.mxu0 0.0
  %2922 = vmatprep.subr.mxu0 0.0
  %2923 = vmatpush1.msra.mxu0 0.0
  %2924 = vmatprep.subr.mxu0 0.0
  %2925 = vmatpush1.msra.mxu0 0.0
  %2926 = vmatprep.subr.mxu0 0.0
  %2927 = vmatpush1.msra.mxu0 0.0
  %2928 = vmatprep.subr.mxu0 0.0
  %2929 = vmatpush1.msra.mxu0 0.0
  %2930 = vmatprep.subr.mxu0 0.0
  %2931 = vmatpush1.msra.mxu0 0.0
  %2932 = vmatprep.subr.mxu0 0.0
  %2933 = vmatpush1.msra.mxu0 0.0
  %2934 = vmatprep.subr.mxu0 0.0
  %2935 = vmatpush1.msra.mxu0 0.0
  %2936 = vmatprep.subr.mxu0 0.0
  %2937 = vmatpush1.msra.mxu0 0.0
  %2938 = vmatprep.subr.mxu0 0.0
  %2939 = vmatpush1.msra.mxu0 0.0
  %2940 = vmatprep.mubr.f32.mxu0 0.0
  %2941 = vmatmul.mubr.f32.gmra.mrb[0].mxu0 %v2859
  %v2942 = vpop.f32.mrb[0].mxu0
  %v2943 = vadd.f32 %v2856, %v2942
  %v2944 = vpop.f32.mrb[0].mxu0
  %2945 = vmatprep.mubr.f32.mxu0 0.0
  %2946 = vmatmul.mubr.f32.gmra.mrb[0].mxu0 %v2862
  %v2947 = vpop.f32.mrb[0].mxu0
  %v2948 = vadd.f32 %v2856, %v2947
  %v2949 = vpop.f32.mrb[0].mxu0
  %2950 = vmatprep.mubr.f32.mxu0 0.0
  %2951 = vmatmul.mubr.f32.gmra.mrb[0].mxu0 %v2865
  %v2952 = vpop.f32.mrb[0].mxu0
  %v2953 = vadd.f32 %v2856, %v2952
  %v2954 = vpop.f32.mrb[0].mxu0
  %2955 = vmatprep.mubr.f32.mxu0 0.0
  %2956 = vmatmul.mubr.f32.gmra.mrb[0].mxu0 %v2868
  %v2957 = vpop.f32.mrb[0].mxu0
  %v2958 = vadd.f32 %v2856, %v2957
  %v2959 = vpop.f32.mrb[0].mxu0
  %2960 = vmatprep.mubr.f32.mxu0 0.0
  %2961 = vmatmul.mubr.f32.gmra.mrb[0].mxu0 %v2871
  %v2962 = vpop.f32.mrb[0].mxu0
  %v2963 = vadd.f32 %v2856, %v2962
  %v2964 = vpop.f32.mrb[0].mxu0
  %2965 = vmatprep.mubr.f32.mxu0 0.0
  %2966 = vmatmul.mubr.f32.gmra.mrb[0].mxu0 %v2874
  %v2967 = vpop.f32.mrb[0].mxu0
  %v2968 = vadd.f32 %v2856, %v2967
  %v2969 = vpop.f32.mrb[0].mxu0
  %2970 = vdwg.mxu0
  %s2971 = scalar_lea.vmem %s8, 32
  %v2972 = vld [vmem:[%s2971] sm:$0xff]
  %v2973 = vld [vmem:[%s2971 + $0x8] sm:$0xff]
  %v2974 = vld [vmem:[%s2971 + $0x10] sm:$0xff]
  %v2975 = vld [vmem:[%s2971 + $0x18] sm:$0xff]
  %v2976 = vmul.f32 %v2943, 0.35355338
  %v2977 = vmul.f32 %v2948, 0.35355338
  %v2978 = vmul.f32 %v2953, 0.35355338
  %v2979 = vmul.f32 %v2958, 0.35355338
  %v2980 = vmul.f32 %v2963, 0.35355338
  %v2981 = vmul.f32 %v2968, 0.35355338
  %2988 = vrot.lane.b32.xlu0 %v2943, 96
  %v2989 = vpop.permute.xlu0 %2988
  %2990 = vrot.lane.b32.xlu0 %v2948, 96
  %v2991 = vpop.permute.xlu0 %2990
  %2992 = vrot.lane.b32.xlu0 %v2953, 96
  %v2993 = vpop.permute.xlu0 %2992
  %2994 = vrot.lane.b32.xlu0 %v2958, 96
  %v2995 = vpop.permute.xlu0 %2994
  %2996 = vrot.lane.b32.xlu0 %v2963, 96
  %v2997 = vpop.permute.xlu0 %2996
  %2998 = vrot.lane.b32.xlu0 %v2968, 96
  %v2999 = vpop.permute.xlu0 %2998
  %v3001 = vsel %vm537, %v2976, 0
  %v3004 = vsel %vm537, %v2977, 0
  %v3007 = vsel %vm537, %v2978, 0
  %v3010 = vsel %vm537, %v2979, 0
  %v3013 = vsel %vm537, %v2980, 0
  %v3016 = vsel %vm537, %v2981, 0
  %v3018 = vsel %vm537, %v2989, 0
  %v3020 = vsel %vm537, %v2991, 0
  %v3022 = vsel %vm537, %v2993, 0
  %v3024 = vsel %vm537, %v2995, 0
  %v3026 = vsel %vm537, %v2997, 0
  %v3028 = vsel %vm537, %v2999, 0
  %3030 = vmatprep.subr.mxu0 0.0
  %3031 = vmatpush1.xpose.msra.mxu0 %v3018
  %3032 = vmatprep.subr.mxu0 0.0
  %3033 = vmatpush1.xpose.msra.mxu0 %v3020
  %3034 = vmatprep.subr.mxu0 0.0
  %3035 = vmatpush1.xpose.msra.mxu0 %v3022
  %3036 = vmatprep.subr.mxu0 0.0
  %3037 = vmatpush1.xpose.msra.mxu0 %v3024
  %3038 = vmatprep.subr.mxu0 0.0
  %3039 = vmatpush1.xpose.msra.mxu0 %v3026
  %3040 = vmatprep.subr.mxu0 0.0
  %3041 = vmatpush1.xpose.msra.mxu0 %v3028
  %3042 = vmatprep.subr.mxu0 0.0
  %3043 = vmatpush1.xpose.msra.mxu0 0.0
  %3044 = vmatprep.subr.mxu0 0.0
  %3045 = vmatpush1.xpose.msra.mxu0 0.0
  %3046 = vmatprep.subr.mxu0 0.0
  %3047 = vmatpush1.xpose.msra.mxu0 0.0
  %3048 = vmatprep.subr.mxu0 0.0
  %3049 = vmatpush1.xpose.msra.mxu0 0.0
  %3050 = vmatprep.subr.mxu0 0.0
  %3051 = vmatpush1.xpose.msra.mxu0 0.0
  %3052 = vmatprep.subr.mxu0 0.0
  %3053 = vmatpush1.xpose.msra.mxu0 0.0
  %3054 = vmatprep.subr.mxu0 0.0
  %3055 = vmatpush1.xpose.msra.mxu0 0.0
  %3056 = vmatprep.subr.mxu0 0.0
  %3057 = vmatpush1.xpose.msra.mxu0 0.0
  %3058 = vmatprep.subr.mxu0 0.0
  %3059 = vmatpush1.xpose.msra.mxu0 0.0
  %3060 = vmatprep.subr.mxu0 0.0
  %3061 = vmatpush1.xpose.msra.mxu0 0.0
  %3062 = vmatprep.subr.mxu0 0.0
  %3063 = vmatpush1.xpose.msra.mxu0 0.0
  %3064 = vmatprep.subr.mxu0 0.0
  %3065 = vmatpush1.xpose.msra.mxu0 0.0
  %3066 = vmatprep.subr.mxu0 0.0
  %3067 = vmatpush1.xpose.msra.mxu0 0.0
  %3068 = vmatprep.subr.mxu0 0.0
  %3069 = vmatpush1.xpose.msra.mxu0 0.0
  %3070 = vmatprep.subr.mxu0 0.0
  %3071 = vmatpush1.xpose.msra.mxu0 0.0
  %3072 = vmatprep.subr.mxu0 0.0
  %3073 = vmatpush1.xpose.msra.mxu0 0.0
  %3074 = vmatprep.subr.mxu0 0.0
  %3075 = vmatpush1.xpose.msra.mxu0 0.0
  %3076 = vmatprep.subr.mxu0 0.0
  %3077 = vmatpush1.xpose.msra.mxu0 0.0
  %3078 = vmatprep.subr.mxu0 0.0
  %3079 = vmatpush1.xpose.msra.mxu0 0.0
  %3080 = vmatprep.subr.mxu0 0.0
  %3081 = vmatpush1.xpose.msra.mxu0 0.0
  %3082 = vmatprep.subr.mxu0 0.0
  %3083 = vmatpush1.xpose.msra.mxu0 0.0
  %3084 = vmatprep.subr.mxu0 0.0
  %3085 = vmatpush1.xpose.msra.mxu0 0.0
  %3086 = vmatprep.subr.mxu0 0.0
  %3087 = vmatpush1.xpose.msra.mxu0 0.0
  %3088 = vmatprep.subr.mxu0 0.0
  %3089 = vmatpush1.xpose.msra.mxu0 0.0
  %3090 = vmatprep.subr.mxu0 0.0
  %3091 = vmatpush1.xpose.msra.mxu0 0.0
  %3092 = vmatprep.subr.mxu0 0.0
  %3093 = vmatpush1.xpose.msra.mxu0 0.0
  %3094 = vmatprep.mubr.f32.mxu0 0.0
  %3095 = vmatmul.mubr.f32.gmra.mrb[0].mxu0 %v3001
  %v3096 = vpop.f32.mrb[0].mxu0
  %v3097 = vadd.f32 %v280, %v3096
  %v3098 = vpop.f32.mrb[0].mxu0
  %3099 = vmatprep.mubr.f32.mxu0 0.0
  %3100 = vmatmul.mubr.f32.gmra.mrb[0].mxu0 %v3004
  %v3101 = vpop.f32.mrb[0].mxu0
  %v3102 = vadd.f32 %v281, %v3101
  %v3103 = vpop.f32.mrb[0].mxu0
  %3104 = vmatprep.mubr.f32.mxu0 0.0
  %3105 = vmatmul.mubr.f32.gmra.mrb[0].mxu0 %v3007
  %v3106 = vpop.f32.mrb[0].mxu0
  %v3107 = vadd.f32 %v282, %v3106
  %v3108 = vpop.f32.mrb[0].mxu0
  %3109 = vmatprep.mubr.f32.mxu0 0.0
  %3110 = vmatmul.mubr.f32.gmra.mrb[0].mxu0 %v3010
  %v3111 = vpop.f32.mrb[0].mxu0
  %v3112 = vadd.f32 %v283, %v3111
  %v3113 = vpop.f32.mrb[0].mxu0
  %3114 = vmatprep.mubr.f32.mxu0 0.0
  %3115 = vmatmul.mubr.f32.gmra.mrb[0].mxu0 %v3013
  %v3116 = vpop.f32.mrb[0].mxu0
  %v3117 = vadd.f32 %v284, %v3116
  %v3118 = vpop.f32.mrb[0].mxu0
  %3119 = vmatprep.mubr.f32.mxu0 0.0
  %3120 = vmatmul.mubr.f32.gmra.mrb[0].mxu0 %v3016
  %v3121 = vpop.f32.mrb[0].mxu0
  %v3122 = vadd.f32 %v285, %v3121
  %v3123 = vpop.f32.mrb[0].mxu0
  %3124 = vdwg.mxu0
  %v3125 = vsel %vm65, %v3097, -inf
  %3126 = vmax.xlane.f32.xlu0 %v3125
  %v3127 = vpop.xlane.xlu0 %3126
  %v3128 = vsel %vm65, %v3102, -inf
  %3129 = vmax.xlane.f32.xlu0 %v3128
  %v3130 = vpop.xlane.xlu0 %3129
  %v3131 = vsel %vm65, %v3107, -inf
  %3132 = vmax.xlane.f32.xlu0 %v3131
  %v3133 = vpop.xlane.xlu0 %3132
  %v3134 = vsel %vm65, %v3112, -inf
  %3135 = vmax.xlane.f32.xlu0 %v3134
  %v3136 = vpop.xlane.xlu0 %3135
  %v3137 = vsel %vm65, %v3117, -inf
  %3138 = vmax.xlane.f32.xlu0 %v3137
  %v3139 = vpop.xlane.xlu0 %3138
  %v3140 = vsel %vm65, %v3122, -inf
  %3141 = vmax.xlane.f32.xlu0 %v3140
  %v3142 = vpop.xlane.xlu0 %3141
  %v3143 = vsub.f32 %v3097, %v3127
  %v3144 = vsub.f32 %v3102, %v3130
  %v3145 = vsub.f32 %v3107, %v3133
  %v3146 = vsub.f32 %v3112, %v3136
  %v3147 = vsub.f32 %v3117, %v3139
  %v3148 = vsub.f32 %v3122, %v3142
  %v3149 = vmul.f32 %v3143, 1.442695
  %v3150 = vpow.pop %v3149
  %v3151 = vmul.f32 %v3144, 1.442695
  %v3152 = vpow.pop %v3151
  %v3153 = vmul.f32 %v3145, 1.442695
  %v3154 = vpow.pop %v3153
  %v3155 = vmul.f32 %v3146, 1.442695
  %v3156 = vpow.pop %v3155
  %v3157 = vmul.f32 %v3147, 1.442695
  %v3158 = vpow.pop %v3157
  %v3159 = vmul.f32 %v3148, 1.442695
  %v3160 = vpow.pop %v3159
  %v3161 = vsel %vm65, %v3150, 0.0
  %3162 = vadd.xlane.f32.xlu0 %v3161
  %v3163 = vpop.xlane.xlu0 %3162
  %v3164 = vsel %vm65, %v3152, 0.0
  %3165 = vadd.xlane.f32.xlu0 %v3164
  %v3166 = vpop.xlane.xlu0 %3165
  %v3167 = vsel %vm65, %v3154, 0.0
  %3168 = vadd.xlane.f32.xlu0 %v3167
  %v3169 = vpop.xlane.xlu0 %3168
  %v3170 = vsel %vm65, %v3156, 0.0
  %3171 = vadd.xlane.f32.xlu0 %v3170
  %v3172 = vpop.xlane.xlu0 %3171
  %v3173 = vsel %vm65, %v3158, 0.0
  %3174 = vadd.xlane.f32.xlu0 %v3173
  %v3175 = vpop.xlane.xlu0 %3174
  %v3176 = vsel %vm65, %v3160, 0.0
  %3177 = vadd.xlane.f32.xlu0 %v3176
  %v3178 = vpop.xlane.xlu0 %3177
  %v3179 = vrcp.pop %v3163
  %v3180 = vrcp.pop %v3166
  %v3181 = vrcp.pop %v3169
  %v3182 = vrcp.pop %v3172
  %v3183 = vrcp.pop %v3175
  %v3184 = vrcp.pop %v3178
  %v3185 = vmul.f32 %v3150, %v3179
  %v3186 = vmul.f32 %v3152, %v3180
  %v3187 = vmul.f32 %v3154, %v3181
  %v3188 = vmul.f32 %v3156, %v3182
  %v3189 = vmul.f32 %v3158, %v3183
  %v3190 = vmul.f32 %v3160, %v3184
  %3191 = vrot.lane.b32.xlu0 %v2943, 64
  %v3192 = vpop.permute.xlu0 %3191
  %3193 = vrot.lane.b32.xlu0 %v2948, 64
  %v3194 = vpop.permute.xlu0 %3193
  %3195 = vrot.lane.b32.xlu0 %v2953, 64
  %v3196 = vpop.permute.xlu0 %3195
  %3197 = vrot.lane.b32.xlu0 %v2958, 64
  %v3198 = vpop.permute.xlu0 %3197
  %3199 = vrot.lane.b32.xlu0 %v2963, 64
  %v3200 = vpop.permute.xlu0 %3199
  %3201 = vrot.lane.b32.xlu0 %v2968, 64
  %v3202 = vpop.permute.xlu0 %3201
  %v3210 = vsel %vm65, %v3185, 0
  %v3213 = vsel %vm65, %v3186, 0
  %v3216 = vsel %vm65, %v3187, 0
  %v3219 = vsel %vm65, %v3188, 0
  %v3222 = vsel %vm65, %v3189, 0
  %v3225 = vsel %vm65, %v3190, 0
  %3227 = vmatprep.subr.mxu0 0.0
  %3228 = vmatpush1.msra.mxu0 %v3192
  %3229 = vmatprep.subr.mxu0 0.0
  %3230 = vmatpush1.msra.mxu0 %v3194
  %3231 = vmatprep.subr.mxu0 0.0
  %3232 = vmatpush1.msra.mxu0 %v3196
  %3233 = vmatprep.subr.mxu0 0.0
  %3234 = vmatpush1.msra.mxu0 %v3198
  %3235 = vmatprep.subr.mxu0 0.0
  %3236 = vmatpush1.msra.mxu0 %v3200
  %3237 = vmatprep.subr.mxu0 0.0
  %3238 = vmatpush1.msra.mxu0 %v3202
  %3239 = vmatprep.subr.mxu0 0.0
  %3240 = vmatpush1.msra.mxu0 0.0
  %3241 = vmatprep.subr.mxu0 0.0
  %3242 = vmatpush1.msra.mxu0 0.0
  %3243 = vmatprep.subr.mxu0 0.0
  %3244 = vmatpush1.msra.mxu0 0.0
  %3245 = vmatprep.subr.mxu0 0.0
  %3246 = vmatpush1.msra.mxu0 0.0
  %3247 = vmatprep.subr.mxu0 0.0
  %3248 = vmatpush1.msra.mxu0 0.0
  %3249 = vmatprep.subr.mxu0 0.0
  %3250 = vmatpush1.msra.mxu0 0.0
  %3251 = vmatprep.subr.mxu0 0.0
  %3252 = vmatpush1.msra.mxu0 0.0
  %3253 = vmatprep.subr.mxu0 0.0
  %3254 = vmatpush1.msra.mxu0 0.0
  %3255 = vmatprep.subr.mxu0 0.0
  %3256 = vmatpush1.msra.mxu0 0.0
  %3257 = vmatprep.subr.mxu0 0.0
  %3258 = vmatpush1.msra.mxu0 0.0
  %3259 = vmatprep.subr.mxu0 0.0
  %3260 = vmatpush1.msra.mxu0 0.0
  %3261 = vmatprep.subr.mxu0 0.0
  %3262 = vmatpush1.msra.mxu0 0.0
  %3263 = vmatprep.subr.mxu0 0.0
  %3264 = vmatpush1.msra.mxu0 0.0
  %3265 = vmatprep.subr.mxu0 0.0
  %3266 = vmatpush1.msra.mxu0 0.0
  %3267 = vmatprep.subr.mxu0 0.0
  %3268 = vmatpush1.msra.mxu0 0.0
  %3269 = vmatprep.subr.mxu0 0.0
  %3270 = vmatpush1.msra.mxu0 0.0
  %3271 = vmatprep.subr.mxu0 0.0
  %3272 = vmatpush1.msra.mxu0 0.0
  %3273 = vmatprep.subr.mxu0 0.0
  %3274 = vmatpush1.msra.mxu0 0.0
  %3275 = vmatprep.subr.mxu0 0.0
  %3276 = vmatpush1.msra.mxu0 0.0
  %3277 = vmatprep.subr.mxu0 0.0
  %3278 = vmatpush1.msra.mxu0 0.0
  %3279 = vmatprep.subr.mxu0 0.0
  %3280 = vmatpush1.msra.mxu0 0.0
  %3281 = vmatprep.subr.mxu0 0.0
  %3282 = vmatpush1.msra.mxu0 0.0
  %3283 = vmatprep.subr.mxu0 0.0
  %3284 = vmatpush1.msra.mxu0 0.0
  %3285 = vmatprep.subr.mxu0 0.0
  %3286 = vmatpush1.msra.mxu0 0.0
  %3287 = vmatprep.subr.mxu0 0.0
  %3288 = vmatpush1.msra.mxu0 0.0
  %3289 = vmatprep.subr.mxu0 0.0
  %3290 = vmatpush1.msra.mxu0 0.0
  %3291 = vmatprep.mubr.f32.mxu0 0.0
  %3292 = vmatmul.mubr.f32.gmra.mrb[0].mxu0 %v3210
  %v3293 = vpop.f32.mrb[0].mxu0
  %v3294 = vadd.f32 0.0, %v3293
  %v3295 = vpop.f32.mrb[0].mxu0
  %3296 = vmatprep.mubr.f32.mxu0 0.0
  %3297 = vmatmul.mubr.f32.gmra.mrb[0].mxu0 %v3213
  %v3298 = vpop.f32.mrb[0].mxu0
  %v3299 = vadd.f32 0.0, %v3298
  %v3300 = vpop.f32.mrb[0].mxu0
  %3301 = vmatprep.mubr.f32.mxu0 0.0
  %3302 = vmatmul.mubr.f32.gmra.mrb[0].mxu0 %v3216
  %v3303 = vpop.f32.mrb[0].mxu0
  %v3304 = vadd.f32 0.0, %v3303
  %v3305 = vpop.f32.mrb[0].mxu0
  %3306 = vmatprep.mubr.f32.mxu0 0.0
  %3307 = vmatmul.mubr.f32.gmra.mrb[0].mxu0 %v3219
  %v3308 = vpop.f32.mrb[0].mxu0
  %v3309 = vadd.f32 0.0, %v3308
  %v3310 = vpop.f32.mrb[0].mxu0
  %3311 = vmatprep.mubr.f32.mxu0 0.0
  %3312 = vmatmul.mubr.f32.gmra.mrb[0].mxu0 %v3222
  %v3313 = vpop.f32.mrb[0].mxu0
  %v3314 = vadd.f32 0.0, %v3313
  %v3315 = vpop.f32.mrb[0].mxu0
  %3316 = vmatprep.mubr.f32.mxu0 0.0
  %3317 = vmatmul.mubr.f32.gmra.mrb[0].mxu0 %v3225
  %v3318 = vpop.f32.mrb[0].mxu0
  %v3319 = vadd.f32 0.0, %v3318
  %v3320 = vpop.f32.mrb[0].mxu0
  %3321 = vdwg.mxu0
  %3322 = vrot.lane.b32.xlu0 %v2976, 120
  %v3323 = vpop.permute.xlu0 %3322
  %3324 = vrot.lane.b32.xlu0 %v2977, 120
  %v3325 = vpop.permute.xlu0 %3324
  %3326 = vrot.lane.b32.xlu0 %v2978, 120
  %v3327 = vpop.permute.xlu0 %3326
  %3328 = vrot.lane.b32.xlu0 %v2979, 120
  %v3329 = vpop.permute.xlu0 %3328
  %3330 = vrot.lane.b32.xlu0 %v2980, 120
  %v3331 = vpop.permute.xlu0 %3330
  %3332 = vrot.lane.b32.xlu0 %v2981, 120
  %v3333 = vpop.permute.xlu0 %3332
  %3334 = vrot.lane.b32.xlu0 %v2943, 88
  %v3335 = vpop.permute.xlu0 %3334
  %3336 = vrot.lane.b32.xlu0 %v2948, 88
  %v3337 = vpop.permute.xlu0 %3336
  %3338 = vrot.lane.b32.xlu0 %v2953, 88
  %v3339 = vpop.permute.xlu0 %3338
  %3340 = vrot.lane.b32.xlu0 %v2958, 88
  %v3341 = vpop.permute.xlu0 %3340
  %3342 = vrot.lane.b32.xlu0 %v2963, 88
  %v3343 = vpop.permute.xlu0 %3342
  %3344 = vrot.lane.b32.xlu0 %v2968, 88
  %v3345 = vpop.permute.xlu0 %3344
  %v3346 = vsel %vm537, %v3323, 0
  %v3348 = vsel %vm537, %v3325, 0
  %v3350 = vsel %vm537, %v3327, 0
  %v3352 = vsel %vm537, %v3329, 0
  %v3354 = vsel %vm537, %v3331, 0
  %v3356 = vsel %vm537, %v3333, 0
  %v3358 = vsel %vm537, %v3335, 0
  %v3360 = vsel %vm537, %v3337, 0
  %v3362 = vsel %vm537, %v3339, 0
  %v3364 = vsel %vm537, %v3341, 0
  %v3366 = vsel %vm537, %v3343, 0
  %v3368 = vsel %vm537, %v3345, 0
  %3370 = vmatprep.subr.mxu0 0.0
  %3371 = vmatpush1.xpose.msra.mxu0 %v3358
  %3372 = vmatprep.subr.mxu0 0.0
  %3373 = vmatpush1.xpose.msra.mxu0 %v3360
  %3374 = vmatprep.subr.mxu0 0.0
  %3375 = vmatpush1.xpose.msra.mxu0 %v3362
  %3376 = vmatprep.subr.mxu0 0.0
  %3377 = vmatpush1.xpose.msra.mxu0 %v3364
  %3378 = vmatprep.subr.mxu0 0.0
  %3379 = vmatpush1.xpose.msra.mxu0 %v3366
  %3380 = vmatprep.subr.mxu0 0.0
  %3381 = vmatpush1.xpose.msra.mxu0 %v3368
  %3382 = vmatprep.subr.mxu0 0.0
  %3383 = vmatpush1.xpose.msra.mxu0 0.0
  %3384 = vmatprep.subr.mxu0 0.0
  %3385 = vmatpush1.xpose.msra.mxu0 0.0
  %3386 = vmatprep.subr.mxu0 0.0
  %3387 = vmatpush1.xpose.msra.mxu0 0.0
  %3388 = vmatprep.subr.mxu0 0.0
  %3389 = vmatpush1.xpose.msra.mxu0 0.0
  %3390 = vmatprep.subr.mxu0 0.0
  %3391 = vmatpush1.xpose.msra.mxu0 0.0
  %3392 = vmatprep.subr.mxu0 0.0
  %3393 = vmatpush1.xpose.msra.mxu0 0.0
  %3394 = vmatprep.subr.mxu0 0.0
  %3395 = vmatpush1.xpose.msra.mxu0 0.0
  %3396 = vmatprep.subr.mxu0 0.0
  %3397 = vmatpush1.xpose.msra.mxu0 0.0
  %3398 = vmatprep.subr.mxu0 0.0
  %3399 = vmatpush1.xpose.msra.mxu0 0.0
  %3400 = vmatprep.subr.mxu0 0.0
  %3401 = vmatpush1.xpose.msra.mxu0 0.0
  %3402 = vmatprep.subr.mxu0 0.0
  %3403 = vmatpush1.xpose.msra.mxu0 0.0
  %3404 = vmatprep.subr.mxu0 0.0
  %3405 = vmatpush1.xpose.msra.mxu0 0.0
  %3406 = vmatprep.subr.mxu0 0.0
  %3407 = vmatpush1.xpose.msra.mxu0 0.0
  %3408 = vmatprep.subr.mxu0 0.0
  %3409 = vmatpush1.xpose.msra.mxu0 0.0
  %3410 = vmatprep.subr.mxu0 0.0
  %3411 = vmatpush1.xpose.msra.mxu0 0.0
  %3412 = vmatprep.subr.mxu0 0.0
  %3413 = vmatpush1.xpose.msra.mxu0 0.0
  %3414 = vmatprep.subr.mxu0 0.0
  %3415 = vmatpush1.xpose.msra.mxu0 0.0
  %3416 = vmatprep.subr.mxu0 0.0
  %3417 = vmatpush1.xpose.msra.mxu0 0.0
  %3418 = vmatprep.subr.mxu0 0.0
  %3419 = vmatpush1.xpose.msra.mxu0 0.0
  %3420 = vmatprep.subr.mxu0 0.0
  %3421 = vmatpush1.xpose.msra.mxu0 0.0
  %3422 = vmatprep.subr.mxu0 0.0
  %3423 = vmatpush1.xpose.msra.mxu0 0.0
  %3424 = vmatprep.subr.mxu0 0.0
  %3425 = vmatpush1.xpose.msra.mxu0 0.0
  %3426 = vmatprep.subr.mxu0 0.0
  %3427 = vmatpush1.xpose.msra.mxu0 0.0
  %3428 = vmatprep.subr.mxu0 0.0
  %3429 = vmatpush1.xpose.msra.mxu0 0.0
  %3430 = vmatprep.subr.mxu0 0.0
  %3431 = vmatpush1.xpose.msra.mxu0 0.0
  %3432 = vmatprep.subr.mxu0 0.0
  %3433 = vmatpush1.xpose.msra.mxu0 0.0
  %3434 = vmatprep.mubr.f32.mxu0 0.0
  %3435 = vmatmul.mubr.f32.gmra.mrb[0].mxu0 %v3346
  %v3436 = vpop.f32.mrb[0].mxu0
  %v3437 = vadd.f32 %v280, %v3436
  %v3438 = vpop.f32.mrb[0].mxu0
  %3439 = vmatprep.mubr.f32.mxu0 0.0
  %3440 = vmatmul.mubr.f32.gmra.mrb[0].mxu0 %v3348
  %v3441 = vpop.f32.mrb[0].mxu0
  %v3442 = vadd.f32 %v281, %v3441
  %v3443 = vpop.f32.mrb[0].mxu0
  %3444 = vmatprep.mubr.f32.mxu0 0.0
  %3445 = vmatmul.mubr.f32.gmra.mrb[0].mxu0 %v3350
  %v3446 = vpop.f32.mrb[0].mxu0
  %v3447 = vadd.f32 %v282, %v3446
  %v3448 = vpop.f32.mrb[0].mxu0
  %3449 = vmatprep.mubr.f32.mxu0 0.0
  %3450 = vmatmul.mubr.f32.gmra.mrb[0].mxu0 %v3352
  %v3451 = vpop.f32.mrb[0].mxu0
  %v3452 = vadd.f32 %v283, %v3451
  %v3453 = vpop.f32.mrb[0].mxu0
  %3454 = vmatprep.mubr.f32.mxu0 0.0
  %3455 = vmatmul.mubr.f32.gmra.mrb[0].mxu0 %v3354
  %v3456 = vpop.f32.mrb[0].mxu0
  %v3457 = vadd.f32 %v284, %v3456
  %v3458 = vpop.f32.mrb[0].mxu0
  %3459 = vmatprep.mubr.f32.mxu0 0.0
  %3460 = vmatmul.mubr.f32.gmra.mrb[0].mxu0 %v3356
  %v3461 = vpop.f32.mrb[0].mxu0
  %v3462 = vadd.f32 %v285, %v3461
  %v3463 = vpop.f32.mrb[0].mxu0
  %3464 = vdwg.mxu0
  %v3465 = vsel %vm65, %v3437, -inf
  %3466 = vmax.xlane.f32.xlu0 %v3465
  %v3467 = vpop.xlane.xlu0 %3466
  %v3468 = vsel %vm65, %v3442, -inf
  %3469 = vmax.xlane.f32.xlu0 %v3468
  %v3470 = vpop.xlane.xlu0 %3469
  %v3471 = vsel %vm65, %v3447, -inf
  %3472 = vmax.xlane.f32.xlu0 %v3471
  %v3473 = vpop.xlane.xlu0 %3472
  %v3474 = vsel %vm65, %v3452, -inf
  %3475 = vmax.xlane.f32.xlu0 %v3474
  %v3476 = vpop.xlane.xlu0 %3475
  %v3477 = vsel %vm65, %v3457, -inf
  %3478 = vmax.xlane.f32.xlu0 %v3477
  %v3479 = vpop.xlane.xlu0 %3478
  %v3480 = vsel %vm65, %v3462, -inf
  %3481 = vmax.xlane.f32.xlu0 %v3480
  %v3482 = vpop.xlane.xlu0 %3481
  %v3483 = vsub.f32 %v3437, %v3467
  %v3484 = vsub.f32 %v3442, %v3470
  %v3485 = vsub.f32 %v3447, %v3473
  %v3486 = vsub.f32 %v3452, %v3476
  %v3487 = vsub.f32 %v3457, %v3479
  %v3488 = vsub.f32 %v3462, %v3482
  %v3489 = vmul.f32 %v3483, 1.442695
  %v3490 = vpow.pop %v3489
  %v3491 = vmul.f32 %v3484, 1.442695
  %v3492 = vpow.pop %v3491
  %v3493 = vmul.f32 %v3485, 1.442695
  %v3494 = vpow.pop %v3493
  %v3495 = vmul.f32 %v3486, 1.442695
  %v3496 = vpow.pop %v3495
  %v3497 = vmul.f32 %v3487, 1.442695
  %v3498 = vpow.pop %v3497
  %v3499 = vmul.f32 %v3488, 1.442695
  %v3500 = vpow.pop %v3499
  %v3501 = vsel %vm65, %v3490, 0.0
  %3502 = vadd.xlane.f32.xlu0 %v3501
  %v3503 = vpop.xlane.xlu0 %3502
  %v3504 = vsel %vm65, %v3492, 0.0
  %3505 = vadd.xlane.f32.xlu0 %v3504
  %v3506 = vpop.xlane.xlu0 %3505
  %v3507 = vsel %vm65, %v3494, 0.0
  %3508 = vadd.xlane.f32.xlu0 %v3507
  %v3509 = vpop.xlane.xlu0 %3508
  %v3510 = vsel %vm65, %v3496, 0.0
  %3511 = vadd.xlane.f32.xlu0 %v3510
  %v3512 = vpop.xlane.xlu0 %3511
  %v3513 = vsel %vm65, %v3498, 0.0
  %3514 = vadd.xlane.f32.xlu0 %v3513
  %v3515 = vpop.xlane.xlu0 %3514
  %v3516 = vsel %vm65, %v3500, 0.0
  %3517 = vadd.xlane.f32.xlu0 %v3516
  %v3518 = vpop.xlane.xlu0 %3517
  %v3519 = vrcp.pop %v3503
  %v3520 = vrcp.pop %v3506
  %v3521 = vrcp.pop %v3509
  %v3522 = vrcp.pop %v3512
  %v3523 = vrcp.pop %v3515
  %v3524 = vrcp.pop %v3518
  %v3525 = vmul.f32 %v3490, %v3519
  %v3526 = vmul.f32 %v3492, %v3520
  %v3527 = vmul.f32 %v3494, %v3521
  %v3528 = vmul.f32 %v3496, %v3522
  %v3529 = vmul.f32 %v3498, %v3523
  %v3530 = vmul.f32 %v3500, %v3524
  %3531 = vrot.lane.b32.xlu0 %v2943, 56
  %v3532 = vpop.permute.xlu0 %3531
  %3533 = vrot.lane.b32.xlu0 %v2948, 56
  %v3534 = vpop.permute.xlu0 %3533
  %3535 = vrot.lane.b32.xlu0 %v2953, 56
  %v3536 = vpop.permute.xlu0 %3535
  %3537 = vrot.lane.b32.xlu0 %v2958, 56
  %v3538 = vpop.permute.xlu0 %3537
  %3539 = vrot.lane.b32.xlu0 %v2963, 56
  %v3540 = vpop.permute.xlu0 %3539
  %3541 = vrot.lane.b32.xlu0 %v2968, 56
  %v3542 = vpop.permute.xlu0 %3541
  %v3550 = vsel %vm65, %v3525, 0
  %v3553 = vsel %vm65, %v3526, 0
  %v3556 = vsel %vm65, %v3527, 0
  %v3559 = vsel %vm65, %v3528, 0
  %v3562 = vsel %vm65, %v3529, 0
  %v3565 = vsel %vm65, %v3530, 0
  %3567 = vmatprep.subr.mxu0 0.0
  %3568 = vmatpush1.msra.mxu0 %v3532
  %3569 = vmatprep.subr.mxu0 0.0
  %3570 = vmatpush1.msra.mxu0 %v3534
  %3571 = vmatprep.subr.mxu0 0.0
  %3572 = vmatpush1.msra.mxu0 %v3536
  %3573 = vmatprep.subr.mxu0 0.0
  %3574 = vmatpush1.msra.mxu0 %v3538
  %3575 = vmatprep.subr.mxu0 0.0
  %3576 = vmatpush1.msra.mxu0 %v3540
  %3577 = vmatprep.subr.mxu0 0.0
  %3578 = vmatpush1.msra.mxu0 %v3542
  %3579 = vmatprep.subr.mxu0 0.0
  %3580 = vmatpush1.msra.mxu0 0.0
  %3581 = vmatprep.subr.mxu0 0.0
  %3582 = vmatpush1.msra.mxu0 0.0
  %3583 = vmatprep.subr.mxu0 0.0
  %3584 = vmatpush1.msra.mxu0 0.0
  %3585 = vmatprep.subr.mxu0 0.0
  %3586 = vmatpush1.msra.mxu0 0.0
  %3587 = vmatprep.subr.mxu0 0.0
  %3588 = vmatpush1.msra.mxu0 0.0
  %3589 = vmatprep.subr.mxu0 0.0
  %3590 = vmatpush1.msra.mxu0 0.0
  %3591 = vmatprep.subr.mxu0 0.0
  %3592 = vmatpush1.msra.mxu0 0.0
  %3593 = vmatprep.subr.mxu0 0.0
  %3594 = vmatpush1.msra.mxu0 0.0
  %3595 = vmatprep.subr.mxu0 0.0
  %3596 = vmatpush1.msra.mxu0 0.0
  %3597 = vmatprep.subr.mxu0 0.0
  %3598 = vmatpush1.msra.mxu0 0.0
  %3599 = vmatprep.subr.mxu0 0.0
  %3600 = vmatpush1.msra.mxu0 0.0
  %3601 = vmatprep.subr.mxu0 0.0
  %3602 = vmatpush1.msra.mxu0 0.0
  %3603 = vmatprep.subr.mxu0 0.0
  %3604 = vmatpush1.msra.mxu0 0.0
  %3605 = vmatprep.subr.mxu0 0.0
  %3606 = vmatpush1.msra.mxu0 0.0
  %3607 = vmatprep.subr.mxu0 0.0
  %3608 = vmatpush1.msra.mxu0 0.0
  %3609 = vmatprep.subr.mxu0 0.0
  %3610 = vmatpush1.msra.mxu0 0.0
  %3611 = vmatprep.subr.mxu0 0.0
  %3612 = vmatpush1.msra.mxu0 0.0
  %3613 = vmatprep.subr.mxu0 0.0
  %3614 = vmatpush1.msra.mxu0 0.0
  %3615 = vmatprep.subr.mxu0 0.0
  %3616 = vmatpush1.msra.mxu0 0.0
  %3617 = vmatprep.subr.mxu0 0.0
  %3618 = vmatpush1.msra.mxu0 0.0
  %3619 = vmatprep.subr.mxu0 0.0
  %3620 = vmatpush1.msra.mxu0 0.0
  %3621 = vmatprep.subr.mxu0 0.0
  %3622 = vmatpush1.msra.mxu0 0.0
  %3623 = vmatprep.subr.mxu0 0.0
  %3624 = vmatpush1.msra.mxu0 0.0
  %3625 = vmatprep.subr.mxu0 0.0
  %3626 = vmatpush1.msra.mxu0 0.0
  %3627 = vmatprep.subr.mxu0 0.0
  %3628 = vmatpush1.msra.mxu0 0.0
  %3629 = vmatprep.subr.mxu0 0.0
  %3630 = vmatpush1.msra.mxu0 0.0
  %3631 = vmatprep.mubr.f32.mxu0 0.0
  %3632 = vmatmul.mubr.f32.gmra.mrb[0].mxu0 %v3550
  %v3633 = vpop.f32.mrb[0].mxu0
  %v3634 = vadd.f32 0.0, %v3633
  %v3635 = vpop.f32.mrb[0].mxu0
  %3636 = vmatprep.mubr.f32.mxu0 0.0
  %3637 = vmatmul.mubr.f32.gmra.mrb[0].mxu0 %v3553
  %v3638 = vpop.f32.mrb[0].mxu0
  %v3639 = vadd.f32 0.0, %v3638
  %v3640 = vpop.f32.mrb[0].mxu0
  %3641 = vmatprep.mubr.f32.mxu0 0.0
  %3642 = vmatmul.mubr.f32.gmra.mrb[0].mxu0 %v3556
  %v3643 = vpop.f32.mrb[0].mxu0
  %v3644 = vadd.f32 0.0, %v3643
  %v3645 = vpop.f32.mrb[0].mxu0
  %3646 = vmatprep.mubr.f32.mxu0 0.0
  %3647 = vmatmul.mubr.f32.gmra.mrb[0].mxu0 %v3559
  %v3648 = vpop.f32.mrb[0].mxu0
  %v3649 = vadd.f32 0.0, %v3648
  %v3650 = vpop.f32.mrb[0].mxu0
  %3651 = vmatprep.mubr.f32.mxu0 0.0
  %3652 = vmatmul.mubr.f32.gmra.mrb[0].mxu0 %v3562
  %v3653 = vpop.f32.mrb[0].mxu0
  %v3654 = vadd.f32 0.0, %v3653
  %v3655 = vpop.f32.mrb[0].mxu0
  %3656 = vmatprep.mubr.f32.mxu0 0.0
  %3657 = vmatmul.mubr.f32.gmra.mrb[0].mxu0 %v3565
  %v3658 = vpop.f32.mrb[0].mxu0
  %v3659 = vadd.f32 0.0, %v3658
  %v3660 = vpop.f32.mrb[0].mxu0
  %3661 = vdwg.mxu0
  %v3663 = vsel %vm537, %v3634, 0
  %v3666 = vsel %vm537, %v3639, 0
  %v3669 = vsel %vm537, %v3644, 0
  %v3672 = vsel %vm537, %v3649, 0
  %v3675 = vsel %vm537, %v3654, 0
  %v3678 = vsel %vm537, %v3659, 0
  %3680 = vmatprep.subr.mxu0 0.0
  %3681 = vmatpush1.msra.mxu0 %v2973
  %3682 = vmatprep.subr.mxu0 0.0
  %3683 = vmatpush1.msra.mxu0 0.0
  %3684 = vmatprep.subr.mxu0 0.0
  %3685 = vmatpush1.msra.mxu0 0.0
  %3686 = vmatprep.subr.mxu0 0.0
  %3687 = vmatpush1.msra.mxu0 0.0
  %3688 = vmatprep.subr.mxu0 0.0
  %3689 = vmatpush1.msra.mxu0 0.0
  %3690 = vmatprep.subr.mxu0 0.0
  %3691 = vmatpush1.msra.mxu0 0.0
  %3692 = vmatprep.subr.mxu0 0.0
  %3693 = vmatpush1.msra.mxu0 0.0
  %3694 = vmatprep.subr.mxu0 0.0
  %3695 = vmatpush1.msra.mxu0 0.0
  %3696 = vmatprep.subr.mxu0 0.0
  %3697 = vmatpush1.msra.mxu0 0.0
  %3698 = vmatprep.subr.mxu0 0.0
  %3699 = vmatpush1.msra.mxu0 0.0
  %3700 = vmatprep.subr.mxu0 0.0
  %3701 = vmatpush1.msra.mxu0 0.0
  %3702 = vmatprep.subr.mxu0 0.0
  %3703 = vmatpush1.msra.mxu0 0.0
  %3704 = vmatprep.subr.mxu0 0.0
  %3705 = vmatpush1.msra.mxu0 0.0
  %3706 = vmatprep.subr.mxu0 0.0
  %3707 = vmatpush1.msra.mxu0 0.0
  %3708 = vmatprep.subr.mxu0 0.0
  %3709 = vmatpush1.msra.mxu0 0.0
  %3710 = vmatprep.subr.mxu0 0.0
  %3711 = vmatpush1.msra.mxu0 0.0
  %3712 = vmatprep.subr.mxu0 0.0
  %3713 = vmatpush1.msra.mxu0 0.0
  %3714 = vmatprep.subr.mxu0 0.0
  %3715 = vmatpush1.msra.mxu0 0.0
  %3716 = vmatprep.subr.mxu0 0.0
  %3717 = vmatpush1.msra.mxu0 0.0
  %3718 = vmatprep.subr.mxu0 0.0
  %3719 = vmatpush1.msra.mxu0 0.0
  %3720 = vmatprep.subr.mxu0 0.0
  %3721 = vmatpush1.msra.mxu0 0.0
  %3722 = vmatprep.subr.mxu0 0.0
  %3723 = vmatpush1.msra.mxu0 0.0
  %3724 = vmatprep.subr.mxu0 0.0
  %3725 = vmatpush1.msra.mxu0 0.0
  %3726 = vmatprep.subr.mxu0 0.0
  %3727 = vmatpush1.msra.mxu0 0.0
  %3728 = vmatprep.subr.mxu0 0.0
  %3729 = vmatpush1.msra.mxu0 0.0
  %3730 = vmatprep.subr.mxu0 0.0
  %3731 = vmatpush1.msra.mxu0 0.0
  %3732 = vmatprep.subr.mxu0 0.0
  %3733 = vmatpush1.msra.mxu0 0.0
  %3734 = vmatprep.subr.mxu0 0.0
  %3735 = vmatpush1.msra.mxu0 0.0
  %3736 = vmatprep.subr.mxu0 0.0
  %3737 = vmatpush1.msra.mxu0 0.0
  %3738 = vmatprep.subr.mxu0 0.0
  %3739 = vmatpush1.msra.mxu0 0.0
  %3740 = vmatprep.subr.mxu0 0.0
  %3741 = vmatpush1.msra.mxu0 0.0
  %3742 = vmatprep.subr.mxu0 0.0
  %3743 = vmatpush1.msra.mxu0 0.0
  %3744 = vmatprep.mubr.f32.mxu0 0.0
  %3745 = vmatmul.mubr.f32.gmra.mrb[0].mxu0 %v3663
  %v3746 = vpop.f32.mrb[0].mxu0
  %v3747 = vadd.f32 0.0, %v3746
  %v3748 = vpop.f32.mrb[0].mxu0
  %3749 = vmatprep.mubr.f32.mxu0 0.0
  %3750 = vmatmul.mubr.f32.gmra.mrb[0].mxu0 %v3666
  %v3751 = vpop.f32.mrb[0].mxu0
  %v3752 = vadd.f32 0.0, %v3751
  %v3753 = vpop.f32.mrb[0].mxu0
  %3754 = vmatprep.mubr.f32.mxu0 0.0
  %3755 = vmatmul.mubr.f32.gmra.mrb[0].mxu0 %v3669
  %v3756 = vpop.f32.mrb[0].mxu0
  %v3757 = vadd.f32 0.0, %v3756
  %v3758 = vpop.f32.mrb[0].mxu0
  %3759 = vmatprep.mubr.f32.mxu0 0.0
  %3760 = vmatmul.mubr.f32.gmra.mrb[0].mxu0 %v3672
  %v3761 = vpop.f32.mrb[0].mxu0
  %v3762 = vadd.f32 0.0, %v3761
  %v3763 = vpop.f32.mrb[0].mxu0
  %3764 = vmatprep.mubr.f32.mxu0 0.0
  %3765 = vmatmul.mubr.f32.gmra.mrb[0].mxu0 %v3675
  %v3766 = vpop.f32.mrb[0].mxu0
  %v3767 = vadd.f32 0.0, %v3766
  %v3768 = vpop.f32.mrb[0].mxu0
  %3769 = vmatprep.mubr.f32.mxu0 0.0
  %3770 = vmatmul.mubr.f32.gmra.mrb[0].mxu0 %v3678
  %v3771 = vpop.f32.mrb[0].mxu0
  %v3772 = vadd.f32 0.0, %v3771
  %v3773 = vpop.f32.mrb[0].mxu0
  %3774 = vdwg.mxu0
  %v3776 = vsel %vm537, %v3294, 0
  %v3779 = vsel %vm537, %v3299, 0
  %v3782 = vsel %vm537, %v3304, 0
  %v3785 = vsel %vm537, %v3309, 0
  %v3788 = vsel %vm537, %v3314, 0
  %v3791 = vsel %vm537, %v3319, 0
  %3793 = vmatprep.subr.mxu0 0.0
  %3794 = vmatpush1.msra.mxu0 %v2972
  %3795 = vmatprep.subr.mxu0 0.0
  %3796 = vmatpush1.msra.mxu0 0.0
  %3797 = vmatprep.subr.mxu0 0.0
  %3798 = vmatpush1.msra.mxu0 0.0
  %3799 = vmatprep.subr.mxu0 0.0
  %3800 = vmatpush1.msra.mxu0 0.0
  %3801 = vmatprep.subr.mxu0 0.0
  %3802 = vmatpush1.msra.mxu0 0.0
  %3803 = vmatprep.subr.mxu0 0.0
  %3804 = vmatpush1.msra.mxu0 0.0
  %3805 = vmatprep.subr.mxu0 0.0
  %3806 = vmatpush1.msra.mxu0 0.0
  %3807 = vmatprep.subr.mxu0 0.0
  %3808 = vmatpush1.msra.mxu0 0.0
  %3809 = vmatprep.subr.mxu0 0.0
  %3810 = vmatpush1.msra.mxu0 0.0
  %3811 = vmatprep.subr.mxu0 0.0
  %3812 = vmatpush1.msra.mxu0 0.0
  %3813 = vmatprep.subr.mxu0 0.0
  %3814 = vmatpush1.msra.mxu0 0.0
  %3815 = vmatprep.subr.mxu0 0.0
  %3816 = vmatpush1.msra.mxu0 0.0
  %3817 = vmatprep.subr.mxu0 0.0
  %3818 = vmatpush1.msra.mxu0 0.0
  %3819 = vmatprep.subr.mxu0 0.0
  %3820 = vmatpush1.msra.mxu0 0.0
  %3821 = vmatprep.subr.mxu0 0.0
  %3822 = vmatpush1.msra.mxu0 0.0
  %3823 = vmatprep.subr.mxu0 0.0
  %3824 = vmatpush1.msra.mxu0 0.0
  %3825 = vmatprep.subr.mxu0 0.0
  %3826 = vmatpush1.msra.mxu0 0.0
  %3827 = vmatprep.subr.mxu0 0.0
  %3828 = vmatpush1.msra.mxu0 0.0
  %3829 = vmatprep.subr.mxu0 0.0
  %3830 = vmatpush1.msra.mxu0 0.0
  %3831 = vmatprep.subr.mxu0 0.0
  %3832 = vmatpush1.msra.mxu0 0.0
  %3833 = vmatprep.subr.mxu0 0.0
  %3834 = vmatpush1.msra.mxu0 0.0
  %3835 = vmatprep.subr.mxu0 0.0
  %3836 = vmatpush1.msra.mxu0 0.0
  %3837 = vmatprep.subr.mxu0 0.0
  %3838 = vmatpush1.msra.mxu0 0.0
  %3839 = vmatprep.subr.mxu0 0.0
  %3840 = vmatpush1.msra.mxu0 0.0
  %3841 = vmatprep.subr.mxu0 0.0
  %3842 = vmatpush1.msra.mxu0 0.0
  %3843 = vmatprep.subr.mxu0 0.0
  %3844 = vmatpush1.msra.mxu0 0.0
  %3845 = vmatprep.subr.mxu0 0.0
  %3846 = vmatpush1.msra.mxu0 0.0
  %3847 = vmatprep.subr.mxu0 0.0
  %3848 = vmatpush1.msra.mxu0 0.0
  %3849 = vmatprep.subr.mxu0 0.0
  %3850 = vmatpush1.msra.mxu0 0.0
  %3851 = vmatprep.subr.mxu0 0.0
  %3852 = vmatpush1.msra.mxu0 0.0
  %3853 = vmatprep.subr.mxu0 0.0
  %3854 = vmatpush1.msra.mxu0 0.0
  %3855 = vmatprep.subr.mxu0 0.0
  %3856 = vmatpush1.msra.mxu0 0.0
  %3857 = vmatprep.mubr.f32.mxu0 0.0
  %3858 = vmatmul.mubr.f32.gmra.mrb[0].mxu0 %v3776
  %v3859 = vpop.f32.mrb[0].mxu0
  %v3860 = vadd.f32 %v3747, %v3859
  %v3861 = vpop.f32.mrb[0].mxu0
  %3862 = vmatprep.mubr.f32.mxu0 0.0
  %3863 = vmatmul.mubr.f32.gmra.mrb[0].mxu0 %v3779
  %v3864 = vpop.f32.mrb[0].mxu0
  %v3865 = vadd.f32 %v3752, %v3864
  %v3866 = vpop.f32.mrb[0].mxu0
  %3867 = vmatprep.mubr.f32.mxu0 0.0
  %3868 = vmatmul.mubr.f32.gmra.mrb[0].mxu0 %v3782
  %v3869 = vpop.f32.mrb[0].mxu0
  %v3870 = vadd.f32 %v3757, %v3869
  %v3871 = vpop.f32.mrb[0].mxu0
  %3872 = vmatprep.mubr.f32.mxu0 0.0
  %3873 = vmatmul.mubr.f32.gmra.mrb[0].mxu0 %v3785
  %v3874 = vpop.f32.mrb[0].mxu0
  %v3875 = vadd.f32 %v3762, %v3874
  %v3876 = vpop.f32.mrb[0].mxu0
  %3877 = vmatprep.mubr.f32.mxu0 0.0
  %3878 = vmatmul.mubr.f32.gmra.mrb[0].mxu0 %v3788
  %v3879 = vpop.f32.mrb[0].mxu0
  %v3880 = vadd.f32 %v3767, %v3879
  %v3881 = vpop.f32.mrb[0].mxu0
  %3882 = vmatprep.mubr.f32.mxu0 0.0
  %3883 = vmatmul.mubr.f32.gmra.mrb[0].mxu0 %v3791
  %v3884 = vpop.f32.mrb[0].mxu0
  %v3885 = vadd.f32 %v3772, %v3884
  %v3886 = vpop.f32.mrb[0].mxu0
  %3887 = vdwg.mxu0
  %3888 = vrot.lane.b32.xlu0 %v2976, 112
  %v3889 = vpop.permute.xlu0 %3888
  %3890 = vrot.lane.b32.xlu0 %v2977, 112
  %v3891 = vpop.permute.xlu0 %3890
  %3892 = vrot.lane.b32.xlu0 %v2978, 112
  %v3893 = vpop.permute.xlu0 %3892
  %3894 = vrot.lane.b32.xlu0 %v2979, 112
  %v3895 = vpop.permute.xlu0 %3894
  %3896 = vrot.lane.b32.xlu0 %v2980, 112
  %v3897 = vpop.permute.xlu0 %3896
  %3898 = vrot.lane.b32.xlu0 %v2981, 112
  %v3899 = vpop.permute.xlu0 %3898
  %3900 = vrot.lane.b32.xlu0 %v2943, 80
  %v3901 = vpop.permute.xlu0 %3900
  %3902 = vrot.lane.b32.xlu0 %v2948, 80
  %v3903 = vpop.permute.xlu0 %3902
  %3904 = vrot.lane.b32.xlu0 %v2953, 80
  %v3905 = vpop.permute.xlu0 %3904
  %3906 = vrot.lane.b32.xlu0 %v2958, 80
  %v3907 = vpop.permute.xlu0 %3906
  %3908 = vrot.lane.b32.xlu0 %v2963, 80
  %v3909 = vpop.permute.xlu0 %3908
  %3910 = vrot.lane.b32.xlu0 %v2968, 80
  %v3911 = vpop.permute.xlu0 %3910
  %v3912 = vsel %vm537, %v3889, 0
  %v3914 = vsel %vm537, %v3891, 0
  %v3916 = vsel %vm537, %v3893, 0
  %v3918 = vsel %vm537, %v3895, 0
  %v3920 = vsel %vm537, %v3897, 0
  %v3922 = vsel %vm537, %v3899, 0
  %v3924 = vsel %vm537, %v3901, 0
  %v3926 = vsel %vm537, %v3903, 0
  %v3928 = vsel %vm537, %v3905, 0
  %v3930 = vsel %vm537, %v3907, 0
  %v3932 = vsel %vm537, %v3909, 0
  %v3934 = vsel %vm537, %v3911, 0
  %3936 = vmatprep.subr.mxu0 0.0
  %3937 = vmatpush1.xpose.msra.mxu0 %v3924
  %3938 = vmatprep.subr.mxu0 0.0
  %3939 = vmatpush1.xpose.msra.mxu0 %v3926
  %3940 = vmatprep.subr.mxu0 0.0
  %3941 = vmatpush1.xpose.msra.mxu0 %v3928
  %3942 = vmatprep.subr.mxu0 0.0
  %3943 = vmatpush1.xpose.msra.mxu0 %v3930
  %3944 = vmatprep.subr.mxu0 0.0
  %3945 = vmatpush1.xpose.msra.mxu0 %v3932
  %3946 = vmatprep.subr.mxu0 0.0
  %3947 = vmatpush1.xpose.msra.mxu0 %v3934
  %3948 = vmatprep.subr.mxu0 0.0
  %3949 = vmatpush1.xpose.msra.mxu0 0.0
  %3950 = vmatprep.subr.mxu0 0.0
  %3951 = vmatpush1.xpose.msra.mxu0 0.0
  %3952 = vmatprep.subr.mxu0 0.0
  %3953 = vmatpush1.xpose.msra.mxu0 0.0
  %3954 = vmatprep.subr.mxu0 0.0
  %3955 = vmatpush1.xpose.msra.mxu0 0.0
  %3956 = vmatprep.subr.mxu0 0.0
  %3957 = vmatpush1.xpose.msra.mxu0 0.0
  %3958 = vmatprep.subr.mxu0 0.0
  %3959 = vmatpush1.xpose.msra.mxu0 0.0
  %3960 = vmatprep.subr.mxu0 0.0
  %3961 = vmatpush1.xpose.msra.mxu0 0.0
  %3962 = vmatprep.subr.mxu0 0.0
  %3963 = vmatpush1.xpose.msra.mxu0 0.0
  %3964 = vmatprep.subr.mxu0 0.0
  %3965 = vmatpush1.xpose.msra.mxu0 0.0
  %3966 = vmatprep.subr.mxu0 0.0
  %3967 = vmatpush1.xpose.msra.mxu0 0.0
  %3968 = vmatprep.subr.mxu0 0.0
  %3969 = vmatpush1.xpose.msra.mxu0 0.0
  %3970 = vmatprep.subr.mxu0 0.0
  %3971 = vmatpush1.xpose.msra.mxu0 0.0
  %3972 = vmatprep.subr.mxu0 0.0
  %3973 = vmatpush1.xpose.msra.mxu0 0.0
  %3974 = vmatprep.subr.mxu0 0.0
  %3975 = vmatpush1.xpose.msra.mxu0 0.0
  %3976 = vmatprep.subr.mxu0 0.0
  %3977 = vmatpush1.xpose.msra.mxu0 0.0
  %3978 = vmatprep.subr.mxu0 0.0
  %3979 = vmatpush1.xpose.msra.mxu0 0.0
  %3980 = vmatprep.subr.mxu0 0.0
  %3981 = vmatpush1.xpose.msra.mxu0 0.0
  %3982 = vmatprep.subr.mxu0 0.0
  %3983 = vmatpush1.xpose.msra.mxu0 0.0
  %3984 = vmatprep.subr.mxu0 0.0
  %3985 = vmatpush1.xpose.msra.mxu0 0.0
  %3986 = vmatprep.subr.mxu0 0.0
  %3987 = vmatpush1.xpose.msra.mxu0 0.0
  %3988 = vmatprep.subr.mxu0 0.0
  %3989 = vmatpush1.xpose.msra.mxu0 0.0
  %3990 = vmatprep.subr.mxu0 0.0
  %3991 = vmatpush1.xpose.msra.mxu0 0.0
  %3992 = vmatprep.subr.mxu0 0.0
  %3993 = vmatpush1.xpose.msra.mxu0 0.0
  %3994 = vmatprep.subr.mxu0 0.0
  %3995 = vmatpush1.xpose.msra.mxu0 0.0
  %3996 = vmatprep.subr.mxu0 0.0
  %3997 = vmatpush1.xpose.msra.mxu0 0.0
  %3998 = vmatprep.subr.mxu0 0.0
  %3999 = vmatpush1.xpose.msra.mxu0 0.0
  %4000 = vmatprep.mubr.f32.mxu0 0.0
  %4001 = vmatmul.mubr.f32.gmra.mrb[0].mxu0 %v3912
  %v4002 = vpop.f32.mrb[0].mxu0
  %v4003 = vadd.f32 %v280, %v4002
  %v4004 = vpop.f32.mrb[0].mxu0
  %4005 = vmatprep.mubr.f32.mxu0 0.0
  %4006 = vmatmul.mubr.f32.gmra.mrb[0].mxu0 %v3914
  %v4007 = vpop.f32.mrb[0].mxu0
  %v4008 = vadd.f32 %v281, %v4007
  %v4009 = vpop.f32.mrb[0].mxu0
  %4010 = vmatprep.mubr.f32.mxu0 0.0
  %4011 = vmatmul.mubr.f32.gmra.mrb[0].mxu0 %v3916
  %v4012 = vpop.f32.mrb[0].mxu0
  %v4013 = vadd.f32 %v282, %v4012
  %v4014 = vpop.f32.mrb[0].mxu0
  %4015 = vmatprep.mubr.f32.mxu0 0.0
  %4016 = vmatmul.mubr.f32.gmra.mrb[0].mxu0 %v3918
  %v4017 = vpop.f32.mrb[0].mxu0
  %v4018 = vadd.f32 %v283, %v4017
  %v4019 = vpop.f32.mrb[0].mxu0
  %4020 = vmatprep.mubr.f32.mxu0 0.0
  %4021 = vmatmul.mubr.f32.gmra.mrb[0].mxu0 %v3920
  %v4022 = vpop.f32.mrb[0].mxu0
  %v4023 = vadd.f32 %v284, %v4022
  %v4024 = vpop.f32.mrb[0].mxu0
  %4025 = vmatprep.mubr.f32.mxu0 0.0
  %4026 = vmatmul.mubr.f32.gmra.mrb[0].mxu0 %v3922
  %v4027 = vpop.f32.mrb[0].mxu0
  %v4028 = vadd.f32 %v285, %v4027
  %v4029 = vpop.f32.mrb[0].mxu0
  %4030 = vdwg.mxu0
  %v4031 = vsel %vm65, %v4003, -inf
  %4032 = vmax.xlane.f32.xlu0 %v4031
  %v4033 = vpop.xlane.xlu0 %4032
  %v4034 = vsel %vm65, %v4008, -inf
  %4035 = vmax.xlane.f32.xlu0 %v4034
  %v4036 = vpop.xlane.xlu0 %4035
  %v4037 = vsel %vm65, %v4013, -inf
  %4038 = vmax.xlane.f32.xlu0 %v4037
  %v4039 = vpop.xlane.xlu0 %4038
  %v4040 = vsel %vm65, %v4018, -inf
  %4041 = vmax.xlane.f32.xlu0 %v4040
  %v4042 = vpop.xlane.xlu0 %4041
  %v4043 = vsel %vm65, %v4023, -inf
  %4044 = vmax.xlane.f32.xlu0 %v4043
  %v4045 = vpop.xlane.xlu0 %4044
  %v4046 = vsel %vm65, %v4028, -inf
  %4047 = vmax.xlane.f32.xlu0 %v4046
  %v4048 = vpop.xlane.xlu0 %4047
  %v4049 = vsub.f32 %v4003, %v4033
  %v4050 = vsub.f32 %v4008, %v4036
  %v4051 = vsub.f32 %v4013, %v4039
  %v4052 = vsub.f32 %v4018, %v4042
  %v4053 = vsub.f32 %v4023, %v4045
  %v4054 = vsub.f32 %v4028, %v4048
  %v4055 = vmul.f32 %v4049, 1.442695
  %v4056 = vpow.pop %v4055
  %v4057 = vmul.f32 %v4050, 1.442695
  %v4058 = vpow.pop %v4057
  %v4059 = vmul.f32 %v4051, 1.442695
  %v4060 = vpow.pop %v4059
  %v4061 = vmul.f32 %v4052, 1.442695
  %v4062 = vpow.pop %v4061
  %v4063 = vmul.f32 %v4053, 1.442695
  %v4064 = vpow.pop %v4063
  %v4065 = vmul.f32 %v4054, 1.442695
  %v4066 = vpow.pop %v4065
  %v4067 = vsel %vm65, %v4056, 0.0
  %4068 = vadd.xlane.f32.xlu0 %v4067
  %v4069 = vpop.xlane.xlu0 %4068
  %v4070 = vsel %vm65, %v4058, 0.0
  %4071 = vadd.xlane.f32.xlu0 %v4070
  %v4072 = vpop.xlane.xlu0 %4071
  %v4073 = vsel %vm65, %v4060, 0.0
  %4074 = vadd.xlane.f32.xlu0 %v4073
  %v4075 = vpop.xlane.xlu0 %4074
  %v4076 = vsel %vm65, %v4062, 0.0
  %4077 = vadd.xlane.f32.xlu0 %v4076
  %v4078 = vpop.xlane.xlu0 %4077
  %v4079 = vsel %vm65, %v4064, 0.0
  %4080 = vadd.xlane.f32.xlu0 %v4079
  %v4081 = vpop.xlane.xlu0 %4080
  %v4082 = vsel %vm65, %v4066, 0.0
  %4083 = vadd.xlane.f32.xlu0 %v4082
  %v4084 = vpop.xlane.xlu0 %4083
  %v4085 = vrcp.pop %v4069
  %v4086 = vrcp.pop %v4072
  %v4087 = vrcp.pop %v4075
  %v4088 = vrcp.pop %v4078
  %v4089 = vrcp.pop %v4081
  %v4090 = vrcp.pop %v4084
  %v4091 = vmul.f32 %v4056, %v4085
  %v4092 = vmul.f32 %v4058, %v4086
  %v4093 = vmul.f32 %v4060, %v4087
  %v4094 = vmul.f32 %v4062, %v4088
  %v4095 = vmul.f32 %v4064, %v4089
  %v4096 = vmul.f32 %v4066, %v4090
  %4097 = vrot.lane.b32.xlu0 %v2943, 48
  %v4098 = vpop.permute.xlu0 %4097
  %4099 = vrot.lane.b32.xlu0 %v2948, 48
  %v4100 = vpop.permute.xlu0 %4099
  %4101 = vrot.lane.b32.xlu0 %v2953, 48
  %v4102 = vpop.permute.xlu0 %4101
  %4103 = vrot.lane.b32.xlu0 %v2958, 48
  %v4104 = vpop.permute.xlu0 %4103
  %4105 = vrot.lane.b32.xlu0 %v2963, 48
  %v4106 = vpop.permute.xlu0 %4105
  %4107 = vrot.lane.b32.xlu0 %v2968, 48
  %v4108 = vpop.permute.xlu0 %4107
  %v4116 = vsel %vm65, %v4091, 0
  %v4119 = vsel %vm65, %v4092, 0
  %v4122 = vsel %vm65, %v4093, 0
  %v4125 = vsel %vm65, %v4094, 0
  %v4128 = vsel %vm65, %v4095, 0
  %v4131 = vsel %vm65, %v4096, 0
  %4133 = vmatprep.subr.mxu0 0.0
  %4134 = vmatpush1.msra.mxu0 %v4098
  %4135 = vmatprep.subr.mxu0 0.0
  %4136 = vmatpush1.msra.mxu0 %v4100
  %4137 = vmatprep.subr.mxu0 0.0
  %4138 = vmatpush1.msra.mxu0 %v4102
  %4139 = vmatprep.subr.mxu0 0.0
  %4140 = vmatpush1.msra.mxu0 %v4104
  %4141 = vmatprep.subr.mxu0 0.0
  %4142 = vmatpush1.msra.mxu0 %v4106
  %4143 = vmatprep.subr.mxu0 0.0
  %4144 = vmatpush1.msra.mxu0 %v4108
  %4145 = vmatprep.subr.mxu0 0.0
  %4146 = vmatpush1.msra.mxu0 0.0
  %4147 = vmatprep.subr.mxu0 0.0
  %4148 = vmatpush1.msra.mxu0 0.0
  %4149 = vmatprep.subr.mxu0 0.0
  %4150 = vmatpush1.msra.mxu0 0.0
  %4151 = vmatprep.subr.mxu0 0.0
  %4152 = vmatpush1.msra.mxu0 0.0
  %4153 = vmatprep.subr.mxu0 0.0
  %4154 = vmatpush1.msra.mxu0 0.0
  %4155 = vmatprep.subr.mxu0 0.0
  %4156 = vmatpush1.msra.mxu0 0.0
  %4157 = vmatprep.subr.mxu0 0.0
  %4158 = vmatpush1.msra.mxu0 0.0
  %4159 = vmatprep.subr.mxu0 0.0
  %4160 = vmatpush1.msra.mxu0 0.0
  %4161 = vmatprep.subr.mxu0 0.0
  %4162 = vmatpush1.msra.mxu0 0.0
  %4163 = vmatprep.subr.mxu0 0.0
  %4164 = vmatpush1.msra.mxu0 0.0
  %4165 = vmatprep.subr.mxu0 0.0
  %4166 = vmatpush1.msra.mxu0 0.0
  %4167 = vmatprep.subr.mxu0 0.0
  %4168 = vmatpush1.msra.mxu0 0.0
  %4169 = vmatprep.subr.mxu0 0.0
  %4170 = vmatpush1.msra.mxu0 0.0
  %4171 = vmatprep.subr.mxu0 0.0
  %4172 = vmatpush1.msra.mxu0 0.0
  %4173 = vmatprep.subr.mxu0 0.0
  %4174 = vmatpush1.msra.mxu0 0.0
  %4175 = vmatprep.subr.mxu0 0.0
  %4176 = vmatpush1.msra.mxu0 0.0
  %4177 = vmatprep.subr.mxu0 0.0
  %4178 = vmatpush1.msra.mxu0 0.0
  %4179 = vmatprep.subr.mxu0 0.0
  %4180 = vmatpush1.msra.mxu0 0.0
  %4181 = vmatprep.subr.mxu0 0.0
  %4182 = vmatpush1.msra.mxu0 0.0
  %4183 = vmatprep.subr.mxu0 0.0
  %4184 = vmatpush1.msra.mxu0 0.0
  %4185 = vmatprep.subr.mxu0 0.0
  %4186 = vmatpush1.msra.mxu0 0.0
  %4187 = vmatprep.subr.mxu0 0.0
  %4188 = vmatpush1.msra.mxu0 0.0
  %4189 = vmatprep.subr.mxu0 0.0
  %4190 = vmatpush1.msra.mxu0 0.0
  %4191 = vmatprep.subr.mxu0 0.0
  %4192 = vmatpush1.msra.mxu0 0.0
  %4193 = vmatprep.subr.mxu0 0.0
  %4194 = vmatpush1.msra.mxu0 0.0
  %4195 = vmatprep.subr.mxu0 0.0
  %4196 = vmatpush1.msra.mxu0 0.0
  %4197 = vmatprep.mubr.f32.mxu0 0.0
  %4198 = vmatmul.mubr.f32.gmra.mrb[0].mxu0 %v4116
  %v4199 = vpop.f32.mrb[0].mxu0
  %v4200 = vadd.f32 0.0, %v4199
  %v4201 = vpop.f32.mrb[0].mxu0
  %4202 = vmatprep.mubr.f32.mxu0 0.0
  %4203 = vmatmul.mubr.f32.gmra.mrb[0].mxu0 %v4119
  %v4204 = vpop.f32.mrb[0].mxu0
  %v4205 = vadd.f32 0.0, %v4204
  %v4206 = vpop.f32.mrb[0].mxu0
  %4207 = vmatprep.mubr.f32.mxu0 0.0
  %4208 = vmatmul.mubr.f32.gmra.mrb[0].mxu0 %v4122
  %v4209 = vpop.f32.mrb[0].mxu0
  %v4210 = vadd.f32 0.0, %v4209
  %v4211 = vpop.f32.mrb[0].mxu0
  %4212 = vmatprep.mubr.f32.mxu0 0.0
  %4213 = vmatmul.mubr.f32.gmra.mrb[0].mxu0 %v4125
  %v4214 = vpop.f32.mrb[0].mxu0
  %v4215 = vadd.f32 0.0, %v4214
  %v4216 = vpop.f32.mrb[0].mxu0
  %4217 = vmatprep.mubr.f32.mxu0 0.0
  %4218 = vmatmul.mubr.f32.gmra.mrb[0].mxu0 %v4128
  %v4219 = vpop.f32.mrb[0].mxu0
  %v4220 = vadd.f32 0.0, %v4219
  %v4221 = vpop.f32.mrb[0].mxu0
  %4222 = vmatprep.mubr.f32.mxu0 0.0
  %4223 = vmatmul.mubr.f32.gmra.mrb[0].mxu0 %v4131
  %v4224 = vpop.f32.mrb[0].mxu0
  %v4225 = vadd.f32 0.0, %v4224
  %v4226 = vpop.f32.mrb[0].mxu0
  %4227 = vdwg.mxu0
  %v4229 = vsel %vm537, %v4200, 0
  %v4232 = vsel %vm537, %v4205, 0
  %v4235 = vsel %vm537, %v4210, 0
  %v4238 = vsel %vm537, %v4215, 0
  %v4241 = vsel %vm537, %v4220, 0
  %v4244 = vsel %vm537, %v4225, 0
  %4246 = vmatprep.subr.mxu0 0.0
  %4247 = vmatpush1.msra.mxu0 %v2974
  %4248 = vmatprep.subr.mxu0 0.0
  %4249 = vmatpush1.msra.mxu0 0.0
  %4250 = vmatprep.subr.mxu0 0.0
  %4251 = vmatpush1.msra.mxu0 0.0
  %4252 = vmatprep.subr.mxu0 0.0
  %4253 = vmatpush1.msra.mxu0 0.0
  %4254 = vmatprep.subr.mxu0 0.0
  %4255 = vmatpush1.msra.mxu0 0.0
  %4256 = vmatprep.subr.mxu0 0.0
  %4257 = vmatpush1.msra.mxu0 0.0
  %4258 = vmatprep.subr.mxu0 0.0
  %4259 = vmatpush1.msra.mxu0 0.0
  %4260 = vmatprep.subr.mxu0 0.0
  %4261 = vmatpush1.msra.mxu0 0.0
  %4262 = vmatprep.subr.mxu0 0.0
  %4263 = vmatpush1.msra.mxu0 0.0
  %4264 = vmatprep.subr.mxu0 0.0
  %4265 = vmatpush1.msra.mxu0 0.0
  %4266 = vmatprep.subr.mxu0 0.0
  %4267 = vmatpush1.msra.mxu0 0.0
  %4268 = vmatprep.subr.mxu0 0.0
  %4269 = vmatpush1.msra.mxu0 0.0
  %4270 = vmatprep.subr.mxu0 0.0
  %4271 = vmatpush1.msra.mxu0 0.0
  %4272 = vmatprep.subr.mxu0 0.0
  %4273 = vmatpush1.msra.mxu0 0.0
  %4274 = vmatprep.subr.mxu0 0.0
  %4275 = vmatpush1.msra.mxu0 0.0
  %4276 = vmatprep.subr.mxu0 0.0
  %4277 = vmatpush1.msra.mxu0 0.0
  %4278 = vmatprep.subr.mxu0 0.0
  %4279 = vmatpush1.msra.mxu0 0.0
  %4280 = vmatprep.subr.mxu0 0.0
  %4281 = vmatpush1.msra.mxu0 0.0
  %4282 = vmatprep.subr.mxu0 0.0
  %4283 = vmatpush1.msra.mxu0 0.0
  %4284 = vmatprep.subr.mxu0 0.0
  %4285 = vmatpush1.msra.mxu0 0.0
  %4286 = vmatprep.subr.mxu0 0.0
  %4287 = vmatpush1.msra.mxu0 0.0
  %4288 = vmatprep.subr.mxu0 0.0
  %4289 = vmatpush1.msra.mxu0 0.0
  %4290 = vmatprep.subr.mxu0 0.0
  %4291 = vmatpush1.msra.mxu0 0.0
  %4292 = vmatprep.subr.mxu0 0.0
  %4293 = vmatpush1.msra.mxu0 0.0
  %4294 = vmatprep.subr.mxu0 0.0
  %4295 = vmatpush1.msra.mxu0 0.0
  %4296 = vmatprep.subr.mxu0 0.0
  %4297 = vmatpush1.msra.mxu0 0.0
  %4298 = vmatprep.subr.mxu0 0.0
  %4299 = vmatpush1.msra.mxu0 0.0
  %4300 = vmatprep.subr.mxu0 0.0
  %4301 = vmatpush1.msra.mxu0 0.0
  %4302 = vmatprep.subr.mxu0 0.0
  %4303 = vmatpush1.msra.mxu0 0.0
  %4304 = vmatprep.subr.mxu0 0.0
  %4305 = vmatpush1.msra.mxu0 0.0
  %4306 = vmatprep.subr.mxu0 0.0
  %4307 = vmatpush1.msra.mxu0 0.0
  %4308 = vmatprep.subr.mxu0 0.0
  %4309 = vmatpush1.msra.mxu0 0.0
  %4310 = vmatprep.mubr.f32.mxu0 0.0
  %4311 = vmatmul.mubr.f32.gmra.mrb[0].mxu0 %v4229
  %v4312 = vpop.f32.mrb[0].mxu0
  %v4313 = vadd.f32 0.0, %v4312
  %v4314 = vpop.f32.mrb[0].mxu0
  %4315 = vmatprep.mubr.f32.mxu0 0.0
  %4316 = vmatmul.mubr.f32.gmra.mrb[0].mxu0 %v4232
  %v4317 = vpop.f32.mrb[0].mxu0
  %v4318 = vadd.f32 0.0, %v4317
  %v4319 = vpop.f32.mrb[0].mxu0
  %4320 = vmatprep.mubr.f32.mxu0 0.0
  %4321 = vmatmul.mubr.f32.gmra.mrb[0].mxu0 %v4235
  %v4322 = vpop.f32.mrb[0].mxu0
  %v4323 = vadd.f32 0.0, %v4322
  %v4324 = vpop.f32.mrb[0].mxu0
  %4325 = vmatprep.mubr.f32.mxu0 0.0
  %4326 = vmatmul.mubr.f32.gmra.mrb[0].mxu0 %v4238
  %v4327 = vpop.f32.mrb[0].mxu0
  %v4328 = vadd.f32 0.0, %v4327
  %v4329 = vpop.f32.mrb[0].mxu0
  %4330 = vmatprep.mubr.f32.mxu0 0.0
  %4331 = vmatmul.mubr.f32.gmra.mrb[0].mxu0 %v4241
  %v4332 = vpop.f32.mrb[0].mxu0
  %v4333 = vadd.f32 0.0, %v4332
  %v4334 = vpop.f32.mrb[0].mxu0
  %4335 = vmatprep.mubr.f32.mxu0 0.0
  %4336 = vmatmul.mubr.f32.gmra.mrb[0].mxu0 %v4244
  %v4337 = vpop.f32.mrb[0].mxu0
  %v4338 = vadd.f32 0.0, %v4337
  %v4339 = vpop.f32.mrb[0].mxu0
  %4340 = vdwg.mxu0
  %v4341 = vadd.f32 %v3860, %v4313
  %v4342 = vadd.f32 %v3865, %v4318
  %v4343 = vadd.f32 %v3870, %v4323
  %v4344 = vadd.f32 %v3875, %v4328
  %v4345 = vadd.f32 %v3880, %v4333
  %v4346 = vadd.f32 %v3885, %v4338
  %4347 = vrot.lane.b32.xlu0 %v2976, 104
  %v4348 = vpop.permute.xlu0 %4347
  %4349 = vrot.lane.b32.xlu0 %v2977, 104
  %v4350 = vpop.permute.xlu0 %4349
  %4351 = vrot.lane.b32.xlu0 %v2978, 104
  %v4352 = vpop.permute.xlu0 %4351
  %4353 = vrot.lane.b32.xlu0 %v2979, 104
  %v4354 = vpop.permute.xlu0 %4353
  %4355 = vrot.lane.b32.xlu0 %v2980, 104
  %v4356 = vpop.permute.xlu0 %4355
  %4357 = vrot.lane.b32.xlu0 %v2981, 104
  %v4358 = vpop.permute.xlu0 %4357
  %4359 = vrot.lane.b32.xlu0 %v2943, 72
  %v4360 = vpop.permute.xlu0 %4359
  %4361 = vrot.lane.b32.xlu0 %v2948, 72
  %v4362 = vpop.permute.xlu0 %4361
  %4363 = vrot.lane.b32.xlu0 %v2953, 72
  %v4364 = vpop.permute.xlu0 %4363
  %4365 = vrot.lane.b32.xlu0 %v2958, 72
  %v4366 = vpop.permute.xlu0 %4365
  %4367 = vrot.lane.b32.xlu0 %v2963, 72
  %v4368 = vpop.permute.xlu0 %4367
  %4369 = vrot.lane.b32.xlu0 %v2968, 72
  %v4370 = vpop.permute.xlu0 %4369
  %v4371 = vsel %vm537, %v4348, 0
  %v4373 = vsel %vm537, %v4350, 0
  %v4375 = vsel %vm537, %v4352, 0
  %v4377 = vsel %vm537, %v4354, 0
  %v4379 = vsel %vm537, %v4356, 0
  %v4381 = vsel %vm537, %v4358, 0
  %v4383 = vsel %vm537, %v4360, 0
  %v4385 = vsel %vm537, %v4362, 0
  %v4387 = vsel %vm537, %v4364, 0
  %v4389 = vsel %vm537, %v4366, 0
  %v4391 = vsel %vm537, %v4368, 0
  %v4393 = vsel %vm537, %v4370, 0
  %4395 = vmatprep.subr.mxu0 0.0
  %4396 = vmatpush1.xpose.msra.mxu0 %v4383
  %4397 = vmatprep.subr.mxu0 0.0
  %4398 = vmatpush1.xpose.msra.mxu0 %v4385
  %4399 = vmatprep.subr.mxu0 0.0
  %4400 = vmatpush1.xpose.msra.mxu0 %v4387
  %4401 = vmatprep.subr.mxu0 0.0
  %4402 = vmatpush1.xpose.msra.mxu0 %v4389
  %4403 = vmatprep.subr.mxu0 0.0
  %4404 = vmatpush1.xpose.msra.mxu0 %v4391
  %4405 = vmatprep.subr.mxu0 0.0
  %4406 = vmatpush1.xpose.msra.mxu0 %v4393
  %4407 = vmatprep.subr.mxu0 0.0
  %4408 = vmatpush1.xpose.msra.mxu0 0.0
  %4409 = vmatprep.subr.mxu0 0.0
  %4410 = vmatpush1.xpose.msra.mxu0 0.0
  %4411 = vmatprep.subr.mxu0 0.0
  %4412 = vmatpush1.xpose.msra.mxu0 0.0
  %4413 = vmatprep.subr.mxu0 0.0
  %4414 = vmatpush1.xpose.msra.mxu0 0.0
  %4415 = vmatprep.subr.mxu0 0.0
  %4416 = vmatpush1.xpose.msra.mxu0 0.0
  %4417 = vmatprep.subr.mxu0 0.0
  %4418 = vmatpush1.xpose.msra.mxu0 0.0
  %4419 = vmatprep.subr.mxu0 0.0
  %4420 = vmatpush1.xpose.msra.mxu0 0.0
  %4421 = vmatprep.subr.mxu0 0.0
  %4422 = vmatpush1.xpose.msra.mxu0 0.0
  %4423 = vmatprep.subr.mxu0 0.0
  %4424 = vmatpush1.xpose.msra.mxu0 0.0
  %4425 = vmatprep.subr.mxu0 0.0
  %4426 = vmatpush1.xpose.msra.mxu0 0.0
  %4427 = vmatprep.subr.mxu0 0.0
  %4428 = vmatpush1.xpose.msra.mxu0 0.0
  %4429 = vmatprep.subr.mxu0 0.0
  %4430 = vmatpush1.xpose.msra.mxu0 0.0
  %4431 = vmatprep.subr.mxu0 0.0
  %4432 = vmatpush1.xpose.msra.mxu0 0.0
  %4433 = vmatprep.subr.mxu0 0.0
  %4434 = vmatpush1.xpose.msra.mxu0 0.0
  %4435 = vmatprep.subr.mxu0 0.0
  %4436 = vmatpush1.xpose.msra.mxu0 0.0
  %4437 = vmatprep.subr.mxu0 0.0
  %4438 = vmatpush1.xpose.msra.mxu0 0.0
  %4439 = vmatprep.subr.mxu0 0.0
  %4440 = vmatpush1.xpose.msra.mxu0 0.0
  %4441 = vmatprep.subr.mxu0 0.0
  %4442 = vmatpush1.xpose.msra.mxu0 0.0
  %4443 = vmatprep.subr.mxu0 0.0
  %4444 = vmatpush1.xpose.msra.mxu0 0.0
  %4445 = vmatprep.subr.mxu0 0.0
  %4446 = vmatpush1.xpose.msra.mxu0 0.0
  %4447 = vmatprep.subr.mxu0 0.0
  %4448 = vmatpush1.xpose.msra.mxu0 0.0
  %4449 = vmatprep.subr.mxu0 0.0
  %4450 = vmatpush1.xpose.msra.mxu0 0.0
  %4451 = vmatprep.subr.mxu0 0.0
  %4452 = vmatpush1.xpose.msra.mxu0 0.0
  %4453 = vmatprep.subr.mxu0 0.0
  %4454 = vmatpush1.xpose.msra.mxu0 0.0
  %4455 = vmatprep.subr.mxu0 0.0
  %4456 = vmatpush1.xpose.msra.mxu0 0.0
  %4457 = vmatprep.subr.mxu0 0.0
  %4458 = vmatpush1.xpose.msra.mxu0 0.0
  %4459 = vmatprep.mubr.f32.mxu0 0.0
  %4460 = vmatmul.mubr.f32.gmra.mrb[0].mxu0 %v4371
  %v4461 = vpop.f32.mrb[0].mxu0
  %v4462 = vadd.f32 %v280, %v4461
  %v4463 = vpop.f32.mrb[0].mxu0
  %4464 = vmatprep.mubr.f32.mxu0 0.0
  %4465 = vmatmul.mubr.f32.gmra.mrb[0].mxu0 %v4373
  %v4466 = vpop.f32.mrb[0].mxu0
  %v4467 = vadd.f32 %v281, %v4466
  %v4468 = vpop.f32.mrb[0].mxu0
  %4469 = vmatprep.mubr.f32.mxu0 0.0
  %4470 = vmatmul.mubr.f32.gmra.mrb[0].mxu0 %v4375
  %v4471 = vpop.f32.mrb[0].mxu0
  %v4472 = vadd.f32 %v282, %v4471
  %v4473 = vpop.f32.mrb[0].mxu0
  %4474 = vmatprep.mubr.f32.mxu0 0.0
  %4475 = vmatmul.mubr.f32.gmra.mrb[0].mxu0 %v4377
  %v4476 = vpop.f32.mrb[0].mxu0
  %v4477 = vadd.f32 %v283, %v4476
  %v4478 = vpop.f32.mrb[0].mxu0
  %4479 = vmatprep.mubr.f32.mxu0 0.0
  %4480 = vmatmul.mubr.f32.gmra.mrb[0].mxu0 %v4379
  %v4481 = vpop.f32.mrb[0].mxu0
  %v4482 = vadd.f32 %v284, %v4481
  %v4483 = vpop.f32.mrb[0].mxu0
  %4484 = vmatprep.mubr.f32.mxu0 0.0
  %4485 = vmatmul.mubr.f32.gmra.mrb[0].mxu0 %v4381
  %v4486 = vpop.f32.mrb[0].mxu0
  %v4487 = vadd.f32 %v285, %v4486
  %v4488 = vpop.f32.mrb[0].mxu0
  %4489 = vdwg.mxu0
  %v4490 = vsel %vm65, %v4462, -inf
  %4491 = vmax.xlane.f32.xlu0 %v4490
  %v4492 = vpop.xlane.xlu0 %4491
  %v4493 = vsel %vm65, %v4467, -inf
  %4494 = vmax.xlane.f32.xlu0 %v4493
  %v4495 = vpop.xlane.xlu0 %4494
  %v4496 = vsel %vm65, %v4472, -inf
  %4497 = vmax.xlane.f32.xlu0 %v4496
  %v4498 = vpop.xlane.xlu0 %4497
  %v4499 = vsel %vm65, %v4477, -inf
  %4500 = vmax.xlane.f32.xlu0 %v4499
  %v4501 = vpop.xlane.xlu0 %4500
  %v4502 = vsel %vm65, %v4482, -inf
  %4503 = vmax.xlane.f32.xlu0 %v4502
  %v4504 = vpop.xlane.xlu0 %4503
  %v4505 = vsel %vm65, %v4487, -inf
  %4506 = vmax.xlane.f32.xlu0 %v4505
  %v4507 = vpop.xlane.xlu0 %4506
  %v4508 = vsub.f32 %v4462, %v4492
  %v4509 = vsub.f32 %v4467, %v4495
  %v4510 = vsub.f32 %v4472, %v4498
  %v4511 = vsub.f32 %v4477, %v4501
  %v4512 = vsub.f32 %v4482, %v4504
  %v4513 = vsub.f32 %v4487, %v4507
  %v4514 = vmul.f32 %v4508, 1.442695
  %v4515 = vpow.pop %v4514
  %v4516 = vmul.f32 %v4509, 1.442695
  %v4517 = vpow.pop %v4516
  %v4518 = vmul.f32 %v4510, 1.442695
  %v4519 = vpow.pop %v4518
  %v4520 = vmul.f32 %v4511, 1.442695
  %v4521 = vpow.pop %v4520
  %v4522 = vmul.f32 %v4512, 1.442695
  %v4523 = vpow.pop %v4522
  %v4524 = vmul.f32 %v4513, 1.442695
  %v4525 = vpow.pop %v4524
  %v4526 = vsel %vm65, %v4515, 0.0
  %4527 = vadd.xlane.f32.xlu0 %v4526
  %v4528 = vpop.xlane.xlu0 %4527
  %v4529 = vsel %vm65, %v4517, 0.0
  %4530 = vadd.xlane.f32.xlu0 %v4529
  %v4531 = vpop.xlane.xlu0 %4530
  %v4532 = vsel %vm65, %v4519, 0.0
  %4533 = vadd.xlane.f32.xlu0 %v4532
  %v4534 = vpop.xlane.xlu0 %4533
  %v4535 = vsel %vm65, %v4521, 0.0
  %4536 = vadd.xlane.f32.xlu0 %v4535
  %v4537 = vpop.xlane.xlu0 %4536
  %v4538 = vsel %vm65, %v4523, 0.0
  %4539 = vadd.xlane.f32.xlu0 %v4538
  %v4540 = vpop.xlane.xlu0 %4539
  %v4541 = vsel %vm65, %v4525, 0.0
  %4542 = vadd.xlane.f32.xlu0 %v4541
  %v4543 = vpop.xlane.xlu0 %4542
  %v4544 = vrcp.pop %v4528
  %v4545 = vrcp.pop %v4531
  %v4546 = vrcp.pop %v4534
  %v4547 = vrcp.pop %v4537
  %v4548 = vrcp.pop %v4540
  %v4549 = vrcp.pop %v4543
  %v4550 = vmul.f32 %v4515, %v4544
  %v4551 = vmul.f32 %v4517, %v4545
  %v4552 = vmul.f32 %v4519, %v4546
  %v4553 = vmul.f32 %v4521, %v4547
  %v4554 = vmul.f32 %v4523, %v4548
  %v4555 = vmul.f32 %v4525, %v4549
  %4556 = vrot.lane.b32.xlu0 %v2943, 40
  %v4557 = vpop.permute.xlu0 %4556
  %4558 = vrot.lane.b32.xlu0 %v2948, 40
  %v4559 = vpop.permute.xlu0 %4558
  %4560 = vrot.lane.b32.xlu0 %v2953, 40
  %v4561 = vpop.permute.xlu0 %4560
  %4562 = vrot.lane.b32.xlu0 %v2958, 40
  %v4563 = vpop.permute.xlu0 %4562
  %4564 = vrot.lane.b32.xlu0 %v2963, 40
  %v4565 = vpop.permute.xlu0 %4564
  %4566 = vrot.lane.b32.xlu0 %v2968, 40
  %v4567 = vpop.permute.xlu0 %4566
  %v4575 = vsel %vm65, %v4550, 0
  %v4578 = vsel %vm65, %v4551, 0
  %v4581 = vsel %vm65, %v4552, 0
  %v4584 = vsel %vm65, %v4553, 0
  %v4587 = vsel %vm65, %v4554, 0
  %v4590 = vsel %vm65, %v4555, 0
  %4592 = vmatprep.subr.mxu0 0.0
  %4593 = vmatpush1.msra.mxu0 %v4557
  %4594 = vmatprep.subr.mxu0 0.0
  %4595 = vmatpush1.msra.mxu0 %v4559
  %4596 = vmatprep.subr.mxu0 0.0
  %4597 = vmatpush1.msra.mxu0 %v4561
  %4598 = vmatprep.subr.mxu0 0.0
  %4599 = vmatpush1.msra.mxu0 %v4563
  %4600 = vmatprep.subr.mxu0 0.0
  %4601 = vmatpush1.msra.mxu0 %v4565
  %4602 = vmatprep.subr.mxu0 0.0
  %4603 = vmatpush1.msra.mxu0 %v4567
  %4604 = vmatprep.subr.mxu0 0.0
  %4605 = vmatpush1.msra.mxu0 0.0
  %4606 = vmatprep.subr.mxu0 0.0
  %4607 = vmatpush1.msra.mxu0 0.0
  %4608 = vmatprep.subr.mxu0 0.0
  %4609 = vmatpush1.msra.mxu0 0.0
  %4610 = vmatprep.subr.mxu0 0.0
  %4611 = vmatpush1.msra.mxu0 0.0
  %4612 = vmatprep.subr.mxu0 0.0
  %4613 = vmatpush1.msra.mxu0 0.0
  %4614 = vmatprep.subr.mxu0 0.0
  %4615 = vmatpush1.msra.mxu0 0.0
  %4616 = vmatprep.subr.mxu0 0.0
  %4617 = vmatpush1.msra.mxu0 0.0
  %4618 = vmatprep.subr.mxu0 0.0
  %4619 = vmatpush1.msra.mxu0 0.0
  %4620 = vmatprep.subr.mxu0 0.0
  %4621 = vmatpush1.msra.mxu0 0.0
  %4622 = vmatprep.subr.mxu0 0.0
  %4623 = vmatpush1.msra.mxu0 0.0
  %4624 = vmatprep.subr.mxu0 0.0
  %4625 = vmatpush1.msra.mxu0 0.0
  %4626 = vmatprep.subr.mxu0 0.0
  %4627 = vmatpush1.msra.mxu0 0.0
  %4628 = vmatprep.subr.mxu0 0.0
  %4629 = vmatpush1.msra.mxu0 0.0
  %4630 = vmatprep.subr.mxu0 0.0
  %4631 = vmatpush1.msra.mxu0 0.0
  %4632 = vmatprep.subr.mxu0 0.0
  %4633 = vmatpush1.msra.mxu0 0.0
  %4634 = vmatprep.subr.mxu0 0.0
  %4635 = vmatpush1.msra.mxu0 0.0
  %4636 = vmatprep.subr.mxu0 0.0
  %4637 = vmatpush1.msra.mxu0 0.0
  %4638 = vmatprep.subr.mxu0 0.0
  %4639 = vmatpush1.msra.mxu0 0.0
  %4640 = vmatprep.subr.mxu0 0.0
  %4641 = vmatpush1.msra.mxu0 0.0
  %4642 = vmatprep.subr.mxu0 0.0
  %4643 = vmatpush1.msra.mxu0 0.0
  %4644 = vmatprep.subr.mxu0 0.0
  %4645 = vmatpush1.msra.mxu0 0.0
  %4646 = vmatprep.subr.mxu0 0.0
  %4647 = vmatpush1.msra.mxu0 0.0
  %4648 = vmatprep.subr.mxu0 0.0
  %4649 = vmatpush1.msra.mxu0 0.0
  %4650 = vmatprep.subr.mxu0 0.0
  %4651 = vmatpush1.msra.mxu0 0.0
  %4652 = vmatprep.subr.mxu0 0.0
  %4653 = vmatpush1.msra.mxu0 0.0
  %4654 = vmatprep.subr.mxu0 0.0
  %4655 = vmatpush1.msra.mxu0 0.0
  %4656 = vmatprep.mubr.f32.mxu0 0.0
  %4657 = vmatmul.mubr.f32.gmra.mrb[0].mxu0 %v4575
  %v4658 = vpop.f32.mrb[0].mxu0
  %v4659 = vadd.f32 0.0, %v4658
  %v4660 = vpop.f32.mrb[0].mxu0
  %4661 = vmatprep.mubr.f32.mxu0 0.0
  %4662 = vmatmul.mubr.f32.gmra.mrb[0].mxu0 %v4578
  %v4663 = vpop.f32.mrb[0].mxu0
  %v4664 = vadd.f32 0.0, %v4663
  %v4665 = vpop.f32.mrb[0].mxu0
  %4666 = vmatprep.mubr.f32.mxu0 0.0
  %4667 = vmatmul.mubr.f32.gmra.mrb[0].mxu0 %v4581
  %v4668 = vpop.f32.mrb[0].mxu0
  %v4669 = vadd.f32 0.0, %v4668
  %v4670 = vpop.f32.mrb[0].mxu0
  %4671 = vmatprep.mubr.f32.mxu0 0.0
  %4672 = vmatmul.mubr.f32.gmra.mrb[0].mxu0 %v4584
  %v4673 = vpop.f32.mrb[0].mxu0
  %v4674 = vadd.f32 0.0, %v4673
  %v4675 = vpop.f32.mrb[0].mxu0
  %4676 = vmatprep.mubr.f32.mxu0 0.0
  %4677 = vmatmul.mubr.f32.gmra.mrb[0].mxu0 %v4587
  %v4678 = vpop.f32.mrb[0].mxu0
  %v4679 = vadd.f32 0.0, %v4678
  %v4680 = vpop.f32.mrb[0].mxu0
  %4681 = vmatprep.mubr.f32.mxu0 0.0
  %4682 = vmatmul.mubr.f32.gmra.mrb[0].mxu0 %v4590
  %v4683 = vpop.f32.mrb[0].mxu0
  %v4684 = vadd.f32 0.0, %v4683
  %v4685 = vpop.f32.mrb[0].mxu0
  %4686 = vdwg.mxu0
  %v4688 = vsel %vm537, %v4659, 0
  %v4691 = vsel %vm537, %v4664, 0
  %v4694 = vsel %vm537, %v4669, 0
  %v4697 = vsel %vm537, %v4674, 0
  %v4700 = vsel %vm537, %v4679, 0
  %v4703 = vsel %vm537, %v4684, 0
  %4705 = vmatprep.subr.mxu0 0.0
  %4706 = vmatpush1.msra.mxu0 %v2975
  %4707 = vmatprep.subr.mxu0 0.0
  %4708 = vmatpush1.msra.mxu0 0.0
  %4709 = vmatprep.subr.mxu0 0.0
  %4710 = vmatpush1.msra.mxu0 0.0
  %4711 = vmatprep.subr.mxu0 0.0
  %4712 = vmatpush1.msra.mxu0 0.0
  %4713 = vmatprep.subr.mxu0 0.0
  %4714 = vmatpush1.msra.mxu0 0.0
  %4715 = vmatprep.subr.mxu0 0.0
  %4716 = vmatpush1.msra.mxu0 0.0
  %4717 = vmatprep.subr.mxu0 0.0
  %4718 = vmatpush1.msra.mxu0 0.0
  %4719 = vmatprep.subr.mxu0 0.0
  %4720 = vmatpush1.msra.mxu0 0.0
  %4721 = vmatprep.subr.mxu0 0.0
  %4722 = vmatpush1.msra.mxu0 0.0
  %4723 = vmatprep.subr.mxu0 0.0
  %4724 = vmatpush1.msra.mxu0 0.0
  %4725 = vmatprep.subr.mxu0 0.0
  %4726 = vmatpush1.msra.mxu0 0.0
  %4727 = vmatprep.subr.mxu0 0.0
  %4728 = vmatpush1.msra.mxu0 0.0
  %4729 = vmatprep.subr.mxu0 0.0
  %4730 = vmatpush1.msra.mxu0 0.0
  %4731 = vmatprep.subr.mxu0 0.0
  %4732 = vmatpush1.msra.mxu0 0.0
  %4733 = vmatprep.subr.mxu0 0.0
  %4734 = vmatpush1.msra.mxu0 0.0
  %4735 = vmatprep.subr.mxu0 0.0
  %4736 = vmatpush1.msra.mxu0 0.0
  %4737 = vmatprep.subr.mxu0 0.0
  %4738 = vmatpush1.msra.mxu0 0.0
  %4739 = vmatprep.subr.mxu0 0.0
  %4740 = vmatpush1.msra.mxu0 0.0
  %4741 = vmatprep.subr.mxu0 0.0
  %4742 = vmatpush1.msra.mxu0 0.0
  %4743 = vmatprep.subr.mxu0 0.0
  %4744 = vmatpush1.msra.mxu0 0.0
  %4745 = vmatprep.subr.mxu0 0.0
  %4746 = vmatpush1.msra.mxu0 0.0
  %4747 = vmatprep.subr.mxu0 0.0
  %4748 = vmatpush1.msra.mxu0 0.0
  %4749 = vmatprep.subr.mxu0 0.0
  %4750 = vmatpush1.msra.mxu0 0.0
  %4751 = vmatprep.subr.mxu0 0.0
  %4752 = vmatpush1.msra.mxu0 0.0
  %4753 = vmatprep.subr.mxu0 0.0
  %4754 = vmatpush1.msra.mxu0 0.0
  %4755 = vmatprep.subr.mxu0 0.0
  %4756 = vmatpush1.msra.mxu0 0.0
  %4757 = vmatprep.subr.mxu0 0.0
  %4758 = vmatpush1.msra.mxu0 0.0
  %4759 = vmatprep.subr.mxu0 0.0
  %4760 = vmatpush1.msra.mxu0 0.0
  %4761 = vmatprep.subr.mxu0 0.0
  %4762 = vmatpush1.msra.mxu0 0.0
  %4763 = vmatprep.subr.mxu0 0.0
  %4764 = vmatpush1.msra.mxu0 0.0
  %4765 = vmatprep.subr.mxu0 0.0
  %4766 = vmatpush1.msra.mxu0 0.0
  %4767 = vmatprep.subr.mxu0 0.0
  %4768 = vmatpush1.msra.mxu0 0.0
  %4769 = vmatprep.mubr.f32.mxu0 0.0
  %4770 = vmatmul.mubr.f32.gmra.mrb[0].mxu0 %v4688
  %v4771 = vpop.f32.mrb[0].mxu0
  %v4772 = vadd.f32 0.0, %v4771
  %v4773 = vpop.f32.mrb[0].mxu0
  %4774 = vmatprep.mubr.f32.mxu0 0.0
  %4775 = vmatmul.mubr.f32.gmra.mrb[0].mxu0 %v4691
  %v4776 = vpop.f32.mrb[0].mxu0
  %v4777 = vadd.f32 0.0, %v4776
  %v4778 = vpop.f32.mrb[0].mxu0
  %4779 = vmatprep.mubr.f32.mxu0 0.0
  %4780 = vmatmul.mubr.f32.gmra.mrb[0].mxu0 %v4694
  %v4781 = vpop.f32.mrb[0].mxu0
  %v4782 = vadd.f32 0.0, %v4781
  %v4783 = vpop.f32.mrb[0].mxu0
  %4784 = vmatprep.mubr.f32.mxu0 0.0
  %4785 = vmatmul.mubr.f32.gmra.mrb[0].mxu0 %v4697
  %v4786 = vpop.f32.mrb[0].mxu0
  %v4787 = vadd.f32 0.0, %v4786
  %v4788 = vpop.f32.mrb[0].mxu0
  %4789 = vmatprep.mubr.f32.mxu0 0.0
  %4790 = vmatmul.mubr.f32.gmra.mrb[0].mxu0 %v4700
  %v4791 = vpop.f32.mrb[0].mxu0
  %v4792 = vadd.f32 0.0, %v4791
  %v4793 = vpop.f32.mrb[0].mxu0
  %4794 = vmatprep.mubr.f32.mxu0 0.0
  %4795 = vmatmul.mubr.f32.gmra.mrb[0].mxu0 %v4703
  %v4796 = vpop.f32.mrb[0].mxu0
  %v4797 = vadd.f32 0.0, %v4796
  %v4798 = vpop.f32.mrb[0].mxu0
  %4799 = vdwg.mxu0
  %v4800 = vadd.f32 %v4341, %v4772
  %v4801 = vadd.f32 %v4342, %v4777
  %v4802 = vadd.f32 %v4343, %v4782
  %v4803 = vadd.f32 %v4344, %v4787
  %v4804 = vadd.f32 %v4345, %v4792
  %v4805 = vadd.f32 %v4346, %v4797
  %v4806 = vadd.f32 %v2739, %v4800
  %v4807 = vadd.f32 %v2740, %v4801
  %v4808 = vadd.f32 %v2741, %v4802
  %v4809 = vadd.f32 %v2742, %v4803
  %v4810 = vadd.f32 %v2743, %v4804
  %v4811 = vadd.f32 %v2744, %v4805
  %v4812 = vlaneseq
  %v4813 = vshrl.u32 %v4812, 7
  %v4814 = vsub.s32 2, %v4813
  %v4815 = vrot.slane %v2746, %v4814
  %v4816 = vadd.f32 %v4806, %v4815
  %v4817 = vadd.f32 %v4807, %v4815
  %v4818 = vadd.f32 %v4808, %v4815
  %v4819 = vadd.f32 %v4809, %v4815
  %v4820 = vadd.f32 %v4810, %v4815
  %v4821 = vadd.f32 %v4811, %v4815
  %v4822 = vsel %vm180, %v4816, 0.0
  %4823 = vadd.xlane.f32.xlu0 %v4822
  %v4824 = vpop.xlane.xlu0 %4823
  %v4825 = vsel %vm180, %v4817, 0.0
  %4826 = vadd.xlane.f32.xlu0 %v4825
  %v4827 = vpop.xlane.xlu0 %4826
  %v4828 = vsel %vm180, %v4818, 0.0
  %4829 = vadd.xlane.f32.xlu0 %v4828
  %v4830 = vpop.xlane.xlu0 %4829
  %v4831 = vsel %vm180, %v4819, 0.0
  %4832 = vadd.xlane.f32.xlu0 %v4831
  %v4833 = vpop.xlane.xlu0 %4832
  %v4834 = vsel %vm180, %v4820, 0.0
  %4835 = vadd.xlane.f32.xlu0 %v4834
  %v4836 = vpop.xlane.xlu0 %4835
  %v4837 = vsel %vm180, %v4821, 0.0
  %4838 = vadd.xlane.f32.xlu0 %v4837
  %v4839 = vpop.xlane.xlu0 %4838
  %v4840 = vmul.f32 %v4824, %v199
  %v4841 = vmul.f32 %v4827, %v199
  %v4842 = vmul.f32 %v4830, %v199
  %v4843 = vmul.f32 %v4833, %v199
  %v4844 = vmul.f32 %v4836, %v199
  %v4845 = vmul.f32 %v4839, %v199
  %v4846 = vsub.f32 %v4816, %v4840
  %v4847 = vsub.f32 %v4817, %v4841
  %v4848 = vsub.f32 %v4818, %v4842
  %v4849 = vsub.f32 %v4819, %v4843
  %v4850 = vsub.f32 %v4820, %v4844
  %v4851 = vsub.f32 %v4821, %v4845
  %v4852 = vmul.f32 %v4846, %v4846
  %v4853 = vmul.f32 %v4847, %v4847
  %v4854 = vmul.f32 %v4848, %v4848
  %v4855 = vmul.f32 %v4849, %v4849
  %v4856 = vmul.f32 %v4850, %v4850
  %v4857 = vmul.f32 %v4851, %v4851
  %v4858 = vsel %vm180, %v4852, 0.0
  %4859 = vadd.xlane.f32.xlu0 %v4858
  %v4860 = vpop.xlane.xlu0 %4859
  %v4861 = vsel %vm180, %v4853, 0.0
  %4862 = vadd.xlane.f32.xlu0 %v4861
  %v4863 = vpop.xlane.xlu0 %4862
  %v4864 = vsel %vm180, %v4854, 0.0
  %4865 = vadd.xlane.f32.xlu0 %v4864
  %v4866 = vpop.xlane.xlu0 %4865
  %v4867 = vsel %vm180, %v4855, 0.0
  %4868 = vadd.xlane.f32.xlu0 %v4867
  %v4869 = vpop.xlane.xlu0 %4868
  %v4870 = vsel %vm180, %v4856, 0.0
  %4871 = vadd.xlane.f32.xlu0 %v4870
  %v4872 = vpop.xlane.xlu0 %4871
  %v4873 = vsel %vm180, %v4857, 0.0
  %4874 = vadd.xlane.f32.xlu0 %v4873
  %v4875 = vpop.xlane.xlu0 %4874
  %v4876 = vmul.f32 %v4860, %v199
  %v4877 = vmul.f32 %v4863, %v199
  %v4878 = vmul.f32 %v4866, %v199
  %v4879 = vmul.f32 %v4869, %v199
  %v4880 = vmul.f32 %v4872, %v199
  %v4881 = vmul.f32 %v4875, %v199
  %v4882 = vadd.f32 %v4876, 1e-05
  %v4883 = vadd.f32 %v4877, 1e-05
  %v4884 = vadd.f32 %v4878, 1e-05
  %v4885 = vadd.f32 %v4879, 1e-05
  %v4886 = vadd.f32 %v4880, 1e-05
  %v4887 = vadd.f32 %v4881, 1e-05
  %v4888 = vrsqrt.pop %v4882
  %v4889 = vrsqrt.pop %v4883
  %v4890 = vrsqrt.pop %v4884
  %v4891 = vrsqrt.pop %v4885
  %v4892 = vrsqrt.pop %v4886
  %v4893 = vrsqrt.pop %v4887
  %v4894 = vmul.f32 %v4846, %v4888
  %v4895 = vmul.f32 %v4847, %v4889
  %v4896 = vmul.f32 %v4848, %v4890
  %v4897 = vmul.f32 %v4849, %v4891
  %v4898 = vmul.f32 %v4850, %v4892
  %v4899 = vmul.f32 %v4851, %v4893
  %v4900 = vlaneseq
  %v4901 = vshrl.u32 %v4900, 7
  %v4902 = vsub.s32 3, %v4901
  %v4903 = vrot.slane %v2746, %v4902
  %v4904 = vmul.f32 %v4894, %v4903
  %v4905 = vmul.f32 %v4895, %v4903
  %v4906 = vmul.f32 %v4896, %v4903
  %v4907 = vmul.f32 %v4897, %v4903
  %v4908 = vmul.f32 %v4898, %v4903
  %v4909 = vmul.f32 %v4899, %v4903
  %v4910 = vlaneseq
  %v4911 = vshrl.u32 %v4910, 7
  %v4912 = vsub.s32 4, %v4911
  %v4913 = vrot.slane %v2746, %v4912
  %v4914 = vadd.f32 %v4904, %v4913
  %v4915 = vadd.f32 %v4905, %v4913
  %v4916 = vadd.f32 %v4906, %v4913
  %v4917 = vadd.f32 %v4907, %v4913
  %v4918 = vadd.f32 %v4908, %v4913
  %v4919 = vadd.f32 %v4909, %v4913
  %s4920 = scalar_lea.vmem %s9, 32
  %v4921 = vld [vmem:[%s4920] sm:$0xff]
  %v4922 = vld [vmem:[%s4920 + $0x8] sm:$0xff]
  %v4923 = vld [vmem:[%s4920 + $0x10] sm:$0xff]
  %v4924 = vld [vmem:[%s4920 + $0x18] sm:$0xff]
  %s4925 = scalar_lea.vmem %s10, 1
  %v4926 = vld [vmem:[%s4925] sm:$0x1]
  %v4928 = vlaneseq
  %v4929 = vshrl.u32 %v4928, 7
  %v4930 = vsub.s32 0, %v4929
  %v4931 = vrot.slane %v4926, %v4930
  %v4934 = vsel %vm180, %v4914, 0
  %v4937 = vsel %vm180, %v4915, 0
  %v4940 = vsel %vm180, %v4916, 0
  %v4943 = vsel %vm180, %v4917, 0
  %v4946 = vsel %vm180, %v4918, 0
  %v4949 = vsel %vm180, %v4919, 0
  %4951 = vmatprep.subr.mxu0 0.0
  %4952 = vmatpush1.msra.mxu0 %v4921
  %4953 = vmatprep.subr.mxu0 0.0
  %4954 = vmatpush1.msra.mxu0 %v4922
  %4955 = vmatprep.subr.mxu0 0.0
  %4956 = vmatpush1.msra.mxu0 %v4923
  %4957 = vmatprep.subr.mxu0 0.0
  %4958 = vmatpush1.msra.mxu0 %v4924
  %4959 = vmatprep.subr.mxu0 0.0
  %4960 = vmatpush1.msra.mxu0 0.0
  %4961 = vmatprep.subr.mxu0 0.0
  %4962 = vmatpush1.msra.mxu0 0.0
  %4963 = vmatprep.subr.mxu0 0.0
  %4964 = vmatpush1.msra.mxu0 0.0
  %4965 = vmatprep.subr.mxu0 0.0
  %4966 = vmatpush1.msra.mxu0 0.0
  %4967 = vmatprep.subr.mxu0 0.0
  %4968 = vmatpush1.msra.mxu0 0.0
  %4969 = vmatprep.subr.mxu0 0.0
  %4970 = vmatpush1.msra.mxu0 0.0
  %4971 = vmatprep.subr.mxu0 0.0
  %4972 = vmatpush1.msra.mxu0 0.0
  %4973 = vmatprep.subr.mxu0 0.0
  %4974 = vmatpush1.msra.mxu0 0.0
  %4975 = vmatprep.subr.mxu0 0.0
  %4976 = vmatpush1.msra.mxu0 0.0
  %4977 = vmatprep.subr.mxu0 0.0
  %4978 = vmatpush1.msra.mxu0 0.0
  %4979 = vmatprep.subr.mxu0 0.0
  %4980 = vmatpush1.msra.mxu0 0.0
  %4981 = vmatprep.subr.mxu0 0.0
  %4982 = vmatpush1.msra.mxu0 0.0
  %4983 = vmatprep.subr.mxu0 0.0
  %4984 = vmatpush1.msra.mxu0 0.0
  %4985 = vmatprep.subr.mxu0 0.0
  %4986 = vmatpush1.msra.mxu0 0.0
  %4987 = vmatprep.subr.mxu0 0.0
  %4988 = vmatpush1.msra.mxu0 0.0
  %4989 = vmatprep.subr.mxu0 0.0
  %4990 = vmatpush1.msra.mxu0 0.0
  %4991 = vmatprep.subr.mxu0 0.0
  %4992 = vmatpush1.msra.mxu0 0.0
  %4993 = vmatprep.subr.mxu0 0.0
  %4994 = vmatpush1.msra.mxu0 0.0
  %4995 = vmatprep.subr.mxu0 0.0
  %4996 = vmatpush1.msra.mxu0 0.0
  %4997 = vmatprep.subr.mxu0 0.0
  %4998 = vmatpush1.msra.mxu0 0.0
  %4999 = vmatprep.subr.mxu0 0.0
  %5000 = vmatpush1.msra.mxu0 0.0
  %5001 = vmatprep.subr.mxu0 0.0
  %5002 = vmatpush1.msra.mxu0 0.0
  %5003 = vmatprep.subr.mxu0 0.0
  %5004 = vmatpush1.msra.mxu0 0.0
  %5005 = vmatprep.subr.mxu0 0.0
  %5006 = vmatpush1.msra.mxu0 0.0
  %5007 = vmatprep.subr.mxu0 0.0
  %5008 = vmatpush1.msra.mxu0 0.0
  %5009 = vmatprep.subr.mxu0 0.0
  %5010 = vmatpush1.msra.mxu0 0.0
  %5011 = vmatprep.subr.mxu0 0.0
  %5012 = vmatpush1.msra.mxu0 0.0
  %5013 = vmatprep.subr.mxu0 0.0
  %5014 = vmatpush1.msra.mxu0 0.0
  %5015 = vmatprep.mubr.f32.mxu0 0.0
  %5016 = vmatmul.mubr.f32.gmra.mrb[0].mxu0 %v4934
  %v5017 = vpop.f32.mrb[0].mxu0
  %v5018 = vadd.f32 %v4931, %v5017
  %v5019 = vpop.f32.mrb[0].mxu0
  %5020 = vmatprep.mubr.f32.mxu0 0.0
  %5021 = vmatmul.mubr.f32.gmra.mrb[0].mxu0 %v4937
  %v5022 = vpop.f32.mrb[0].mxu0
  %v5023 = vadd.f32 %v4931, %v5022
  %v5024 = vpop.f32.mrb[0].mxu0
  %5025 = vmatprep.mubr.f32.mxu0 0.0
  %5026 = vmatmul.mubr.f32.gmra.mrb[0].mxu0 %v4940
  %v5027 = vpop.f32.mrb[0].mxu0
  %v5028 = vadd.f32 %v4931, %v5027
  %v5029 = vpop.f32.mrb[0].mxu0
  %5030 = vmatprep.mubr.f32.mxu0 0.0
  %5031 = vmatmul.mubr.f32.gmra.mrb[0].mxu0 %v4943
  %v5032 = vpop.f32.mrb[0].mxu0
  %v5033 = vadd.f32 %v4931, %v5032
  %v5034 = vpop.f32.mrb[0].mxu0
  %5035 = vmatprep.mubr.f32.mxu0 0.0
  %5036 = vmatmul.mubr.f32.gmra.mrb[0].mxu0 %v4946
  %v5037 = vpop.f32.mrb[0].mxu0
  %v5038 = vadd.f32 %v4931, %v5037
  %v5039 = vpop.f32.mrb[0].mxu0
  %5040 = vmatprep.mubr.f32.mxu0 0.0
  %5041 = vmatmul.mubr.f32.gmra.mrb[0].mxu0 %v4949
  %v5042 = vpop.f32.mrb[0].mxu0
  %v5043 = vadd.f32 %v4931, %v5042
  %v5044 = vpop.f32.mrb[0].mxu0
  %5045 = vdwg.mxu0
  %v5046 = vmul.f32 %v5018, -1.702
  %v5047 = vmul.f32 %v5023, -1.702
  %v5048 = vmul.f32 %v5028, -1.702
  %v5049 = vmul.f32 %v5033, -1.702
  %v5050 = vmul.f32 %v5038, -1.702
  %v5051 = vmul.f32 %v5043, -1.702
  %v5052 = vmul.f32 %v5046, 1.442695
  %v5053 = vpow.pop %v5052
  %v5054 = vmul.f32 %v5047, 1.442695
  %v5055 = vpow.pop %v5054
  %v5056 = vmul.f32 %v5048, 1.442695
  %v5057 = vpow.pop %v5056
  %v5058 = vmul.f32 %v5049, 1.442695
  %v5059 = vpow.pop %v5058
  %v5060 = vmul.f32 %v5050, 1.442695
  %v5061 = vpow.pop %v5060
  %v5062 = vmul.f32 %v5051, 1.442695
  %v5063 = vpow.pop %v5062
  %v5064 = vadd.f32 %v5053, 1.0
  %v5065 = vadd.f32 %v5055, 1.0
  %v5066 = vadd.f32 %v5057, 1.0
  %v5067 = vadd.f32 %v5059, 1.0
  %v5068 = vadd.f32 %v5061, 1.0
  %v5069 = vadd.f32 %v5063, 1.0
  %v5070 = vrcp.pop %v5064
  %v5071 = vrcp.pop %v5065
  %v5072 = vrcp.pop %v5066
  %v5073 = vrcp.pop %v5067
  %v5074 = vrcp.pop %v5068
  %v5075 = vrcp.pop %v5069
  %v5076 = vmul.f32 %v5018, %v5070
  %v5077 = vmul.f32 %v5023, %v5071
  %v5078 = vmul.f32 %v5028, %v5072
  %v5079 = vmul.f32 %v5033, %v5073
  %v5080 = vmul.f32 %v5038, %v5074
  %v5081 = vmul.f32 %v5043, %v5075
  %s5082 = scalar_lea.vmem %s11, 128
  %v5083 = vld [vmem:[%s5082] sm:$0xff]
  %v5084 = vld [vmem:[%s5082 + $0x8] sm:$0xff]
  %v5085 = vld [vmem:[%s5082 + $0x10] sm:$0xff]
  %v5086 = vld [vmem:[%s5082 + $0x18] sm:$0xff]
  %v5087 = vld [vmem:[%s5082 + $0x20] sm:$0xff]
  %v5088 = vld [vmem:[%s5082 + $0x28] sm:$0xff]
  %v5089 = vld [vmem:[%s5082 + $0x30] sm:$0xff]
  %v5090 = vld [vmem:[%s5082 + $0x38] sm:$0xff]
  %v5091 = vld [vmem:[%s5082 + $0x40] sm:$0xff]
  %v5092 = vld [vmem:[%s5082 + $0x48] sm:$0xff]
  %v5093 = vld [vmem:[%s5082 + $0x50] sm:$0xff]
  %v5094 = vld [vmem:[%s5082 + $0x58] sm:$0xff]
  %v5095 = vld [vmem:[%s5082 + $0x60] sm:$0xff]
  %v5096 = vld [vmem:[%s5082 + $0x68] sm:$0xff]
  %v5097 = vld [vmem:[%s5082 + $0x70] sm:$0xff]
  %v5098 = vld [vmem:[%s5082 + $0x78] sm:$0xff]
  %5099 = vmatprep.subr.mxu0 0.0
  %5100 = vmatpush1.msra.mxu0 %v5083
  %5101 = vmatprep.subr.mxu0 0.0
  %5102 = vmatpush1.msra.mxu0 %v5084
  %5103 = vmatprep.subr.mxu0 0.0
  %5104 = vmatpush1.msra.mxu0 %v5085
  %5105 = vmatprep.subr.mxu0 0.0
  %5106 = vmatpush1.msra.mxu0 %v5086
  %5107 = vmatprep.subr.mxu0 0.0
  %5108 = vmatpush1.msra.mxu0 %v5087
  %5109 = vmatprep.subr.mxu0 0.0
  %5110 = vmatpush1.msra.mxu0 %v5088
  %5111 = vmatprep.subr.mxu0 0.0
  %5112 = vmatpush1.msra.mxu0 %v5089
  %5113 = vmatprep.subr.mxu0 0.0
  %5114 = vmatpush1.msra.mxu0 %v5090
  %5115 = vmatprep.subr.mxu0 0.0
  %5116 = vmatpush1.msra.mxu0 %v5091
  %5117 = vmatprep.subr.mxu0 0.0
  %5118 = vmatpush1.msra.mxu0 %v5092
  %5119 = vmatprep.subr.mxu0 0.0
  %5120 = vmatpush1.msra.mxu0 %v5093
  %5121 = vmatprep.subr.mxu0 0.0
  %5122 = vmatpush1.msra.mxu0 %v5094
  %5123 = vmatprep.subr.mxu0 0.0
  %5124 = vmatpush1.msra.mxu0 %v5095
  %5125 = vmatprep.subr.mxu0 0.0
  %5126 = vmatpush1.msra.mxu0 %v5096
  %5127 = vmatprep.subr.mxu0 0.0
  %5128 = vmatpush1.msra.mxu0 %v5097
  %5129 = vmatprep.subr.mxu0 0.0
  %5130 = vmatpush1.msra.mxu0 %v5098
  %5131 = vmatprep.subr.mxu0 0.0
  %5132 = vmatpush1.msra.mxu0 0.0
  %5133 = vmatprep.subr.mxu0 0.0
  %5134 = vmatpush1.msra.mxu0 0.0
  %5135 = vmatprep.subr.mxu0 0.0
  %5136 = vmatpush1.msra.mxu0 0.0
  %5137 = vmatprep.subr.mxu0 0.0
  %5138 = vmatpush1.msra.mxu0 0.0
  %5139 = vmatprep.subr.mxu0 0.0
  %5140 = vmatpush1.msra.mxu0 0.0
  %5141 = vmatprep.subr.mxu0 0.0
  %5142 = vmatpush1.msra.mxu0 0.0
  %5143 = vmatprep.subr.mxu0 0.0
  %5144 = vmatpush1.msra.mxu0 0.0
  %5145 = vmatprep.subr.mxu0 0.0
  %5146 = vmatpush1.msra.mxu0 0.0
  %5147 = vmatprep.subr.mxu0 0.0
  %5148 = vmatpush1.msra.mxu0 0.0
  %5149 = vmatprep.subr.mxu0 0.0
  %5150 = vmatpush1.msra.mxu0 0.0
  %5151 = vmatprep.subr.mxu0 0.0
  %5152 = vmatpush1.msra.mxu0 0.0
  %5153 = vmatprep.subr.mxu0 0.0
  %5154 = vmatpush1.msra.mxu0 0.0
  %5155 = vmatprep.subr.mxu0 0.0
  %5156 = vmatpush1.msra.mxu0 0.0
  %5157 = vmatprep.subr.mxu0 0.0
  %5158 = vmatpush1.msra.mxu0 0.0
  %5159 = vmatprep.subr.mxu0 0.0
  %5160 = vmatpush1.msra.mxu0 0.0
  %5161 = vmatprep.subr.mxu0 0.0
  %5162 = vmatpush1.msra.mxu0 0.0
  %5163 = vmatprep.mubr.f32.mxu0 0.0
  %5164 = vmatmul.mubr.f32.gmra.mrb[0].mxu0 %v5076
  %v5165 = vpop.f32.mrb[0].mxu0
  %v5166 = vadd.f32 0.0, %v5165
  %v5167 = vpop.f32.mrb[0].mxu0
  %5168 = vmatprep.mubr.f32.mxu0 0.0
  %5169 = vmatmul.mubr.f32.gmra.mrb[0].mxu0 %v5077
  %v5170 = vpop.f32.mrb[0].mxu0
  %v5171 = vadd.f32 0.0, %v5170
  %v5172 = vpop.f32.mrb[0].mxu0
  %5173 = vmatprep.mubr.f32.mxu0 0.0
  %5174 = vmatmul.mubr.f32.gmra.mrb[0].mxu0 %v5078
  %v5175 = vpop.f32.mrb[0].mxu0
  %v5176 = vadd.f32 0.0, %v5175
  %v5177 = vpop.f32.mrb[0].mxu0
  %5178 = vmatprep.mubr.f32.mxu0 0.0
  %5179 = vmatmul.mubr.f32.gmra.mrb[0].mxu0 %v5079
  %v5180 = vpop.f32.mrb[0].mxu0
  %v5181 = vadd.f32 0.0, %v5180
  %v5182 = vpop.f32.mrb[0].mxu0
  %5183 = vmatprep.mubr.f32.mxu0 0.0
  %5184 = vmatmul.mubr.f32.gmra.mrb[0].mxu0 %v5080
  %v5185 = vpop.f32.mrb[0].mxu0
  %v5186 = vadd.f32 0.0, %v5185
  %v5187 = vpop.f32.mrb[0].mxu0
  %5188 = vmatprep.mubr.f32.mxu0 0.0
  %5189 = vmatmul.mubr.f32.gmra.mrb[0].mxu0 %v5081
  %v5190 = vpop.f32.mrb[0].mxu0
  %v5191 = vadd.f32 0.0, %v5190
  %v5192 = vpop.f32.mrb[0].mxu0
  %5193 = vdwg.mxu0
  %v5194 = vadd.f32 %v4816, %v5166
  %v5195 = vadd.f32 %v4817, %v5171
  %v5196 = vadd.f32 %v4818, %v5176
  %v5197 = vadd.f32 %v4819, %v5181
  %v5198 = vadd.f32 %v4820, %v5186
  %v5199 = vadd.f32 %v4821, %v5191
  %v5200 = vlaneseq
  %v5201 = vshrl.u32 %v5200, 7
  %v5202 = vsub.s32 5, %v5201
  %v5203 = vrot.slane %v2746, %v5202
  %v5204 = vadd.f32 %v5194, %v5203
  %v5205 = vadd.f32 %v5195, %v5203
  %v5206 = vadd.f32 %v5196, %v5203
  %v5207 = vadd.f32 %v5197, %v5203
  %v5208 = vadd.f32 %v5198, %v5203
  %v5209 = vadd.f32 %v5199, %v5203
  %v5210 = vld [vmem:[%s12] sm:$0xff]
  %v5211 = vld [vmem:[%s12 + $0x8] sm:$0xff]
  %v5212 = vld [vmem:[%s12 + $0x10] sm:$0xff]
  %v5213 = vld [vmem:[%s12 + $0x18] sm:$0xff]
  %v5214 = vld [vmem:[%s12 + $0x20] sm:$0xff]
  %v5215 = vld [vmem:[%s12 + $0x28] sm:$0xff]
  %v5216 = vld [vmem:[%s12 + $0x30] sm:$0xff]
  %v5217 = vld [vmem:[%s12 + $0x38] sm:$0xff]
  %v5218 = vld [vmem:[%s12 + $0x40] sm:$0xff]
  %v5219 = vld [vmem:[%s12 + $0x48] sm:$0xff]
  %v5220 = vld [vmem:[%s12 + $0x50] sm:$0xff]
  %v5221 = vld [vmem:[%s12 + $0x58] sm:$0xff]
  %v5222 = vld [vmem:[%s12 + $0x60] sm:$0xff]
  %v5223 = vld [vmem:[%s12 + $0x68] sm:$0xff]
  %v5224 = vld [vmem:[%s12 + $0x70] sm:$0xff]
  %v5225 = vld [vmem:[%s12 + $0x78] sm:$0xff]
  %v5226 = vld [vmem:[%s12 + $0x80] sm:$0xff]
  %v5227 = vld [vmem:[%s12 + $0x88] sm:$0xff]
  %v5228 = vld [vmem:[%s12 + $0x90] sm:$0xff]
  %v5229 = vld [vmem:[%s12 + $0x98] sm:$0xff]
  %v5230 = vld [vmem:[%s12 + $0xa0] sm:$0xff]
  %v5231 = vld [vmem:[%s12 + $0xa8] sm:$0xff]
  %v5232 = vld [vmem:[%s12 + $0xb0] sm:$0xff]
  %v5233 = vld [vmem:[%s12 + $0xb8] sm:$0xff]
  %v5234 = vld [vmem:[%s13] sm:$0x3f]
  %v5236 = vlaneseq
  %v5237 = vshrl.u32 %v5236, 7
  %v5238 = vsub.s32 0, %v5237
  %v5239 = vrot.slane %v5234, %v5238
  %v5240 = vlaneseq
  %v5241 = vshrl.u32 %v5240, 7
  %v5242 = vsub.s32 1, %v5241
  %v5243 = vrot.slane %v5234, %v5242
  %v5244 = vlaneseq
  %v5245 = vshrl.u32 %v5244, 7
  %v5246 = vsub.s32 2, %v5245
  %v5247 = vrot.slane %v5234, %v5246
  %v5248 = vlaneseq
  %v5249 = vshrl.u32 %v5248, 7
  %v5250 = vsub.s32 3, %v5249
  %v5251 = vrot.slane %v5234, %v5250
  %v5252 = vlaneseq
  %v5253 = vshrl.u32 %v5252, 7
  %v5254 = vsub.s32 4, %v5253
  %v5255 = vrot.slane %v5234, %v5254
  %v5256 = vlaneseq
  %v5257 = vshrl.u32 %v5256, 7
  %v5258 = vsub.s32 5, %v5257
  %v5259 = vrot.slane %v5234, %v5258
  %v5267 = vsel %vm180, %v5204, 0
  %v5270 = vsel %vm180, %v5205, 0
  %v5273 = vsel %vm180, %v5206, 0
  %v5276 = vsel %vm180, %v5207, 0
  %v5279 = vsel %vm180, %v5208, 0
  %v5282 = vsel %vm180, %v5209, 0
  %5284 = vmatprep.subr.mxu0 %v5211
  %5285 = vmatpush1.msra.mxu0 %v5210
  %5286 = vmatprep.subr.mxu0 %v5217
  %5287 = vmatpush1.msra.mxu0 %v5216
  %5288 = vmatprep.subr.mxu0 %v5223
  %5289 = vmatpush1.msra.mxu0 %v5222
  %5290 = vmatprep.subr.mxu0 %v5229
  %5291 = vmatpush1.msra.mxu0 %v5228
  %5292 = vmatprep.subr.mxu0 0.0
  %5293 = vmatpush1.msra.mxu0 0.0
  %5294 = vmatprep.subr.mxu0 0.0
  %5295 = vmatpush1.msra.mxu0 0.0
  %5296 = vmatprep.subr.mxu0 0.0
  %5297 = vmatpush1.msra.mxu0 0.0
  %5298 = vmatprep.subr.mxu0 0.0
  %5299 = vmatpush1.msra.mxu0 0.0
  %5300 = vmatprep.subr.mxu0 0.0
  %5301 = vmatpush1.msra.mxu0 0.0
  %5302 = vmatprep.subr.mxu0 0.0
  %5303 = vmatpush1.msra.mxu0 0.0
  %5304 = vmatprep.subr.mxu0 0.0
  %5305 = vmatpush1.msra.mxu0 0.0
  %5306 = vmatprep.subr.mxu0 0.0
  %5307 = vmatpush1.msra.mxu0 0.0
  %5308 = vmatprep.subr.mxu0 0.0
  %5309 = vmatpush1.msra.mxu0 0.0
  %5310 = vmatprep.subr.mxu0 0.0
  %5311 = vmatpush1.msra.mxu0 0.0
  %5312 = vmatprep.subr.mxu0 0.0
  %5313 = vmatpush1.msra.mxu0 0.0
  %5314 = vmatprep.subr.mxu0 0.0
  %5315 = vmatpush1.msra.mxu0 0.0
  %5316 = vmatprep.subr.mxu0 0.0
  %5317 = vmatpush1.msra.mxu0 0.0
  %5318 = vmatprep.subr.mxu0 0.0
  %5319 = vmatpush1.msra.mxu0 0.0
  %5320 = vmatprep.subr.mxu0 0.0
  %5321 = vmatpush1.msra.mxu0 0.0
  %5322 = vmatprep.subr.mxu0 0.0
  %5323 = vmatpush1.msra.mxu0 0.0
  %5324 = vmatprep.subr.mxu0 0.0
  %5325 = vmatpush1.msra.mxu0 0.0
  %5326 = vmatprep.subr.mxu0 0.0
  %5327 = vmatpush1.msra.mxu0 0.0
  %5328 = vmatprep.subr.mxu0 0.0
  %5329 = vmatpush1.msra.mxu0 0.0
  %5330 = vmatprep.subr.mxu0 0.0
  %5331 = vmatpush1.msra.mxu0 0.0
  %5332 = vmatprep.subr.mxu0 0.0
  %5333 = vmatpush1.msra.mxu0 0.0
  %5334 = vmatprep.subr.mxu0 0.0
  %5335 = vmatpush1.msra.mxu0 0.0
  %5336 = vmatprep.subr.mxu0 0.0
  %5337 = vmatpush1.msra.mxu0 0.0
  %5338 = vmatprep.subr.mxu0 0.0
  %5339 = vmatpush1.msra.mxu0 0.0
  %5340 = vmatprep.subr.mxu0 0.0
  %5341 = vmatpush1.msra.mxu0 0.0
  %5342 = vmatprep.subr.mxu0 0.0
  %5343 = vmatpush1.msra.mxu0 0.0
  %5344 = vmatprep.subr.mxu0 0.0
  %5345 = vmatpush1.msra.mxu0 0.0
  %5346 = vmatprep.subr.mxu0 0.0
  %5347 = vmatpush1.msra.mxu0 0.0
  %5348 = vmatprep.mubr.f32.mxu0 0.0
  %5349 = vmatmul.mubr.f32.gmra.mrb[0].mxu0 %v5267
  %v5350 = vpop.f32.mrb[0].mxu0
  %v5351 = vadd.f32 %v5239, %v5350
  %v5352 = vpop.f32.mrb[0].mxu0
  %v5353 = vadd.f32 %v5243, %v5352
  %5354 = vmatprep.mubr.f32.mxu0 0.0
  %5355 = vmatmul.mubr.f32.gmra.mrb[0].mxu0 %v5270
  %v5356 = vpop.f32.mrb[0].mxu0
  %v5357 = vadd.f32 %v5239, %v5356
  %v5358 = vpop.f32.mrb[0].mxu0
  %v5359 = vadd.f32 %v5243, %v5358
  %5360 = vmatprep.mubr.f32.mxu0 0.0
  %5361 = vmatmul.mubr.f32.gmra.mrb[0].mxu0 %v5273
  %v5362 = vpop.f32.mrb[0].mxu0
  %v5363 = vadd.f32 %v5239, %v5362
  %v5364 = vpop.f32.mrb[0].mxu0
  %v5365 = vadd.f32 %v5243, %v5364
  %5366 = vmatprep.mubr.f32.mxu0 0.0
  %5367 = vmatmul.mubr.f32.gmra.mrb[0].mxu0 %v5276
  %v5368 = vpop.f32.mrb[0].mxu0
  %v5369 = vadd.f32 %v5239, %v5368
  %v5370 = vpop.f32.mrb[0].mxu0
  %v5371 = vadd.f32 %v5243, %v5370
  %5372 = vmatprep.mubr.f32.mxu0 0.0
  %5373 = vmatmul.mubr.f32.gmra.mrb[0].mxu0 %v5279
  %v5374 = vpop.f32.mrb[0].mxu0
  %v5375 = vadd.f32 %v5239, %v5374
  %v5376 = vpop.f32.mrb[0].mxu0
  %v5377 = vadd.f32 %v5243, %v5376
  %5378 = vmatprep.mubr.f32.mxu0 0.0
  %5379 = vmatmul.mubr.f32.gmra.mrb[0].mxu0 %v5282
  %v5380 = vpop.f32.mrb[0].mxu0
  %v5381 = vadd.f32 %v5239, %v5380
  %v5382 = vpop.f32.mrb[0].mxu0
  %v5383 = vadd.f32 %v5243, %v5382
  %5384 = vdwg.mxu0
  %5385 = vmatprep.subr.mxu0 %v5213
  %5386 = vmatpush1.msra.mxu0 %v5212
  %5387 = vmatprep.subr.mxu0 %v5219
  %5388 = vmatpush1.msra.mxu0 %v5218
  %5389 = vmatprep.subr.mxu0 %v5225
  %5390 = vmatpush1.msra.mxu0 %v5224
  %5391 = vmatprep.subr.mxu0 %v5231
  %5392 = vmatpush1.msra.mxu0 %v5230
  %5393 = vmatprep.subr.mxu0 0.0
  %5394 = vmatpush1.msra.mxu0 0.0
  %5395 = vmatprep.subr.mxu0 0.0
  %5396 = vmatpush1.msra.mxu0 0.0
  %5397 = vmatprep.subr.mxu0 0.0
  %5398 = vmatpush1.msra.mxu0 0.0
  %5399 = vmatprep.subr.mxu0 0.0
  %5400 = vmatpush1.msra.mxu0 0.0
  %5401 = vmatprep.subr.mxu0 0.0
  %5402 = vmatpush1.msra.mxu0 0.0
  %5403 = vmatprep.subr.mxu0 0.0
  %5404 = vmatpush1.msra.mxu0 0.0
  %5405 = vmatprep.subr.mxu0 0.0
  %5406 = vmatpush1.msra.mxu0 0.0
  %5407 = vmatprep.subr.mxu0 0.0
  %5408 = vmatpush1.msra.mxu0 0.0
  %5409 = vmatprep.subr.mxu0 0.0
  %5410 = vmatpush1.msra.mxu0 0.0
  %5411 = vmatprep.subr.mxu0 0.0
  %5412 = vmatpush1.msra.mxu0 0.0
  %5413 = vmatprep.subr.mxu0 0.0
  %5414 = vmatpush1.msra.mxu0 0.0
  %5415 = vmatprep.subr.mxu0 0.0
  %5416 = vmatpush1.msra.mxu0 0.0
  %5417 = vmatprep.subr.mxu0 0.0
  %5418 = vmatpush1.msra.mxu0 0.0
  %5419 = vmatprep.subr.mxu0 0.0
  %5420 = vmatpush1.msra.mxu0 0.0
  %5421 = vmatprep.subr.mxu0 0.0
  %5422 = vmatpush1.msra.mxu0 0.0
  %5423 = vmatprep.subr.mxu0 0.0
  %5424 = vmatpush1.msra.mxu0 0.0
  %5425 = vmatprep.subr.mxu0 0.0
  %5426 = vmatpush1.msra.mxu0 0.0
  %5427 = vmatprep.subr.mxu0 0.0
  %5428 = vmatpush1.msra.mxu0 0.0
  %5429 = vmatprep.subr.mxu0 0.0
  %5430 = vmatpush1.msra.mxu0 0.0
  %5431 = vmatprep.subr.mxu0 0.0
  %5432 = vmatpush1.msra.mxu0 0.0
  %5433 = vmatprep.subr.mxu0 0.0
  %5434 = vmatpush1.msra.mxu0 0.0
  %5435 = vmatprep.subr.mxu0 0.0
  %5436 = vmatpush1.msra.mxu0 0.0
  %5437 = vmatprep.subr.mxu0 0.0
  %5438 = vmatpush1.msra.mxu0 0.0
  %5439 = vmatprep.subr.mxu0 0.0
  %5440 = vmatpush1.msra.mxu0 0.0
  %5441 = vmatprep.subr.mxu0 0.0
  %5442 = vmatpush1.msra.mxu0 0.0
  %5443 = vmatprep.subr.mxu0 0.0
  %5444 = vmatpush1.msra.mxu0 0.0
  %5445 = vmatprep.subr.mxu0 0.0
  %5446 = vmatpush1.msra.mxu0 0.0
  %5447 = vmatprep.subr.mxu0 0.0
  %5448 = vmatpush1.msra.mxu0 0.0
  %5449 = vmatprep.mubr.f32.mxu0 0.0
  %5450 = vmatmul.mubr.f32.gmra.mrb[0].mxu0 %v5267
  %v5451 = vpop.f32.mrb[0].mxu0
  %v5452 = vadd.f32 %v5247, %v5451
  %v5453 = vpop.f32.mrb[0].mxu0
  %v5454 = vadd.f32 %v5251, %v5453
  %5455 = vmatprep.mubr.f32.mxu0 0.0
  %5456 = vmatmul.mubr.f32.gmra.mrb[0].mxu0 %v5270
  %v5457 = vpop.f32.mrb[0].mxu0
  %v5458 = vadd.f32 %v5247, %v5457
  %v5459 = vpop.f32.mrb[0].mxu0
  %v5460 = vadd.f32 %v5251, %v5459
  %5461 = vmatprep.mubr.f32.mxu0 0.0
  %5462 = vmatmul.mubr.f32.gmra.mrb[0].mxu0 %v5273
  %v5463 = vpop.f32.mrb[0].mxu0
  %v5464 = vadd.f32 %v5247, %v5463
  %v5465 = vpop.f32.mrb[0].mxu0
  %v5466 = vadd.f32 %v5251, %v5465
  %5467 = vmatprep.mubr.f32.mxu0 0.0
  %5468 = vmatmul.mubr.f32.gmra.mrb[0].mxu0 %v5276
  %v5469 = vpop.f32.mrb[0].mxu0
  %v5470 = vadd.f32 %v5247, %v5469
  %v5471 = vpop.f32.mrb[0].mxu0
  %v5472 = vadd.f32 %v5251, %v5471
  %5473 = vmatprep.mubr.f32.mxu0 0.0
  %5474 = vmatmul.mubr.f32.gmra.mrb[0].mxu0 %v5279
  %v5475 = vpop.f32.mrb[0].mxu0
  %v5476 = vadd.f32 %v5247, %v5475
  %v5477 = vpop.f32.mrb[0].mxu0
  %v5478 = vadd.f32 %v5251, %v5477
  %5479 = vmatprep.mubr.f32.mxu0 0.0
  %5480 = vmatmul.mubr.f32.gmra.mrb[0].mxu0 %v5282
  %v5481 = vpop.f32.mrb[0].mxu0
  %v5482 = vadd.f32 %v5247, %v5481
  %v5483 = vpop.f32.mrb[0].mxu0
  %v5484 = vadd.f32 %v5251, %v5483
  %5485 = vdwg.mxu0
  %5486 = vmatprep.subr.mxu0 %v5215
  %5487 = vmatpush1.msra.mxu0 %v5214
  %5488 = vmatprep.subr.mxu0 %v5221
  %5489 = vmatpush1.msra.mxu0 %v5220
  %5490 = vmatprep.subr.mxu0 %v5227
  %5491 = vmatpush1.msra.mxu0 %v5226
  %5492 = vmatprep.subr.mxu0 %v5233
  %5493 = vmatpush1.msra.mxu0 %v5232
  %5494 = vmatprep.subr.mxu0 0.0
  %5495 = vmatpush1.msra.mxu0 0.0
  %5496 = vmatprep.subr.mxu0 0.0
  %5497 = vmatpush1.msra.mxu0 0.0
  %5498 = vmatprep.subr.mxu0 0.0
  %5499 = vmatpush1.msra.mxu0 0.0
  %5500 = vmatprep.subr.mxu0 0.0
  %5501 = vmatpush1.msra.mxu0 0.0
  %5502 = vmatprep.subr.mxu0 0.0
  %5503 = vmatpush1.msra.mxu0 0.0
  %5504 = vmatprep.subr.mxu0 0.0
  %5505 = vmatpush1.msra.mxu0 0.0
  %5506 = vmatprep.subr.mxu0 0.0
  %5507 = vmatpush1.msra.mxu0 0.0
  %5508 = vmatprep.subr.mxu0 0.0
  %5509 = vmatpush1.msra.mxu0 0.0
  %5510 = vmatprep.subr.mxu0 0.0
  %5511 = vmatpush1.msra.mxu0 0.0
  %5512 = vmatprep.subr.mxu0 0.0
  %5513 = vmatpush1.msra.mxu0 0.0
  %5514 = vmatprep.subr.mxu0 0.0
  %5515 = vmatpush1.msra.mxu0 0.0
  %5516 = vmatprep.subr.mxu0 0.0
  %5517 = vmatpush1.msra.mxu0 0.0
  %5518 = vmatprep.subr.mxu0 0.0
  %5519 = vmatpush1.msra.mxu0 0.0
  %5520 = vmatprep.subr.mxu0 0.0
  %5521 = vmatpush1.msra.mxu0 0.0
  %5522 = vmatprep.subr.mxu0 0.0
  %5523 = vmatpush1.msra.mxu0 0.0
  %5524 = vmatprep.subr.mxu0 0.0
  %5525 = vmatpush1.msra.mxu0 0.0
  %5526 = vmatprep.subr.mxu0 0.0
  %5527 = vmatpush1.msra.mxu0 0.0
  %5528 = vmatprep.subr.mxu0 0.0
  %5529 = vmatpush1.msra.mxu0 0.0
  %5530 = vmatprep.subr.mxu0 0.0
  %5531 = vmatpush1.msra.mxu0 0.0
  %5532 = vmatprep.subr.mxu0 0.0
  %5533 = vmatpush1.msra.mxu0 0.0
  %5534 = vmatprep.subr.mxu0 0.0
  %5535 = vmatpush1.msra.mxu0 0.0
  %5536 = vmatprep.subr.mxu0 0.0
  %5537 = vmatpush1.msra.mxu0 0.0
  %5538 = vmatprep.subr.mxu0 0.0
  %5539 = vmatpush1.msra.mxu0 0.0
  %5540 = vmatprep.subr.mxu0 0.0
  %5541 = vmatpush1.msra.mxu0 0.0
  %5542 = vmatprep.subr.mxu0 0.0
  %5543 = vmatpush1.msra.mxu0 0.0
  %5544 = vmatprep.subr.mxu0 0.0
  %5545 = vmatpush1.msra.mxu0 0.0
  %5546 = vmatprep.subr.mxu0 0.0
  %5547 = vmatpush1.msra.mxu0 0.0
  %5548 = vmatprep.subr.mxu0 0.0
  %5549 = vmatpush1.msra.mxu0 0.0
  %5550 = vmatprep.mubr.f32.mxu0 0.0
  %5551 = vmatmul.mubr.f32.gmra.mrb[0].mxu0 %v5267
  %v5552 = vpop.f32.mrb[0].mxu0
  %v5553 = vadd.f32 %v5255, %v5552
  %v5554 = vpop.f32.mrb[0].mxu0
  %v5555 = vadd.f32 %v5259, %v5554
  %5556 = vmatprep.mubr.f32.mxu0 0.0
  %5557 = vmatmul.mubr.f32.gmra.mrb[0].mxu0 %v5270
  %v5558 = vpop.f32.mrb[0].mxu0
  %v5559 = vadd.f32 %v5255, %v5558
  %v5560 = vpop.f32.mrb[0].mxu0
  %v5561 = vadd.f32 %v5259, %v5560
  %5562 = vmatprep.mubr.f32.mxu0 0.0
  %5563 = vmatmul.mubr.f32.gmra.mrb[0].mxu0 %v5273
  %v5564 = vpop.f32.mrb[0].mxu0
  %v5565 = vadd.f32 %v5255, %v5564
  %v5566 = vpop.f32.mrb[0].mxu0
  %v5567 = vadd.f32 %v5259, %v5566
  %5568 = vmatprep.mubr.f32.mxu0 0.0
  %5569 = vmatmul.mubr.f32.gmra.mrb[0].mxu0 %v5276
  %v5570 = vpop.f32.mrb[0].mxu0
  %v5571 = vadd.f32 %v5255, %v5570
  %v5572 = vpop.f32.mrb[0].mxu0
  %v5573 = vadd.f32 %v5259, %v5572
  %5574 = vmatprep.mubr.f32.mxu0 0.0
  %5575 = vmatmul.mubr.f32.gmra.mrb[0].mxu0 %v5279
  %v5576 = vpop.f32.mrb[0].mxu0
  %v5577 = vadd.f32 %v5255, %v5576
  %v5578 = vpop.f32.mrb[0].mxu0
  %v5579 = vadd.f32 %v5259, %v5578
  %5580 = vmatprep.mubr.f32.mxu0 0.0
  %5581 = vmatmul.mubr.f32.gmra.mrb[0].mxu0 %v5282
  %v5582 = vpop.f32.mrb[0].mxu0
  %v5583 = vadd.f32 %v5255, %v5582
  %v5584 = vpop.f32.mrb[0].mxu0
  %v5585 = vadd.f32 %v5259, %v5584
  %5586 = vdwg.mxu0
  %5587 = vst [vmem:[%s14] sm:$0xff] %v5351
  %5588 = vst [vmem:[%s14 + $0x8] sm:$0xff] %v5353
  %5589 = vst [vmem:[%s14 + $0x10] sm:$0xff] %v5452
  %5590 = vst [vmem:[%s14 + $0x18] sm:$0xff] %v5454
  %5591 = vst [vmem:[%s14 + $0x20] sm:$0xff] %v5553
  %5592 = vst [vmem:[%s14 + $0x28] sm:$0xff] %v5555
  %5593 = vst [vmem:[%s14 + $0x30] sm:$0xff] %v5357
  %5594 = vst [vmem:[%s14 + $0x38] sm:$0xff] %v5359
  %5595 = vst [vmem:[%s14 + $0x40] sm:$0xff] %v5458
  %5596 = vst [vmem:[%s14 + $0x48] sm:$0xff] %v5460
  %5597 = vst [vmem:[%s14 + $0x50] sm:$0xff] %v5559
  %5598 = vst [vmem:[%s14 + $0x58] sm:$0xff] %v5561
  %5599 = vst [vmem:[%s14 + $0x60] sm:$0x1] %v5363
  %5600 = vst [vmem:[%s14 + $0x68] sm:$0x1] %v5365
  %5601 = vst [vmem:[%s14 + $0x70] sm:$0x1] %v5464
  %5602 = vst [vmem:[%s14 + $0x78] sm:$0x1] %v5466
  %5603 = vst [vmem:[%s14 + $0x80] sm:$0x1] %v5565
  %5604 = vst [vmem:[%s14 + $0x88] sm:$0x1] %v5567
  %s5605 = scalar_lea.vmem %s14, 144
  %5606 = vst [vmem:[%s5605] sm:$0xff] %v5369
  %5607 = vst [vmem:[%s5605 + $0x8] sm:$0xff] %v5371
  %5608 = vst [vmem:[%s5605 + $0x10] sm:$0xff] %v5470
  %5609 = vst [vmem:[%s5605 + $0x18] sm:$0xff] %v5472
  %5610 = vst [vmem:[%s5605 + $0x20] sm:$0xff] %v5571
  %5611 = vst [vmem:[%s5605 + $0x28] sm:$0xff] %v5573
  %5612 = vst [vmem:[%s5605 + $0x30] sm:$0xff] %v5375
  %5613 = vst [vmem:[%s5605 + $0x38] sm:$0xff] %v5377
  %5614 = vst [vmem:[%s5605 + $0x40] sm:$0xff] %v5476
  %5615 = vst [vmem:[%s5605 + $0x48] sm:$0xff] %v5478
  %5616 = vst [vmem:[%s5605 + $0x50] sm:$0xff] %v5577
  %5617 = vst [vmem:[%s5605 + $0x58] sm:$0xff] %v5579
  %5618 = vst [vmem:[%s5605 + $0x60] sm:$0x1] %v5381
  %5619 = vst [vmem:[%s5605 + $0x68] sm:$0x1] %v5383
  %5620 = vst [vmem:[%s5605 + $0x70] sm:$0x1] %v5482
  %5621 = vst [vmem:[%s5605 + $0x78] sm:$0x1] %v5484
  %5622 = vst [vmem:[%s5605 + $0x80] sm:$0x1] %v5583
  %5623 = vst [vmem:[%s5605 + $0x88] sm:$0x1] %v5585
  // Predicated region
  $region58: #{clip_image_encoder.1} parent=0 // pred_check
    _
  $region59: #{clip_image_encoder.1} parent=0 // pred_check_branch
    %5625 = sbr.rel (0) target = $region61
  $region60: #{clip_image_encoder.1} parent=0 // pred_region
    _
  $region61: #{clip_image_encoder.1} parent=0 // pred_fallthru
    _
  // Predicated region
  $region62: #{clip_image_encoder.1} parent=0 // pred_check
    _
  $region63: #{clip_image_encoder.1} parent=0 // pred_check_branch
    %5627 = sbr.rel (0) target = $region65
  $region64: #{clip_image_encoder.1} parent=0 // pred_region
    _
  $region65: #{clip_image_encoder.1} parent=0 // pred_fallthru
    _

</llo_original>
